<compile_context>
chip_gen: v7x
topology: tpu7x:2x2x1
jax: 0.10.0
libtpu: 0.0.40
codegen_flags: <defaults>
</compile_context>

<pallas_src>
import functools

import jax
import jax.numpy as jnp
from jax.experimental import pallas as pl
from jax.experimental.pallas import tpu as pltpu


# ---------------------------------------------------------------------------
# Fused attention kernel
# ---------------------------------------------------------------------------
def attention_kernel(q_ref, kv_ref, kvw_ref, pw_ref, pb_ref, o_ref,
                     kT_ref, vbd_ref, p_ref, *, num_heads):
    C = q_ref.shape[-1]
    Lkv = kv_ref.shape[1]
    hd = C // num_heads

    # ---- once per batch row: kv Linear + block-diagonal K^T / V prep (bf16) --
    @pl.when(pl.program_id(1) == 0)
    def _prep():
        # kv = self.kv(kv): (Lkv, C) @ (C, 2C), bf16 inputs, f32 accumulation.
        kv_lin = jnp.dot(kv_ref[0], kvw_ref[...],
                         preferred_element_type=jnp.float32)            # (Lkv, 2C)
        k_all_t = jnp.transpose(kv_lin[:, :C]).astype(jnp.bfloat16)     # (C, Lkv)
        v_all = kv_lin[:, C:].astype(jnp.bfloat16)                      # (Lkv, C)
        kT_ref[...] = jnp.zeros_like(kT_ref)
        vbd_ref[...] = jnp.zeros_like(vbd_ref)
        for h in range(num_heads):          # static, runs once per batch row
            kT_ref[h * hd:(h + 1) * hd, h * Lkv:(h + 1) * Lkv] = \
                k_all_t[h * hd:(h + 1) * hd, :]
            vbd_ref[h * Lkv:(h + 1) * Lkv, h * hd:(h + 1) * hd] = \
                v_all[:, h * hd:(h + 1) * hd]

    qb = q_ref[0]                     # (TQ, C) bf16, head-packed, pre-scaled

    # scores for ALL heads in one full-width (K = C) MXU matmul
    s = jnp.dot(qb, kT_ref[...], preferred_element_type=jnp.float32)    # (TQ, H*Lkv)

    # per-head softmax on lane-aligned Lkv segments (VPU/EUP/XLU; no MXU).
    # Each head's normalized bf16 probs are stored straight into p_ref.
    # TODO(synk): at production Lkv switch to online (flash-style) softmax.
    for h in range(num_heads):
        sl = slice(h * Lkv, (h + 1) * Lkv)
        s_h = s[:, sl]
        s_h = s_h - jnp.max(s_h, axis=-1, keepdims=True)
        p_h = jnp.exp(s_h)
        r_h = pl.reciprocal(jnp.sum(p_h, axis=-1, keepdims=True), approx=True)
        p_ref[:, sl] = (p_h * r_h).astype(jnp.bfloat16)   # attn_drop p=0 -> id

    # (attn @ v) for all heads at once -> lane-dense (TQ, C), then proj(+bias).
    x = jnp.dot(p_ref[...], vbd_ref[...], preferred_element_type=jnp.float32)
    out = jnp.dot(x.astype(jnp.bfloat16), pw_ref[...],
                  preferred_element_type=jnp.float32) + pb_ref[...]
    o_ref[0] = out.astype(o_ref.dtype)                    # proj_drop p=0 -> id


# ---------------------------------------------------------------------------
# Wrapper
# ---------------------------------------------------------------------------
def attention_forward(q, kv, kv_w, proj_w, proj_b, *, num_heads=8, tq=None):
    """Faithful Attention.forward.  Linear weights are pre-transposed (in, out)."""
    B, Nq, C = q.shape
    Bk, Lkv, Ck = kv.shape
    assert Bk == B and Ck == C and C % num_heads == 0
    hd = C // num_heads
    scale = float(hd) ** -0.5

    if tq is None:
        tq = 128 if Nq % 128 == 0 else Nq
    assert Nq % tq == 0 and (tq % 8 == 0 or tq == Nq)

    # torch's head split `q.reshape(B, H, Nq, hd)` (row-major, NO transpose) is
    # reproduced exactly and re-packed lane-dense so that
    #   q_packed[b, n, h*hd:(h+1)*hd] == q.reshape(B, H, Nq, hd)[b, h, n, :]
    # The softmax scale and the bf16 cast are folded into this single fused XLA
    # pass (one f32 read of q, one half-size bf16 write).
    # TODO(synk): fold this re-pack into the producer of q to drop the pass.
    q_packed = (q.reshape(B, num_heads, Nq, hd).transpose(0, 2, 1, 3)
                 .reshape(B, Nq, C) * scale).astype(jnp.bfloat16)

    kv_bf = kv.astype(jnp.bfloat16)
    kvw_bf = kv_w.astype(jnp.bfloat16)
    pw_bf = proj_w.astype(jnp.bfloat16)
    pb = proj_b.reshape(1, C).astype(jnp.float32)

    kernel = functools.partial(attention_kernel, num_heads=num_heads)
    return pl.pallas_call(
        kernel,
        out_shape=jax.ShapeDtypeStruct((B, Nq, C), jnp.float32),
        grid_spec=pltpu.PrefetchScalarGridSpec(
            num_scalar_prefetch=0,
            grid=(B, Nq // tq),
            in_specs=[
                pl.BlockSpec((1, tq, C), lambda b, t: (b, t, 0)),      # q (packed)
                pl.BlockSpec((1, Lkv, C), lambda b, t: (b, 0, 0)),     # kv
                pl.BlockSpec((C, 2 * C), lambda b, t: (0, 0)),         # kv weight
                pl.BlockSpec((C, C), lambda b, t: (0, 0)),             # proj weight
                pl.BlockSpec((1, C), lambda b, t: (0, 0)),             # proj bias
            ],
            out_specs=pl.BlockSpec((1, tq, C), lambda b, t: (b, t, 0)),
            scratch_shapes=[
                pltpu.VMEM((C, num_heads * Lkv), jnp.bfloat16),        # K^T blockdiag
                pltpu.VMEM((num_heads * Lkv, C), jnp.bfloat16),        # V blockdiag
                pltpu.VMEM((tq, num_heads * Lkv), jnp.bfloat16),       # softmax probs
            ],
        ),
        compiler_params=pltpu.CompilerParams(
            dimension_semantics=("parallel", "arbitrary")),
    )(q_packed, kv_bf, kvw_bf, pw_bf, pb)


# ---------------------------------------------------------------------------
# Pure-JAX f32 reference (exact torch semantics, weights pre-transposed)
# ---------------------------------------------------------------------------
def attention_ref(q, kv, kv_w, proj_w, proj_b, *, num_heads=8):
    B_kv, N_kv, C_kv = kv.shape
    hd = C_kv // num_heads
    scale = float(hd) ** -0.5
    kv_l = kv @ kv_w                                           # bias=False
    kv_l = kv_l.reshape(B_kv, N_kv, 2, num_heads, hd)
    kv_l = jnp.transpose(kv_l, (2, 0, 3, 1, 4))
    k, v = kv_l[0], kv_l[1]                                    # (B, H, N_kv, hd)
    qh = q.reshape(q.shape[0], num_heads, q.shape[1], q.shape[2] // num_heads)
    B, N = qh.shape[0], qh.shape[2]
    attn = jnp.einsum('bhqd,bhkd->bhqk', qh, k) * scale
    attn = jax.nn.softmax(attn, axis=-1)
    x = jnp.einsum('bhqk,bhkd->bhqd', attn, v)
    x = jnp.transpose(x, (0, 2, 1, 3)).reshape(B, N, -1)
    return x @ proj_w + proj_b


# ---------------------------------------------------------------------------
if __name__ == "__main__":
    B, Nq, Lkv, C, HEADS = 2, 256, 128, 128, 8

    key = jax.random.PRNGKey(0)
    kq, kkv, k1, k2, k3 = jax.random.split(key, 5)
    q = jax.random.normal(kq, (B, Nq, C), jnp.float32)
    kv = jax.random.normal(kkv, (B, Lkv, C), jnp.float32)
    # nn.Linear weights stored pre-transposed as (in_features, out_features).
    kv_w = (0.02 * jax.random.normal(k1, (C, 2 * C))).astype(jnp.float32)
    proj_w = (0.02 * jax.random.normal(k2, (C, C))).astype(jnp.float32)
    proj_b = (0.02 * jax.random.normal(k3, (C,))).astype(jnp.float32)

    fwd = jax.jit(functools.partial(attention_forward, num_heads=HEADS))
    out = jax.block_until_ready(fwd(q, kv, kv_w, proj_w, proj_b))
    assert out.shape == (B, Nq, C)
    assert bool(jnp.all(jnp.isfinite(out)))

    ref = attention_ref(q, kv, kv_w, proj_w, proj_b, num_heads=HEADS)
    max_err = float(jnp.max(jnp.abs(out - ref)))
    assert max_err < 5e-3, f"max abs err {max_err}"
    print("KERNEL_OK")
</pallas_src>

<mosaic_0001>
module attributes {stable_mosaic.version = 11 : i64} {
  func.func @attention_kernel(%arg0: i32, %arg1: i32, %arg2: memref<1x128x128xbf16, #tpu.memory_space<vmem>>, %arg3: memref<1x128x128xbf16, #tpu.memory_space<vmem>>, %arg4: memref<128x256xbf16, #tpu.memory_space<vmem>>, %arg5: memref<128x128xbf16, #tpu.memory_space<vmem>>, %arg6: memref<1x128xf32, #tpu.memory_space<vmem>>, %arg7: memref<1x128x128xf32, #tpu.memory_space<vmem>>, %arg8: memref<128x1024xbf16, #tpu.memory_space<vmem>>, %arg9: memref<1024x128xbf16, #tpu.memory_space<vmem>>, %arg10: memref<128x1024xbf16, #tpu.memory_space<vmem>>) attributes {dimension_semantics = [#tpu.dimension_semantics<parallel>, #tpu.dimension_semantics<arbitrary>], iteration_bounds = array<i64: 2, 2>, scalar_prefetch = 0 : i64, scratch_operands = 3 : i64, tpu.core_type = #tpu.core_type<tc>, window_params = [{transform_indices = @transform_0, window_bounds = array<i64: 1, 128, 128>}, {transform_indices = @transform_1, window_bounds = array<i64: 1, 128, 128>}, {pipeline_mode = #tpu.pipeline_mode<synchronous>, transform_indices = @transform_2, window_bounds = array<i64: 128, 256>}, {pipeline_mode = #tpu.pipeline_mode<synchronous>, transform_indices = @transform_3, window_bounds = array<i64: 128, 128>}, {pipeline_mode = #tpu.pipeline_mode<synchronous>, transform_indices = @transform_4, window_bounds = array<i64: 1, 128>}, {transform_indices = @transform_5, window_bounds = array<i64: 1, 128, 128>}]} {
    %c0_i32 = arith.constant 0 : i32
    %0 = arith.cmpi eq, %arg1, %c0_i32 : i32
    %1 = arith.extui %0 : i1 to i32
    %c0_i32_0 = arith.constant 0 : i32
    %2 = arith.cmpi ne, %1, %c0_i32_0 : i32
    scf.if %2 {
      %c0_43 = arith.constant 0 : index
      %c0_44 = arith.constant 0 : index
      %c0_45 = arith.constant 0 : index
      %123 = vector.load %arg3[%c0_43, %c0_44, %c0_45] : memref<1x128x128xbf16, #tpu.memory_space<vmem>>, vector<1x128x128xbf16>
      %124 = vector.shape_cast %123 : vector<1x128x128xbf16> to vector<128x128xbf16>
      %c0_46 = arith.constant 0 : index
      %c0_47 = arith.constant 0 : index
      %125 = vector.load %arg4[%c0_46, %c0_47] : memref<128x256xbf16, #tpu.memory_space<vmem>>, vector<128x256xbf16>
      %cst_48 = arith.constant dense<0.000000e+00> : vector<128x256xf32>
      %126 = tpu.matmul %124, %125, %cst_48 {dimension_numbers = #tpu.dot_dimension_numbers<[1], [0], [0], [1], [0, 0, 1, 1], [], []>} : vector<128x128xbf16>, vector<128x256xbf16>, vector<128x256xf32> -> vector<128x256xf32>
      %127 = vector.extract_strided_slice %126 {offsets = [0, 0], sizes = [128, 128], strides = [1, 1]} : vector<128x256xf32> to vector<128x128xf32>
      %128 = tpu.transpose %127, [1, 0] : vector<128x128xf32> -> vector<128x128xf32>
      %129 = arith.truncf %128 : vector<128x128xf32> to vector<128x128xbf16>
      %130 = vector.extract_strided_slice %126 {offsets = [0, 128], sizes = [128, 128], strides = [1, 1]} : vector<128x256xf32> to vector<128x128xf32>
      %131 = arith.truncf %130 : vector<128x128xf32> to vector<128x128xbf16>
      %cst_49 = arith.constant 0.000000e+00 : bf16
      %132 = vector.broadcast %cst_49 : bf16 to vector<128x1024xbf16>
      %c0_50 = arith.constant 0 : index
      %c0_51 = arith.constant 0 : index
      %133 = vector.load %arg8[%c0_50, %c0_51] : memref<128x1024xbf16, #tpu.memory_space<vmem>>, vector<128x1024xbf16>
      tpu.vector_store %arg8[%c0_50, %c0_51], %132 {strides = array<i32>} : memref<128x1024xbf16, #tpu.memory_space<vmem>>, vector<128x1024xbf16>,
      %cst_52 = arith.constant 0.000000e+00 : bf16
      %134 = vector.broadcast %cst_52 : bf16 to vector<1024x128xbf16>
      %c0_53 = arith.constant 0 : index
      %c0_54 = arith.constant 0 : index
      %135 = vector.load %arg9[%c0_53, %c0_54] : memref<1024x128xbf16, #tpu.memory_space<vmem>>, vector<1024x128xbf16>
      tpu.vector_store %arg9[%c0_53, %c0_54], %134 {strides = array<i32>} : memref<1024x128xbf16, #tpu.memory_space<vmem>>, vector<1024x128xbf16>,
      %136 = vector.extract_strided_slice %129 {offsets = [0, 0], sizes = [16, 128], strides = [1, 1]} : vector<128x128xbf16> to vector<16x128xbf16>
      %c0_55 = arith.constant 0 : index
      %c0_56 = arith.constant 0 : index
      %137 = vector.load %arg8[%c0_55, %c0_56] : memref<128x1024xbf16, #tpu.memory_space<vmem>>, vector<16x128xbf16>
      tpu.vector_store %arg8[%c0_55, %c0_56], %136 {strides = array<i32>} : memref<128x1024xbf16, #tpu.memory_space<vmem>>, vector<16x128xbf16>,
      %138 = vector.extract_strided_slice %131 {offsets = [0, 0], sizes = [128, 16], strides = [1, 1]} : vector<128x128xbf16> to vector<128x16xbf16>
      %c0_57 = arith.constant 0 : index
      %c0_58 = arith.constant 0 : index
      %139 = vector.load %arg9[%c0_57, %c0_58] : memref<1024x128xbf16, #tpu.memory_space<vmem>>, vector<128x16xbf16>
      tpu.vector_store %arg9[%c0_57, %c0_58], %138 {strides = array<i32>} : memref<1024x128xbf16, #tpu.memory_space<vmem>>, vector<128x16xbf16>,
      %140 = vector.extract_strided_slice %129 {offsets = [16, 0], sizes = [16, 128], strides = [1, 1]} : vector<128x128xbf16> to vector<16x128xbf16>
      %c16 = arith.constant 16 : index
      %c128_59 = arith.constant 128 : index
      %141 = vector.load %arg8[%c16, %c128_59] : memref<128x1024xbf16, #tpu.memory_space<vmem>>, vector<16x128xbf16>
      tpu.vector_store %arg8[%c16, %c128_59], %140 {strides = array<i32>} : memref<128x1024xbf16, #tpu.memory_space<vmem>>, vector<16x128xbf16>,
      %142 = vector.extract_strided_slice %131 {offsets = [0, 16], sizes = [128, 16], strides = [1, 1]} : vector<128x128xbf16> to vector<128x16xbf16>
      %c128_60 = arith.constant 128 : index
      %c16_61 = arith.constant 16 : index
      %143 = vector.load %arg9[%c128_60, %c16_61] : memref<1024x128xbf16, #tpu.memory_space<vmem>>, vector<128x16xbf16>
      tpu.vector_store %arg9[%c128_60, %c16_61], %142 {strides = array<i32>} : memref<1024x128xbf16, #tpu.memory_space<vmem>>, vector<128x16xbf16>,
      %144 = vector.extract_strided_slice %129 {offsets = [32, 0], sizes = [16, 128], strides = [1, 1]} : vector<128x128xbf16> to vector<16x128xbf16>
      %c32 = arith.constant 32 : index
      %c256_62 = arith.constant 256 : index
      %145 = vector.load %arg8[%c32, %c256_62] : memref<128x1024xbf16, #tpu.memory_space<vmem>>, vector<16x128xbf16>
      tpu.vector_store %arg8[%c32, %c256_62], %144 {strides = array<i32>} : memref<128x1024xbf16, #tpu.memory_space<vmem>>, vector<16x128xbf16>,
      %146 = vector.extract_strided_slice %131 {offsets = [0, 32], sizes = [128, 16], strides = [1, 1]} : vector<128x128xbf16> to vector<128x16xbf16>
      %c256_63 = arith.constant 256 : index
      %c32_64 = arith.constant 32 : index
      %147 = vector.load %arg9[%c256_63, %c32_64] : memref<1024x128xbf16, #tpu.memory_space<vmem>>, vector<128x16xbf16>
      tpu.vector_store %arg9[%c256_63, %c32_64], %146 {strides = array<i32>} : memref<1024x128xbf16, #tpu.memory_space<vmem>>, vector<128x16xbf16>,
      %148 = vector.extract_strided_slice %129 {offsets = [48, 0], sizes = [16, 128], strides = [1, 1]} : vector<128x128xbf16> to vector<16x128xbf16>
      %c48 = arith.constant 48 : index
      %c384_65 = arith.constant 384 : index
      %149 = vector.load %arg8[%c48, %c384_65] : memref<128x1024xbf16, #tpu.memory_space<vmem>>, vector<16x128xbf16>
      tpu.vector_store %arg8[%c48, %c384_65], %148 {strides = array<i32>} : memref<128x1024xbf16, #tpu.memory_space<vmem>>, vector<16x128xbf16>,
      %150 = vector.extract_strided_slice %131 {offsets = [0, 48], sizes = [128, 16], strides = [1, 1]} : vector<128x128xbf16> to vector<128x16xbf16>
      %c384_66 = arith.constant 384 : index
      %c48_67 = arith.constant 48 : index
      %151 = vector.load %arg9[%c384_66, %c48_67] : memref<1024x128xbf16, #tpu.memory_space<vmem>>, vector<128x16xbf16>
      tpu.vector_store %arg9[%c384_66, %c48_67], %150 {strides = array<i32>} : memref<1024x128xbf16, #tpu.memory_space<vmem>>, vector<128x16xbf16>,
      %152 = vector.extract_strided_slice %129 {offsets = [64, 0], sizes = [16, 128], strides = [1, 1]} : vector<128x128xbf16> to vector<16x128xbf16>
      %c64 = arith.constant 64 : index
      %c512_68 = arith.constant 512 : index
      %153 = vector.load %arg8[%c64, %c512_68] : memref<128x1024xbf16, #tpu.memory_space<vmem>>, vector<16x128xbf16>
      tpu.vector_store %arg8[%c64, %c512_68], %152 {strides = array<i32>} : memref<128x1024xbf16, #tpu.memory_space<vmem>>, vector<16x128xbf16>,
      %154 = vector.extract_strided_slice %131 {offsets = [0, 64], sizes = [128, 16], strides = [1, 1]} : vector<128x128xbf16> to vector<128x16xbf16>
      %c512_69 = arith.constant 512 : index
      %c64_70 = arith.constant 64 : index
      %155 = vector.load %arg9[%c512_69, %c64_70] : memref<1024x128xbf16, #tpu.memory_space<vmem>>, vector<128x16xbf16>
      tpu.vector_store %arg9[%c512_69, %c64_70], %154 {strides = array<i32>} : memref<1024x128xbf16, #tpu.memory_space<vmem>>, vector<128x16xbf16>,
      %156 = vector.extract_strided_slice %129 {offsets = [80, 0], sizes = [16, 128], strides = [1, 1]} : vector<128x128xbf16> to vector<16x128xbf16>
      %c80 = arith.constant 80 : index
      %c640_71 = arith.constant 640 : index
      %157 = vector.load %arg8[%c80, %c640_71] : memref<128x1024xbf16, #tpu.memory_space<vmem>>, vector<16x128xbf16>
      tpu.vector_store %arg8[%c80, %c640_71], %156 {strides = array<i32>} : memref<128x1024xbf16, #tpu.memory_space<vmem>>, vector<16x128xbf16>,
      %158 = vector.extract_strided_slice %131 {offsets = [0, 80], sizes = [128, 16], strides = [1, 1]} : vector<128x128xbf16> to vector<128x16xbf16>
      %c640_72 = arith.constant 640 : index
      %c80_73 = arith.constant 80 : index
      %159 = vector.load %arg9[%c640_72, %c80_73] : memref<1024x128xbf16, #tpu.memory_space<vmem>>, vector<128x16xbf16>
      tpu.vector_store %arg9[%c640_72, %c80_73], %158 {strides = array<i32>} : memref<1024x128xbf16, #tpu.memory_space<vmem>>, vector<128x16xbf16>,
      %160 = vector.extract_strided_slice %129 {offsets = [96, 0], sizes = [16, 128], strides = [1, 1]} : vector<128x128xbf16> to vector<16x128xbf16>
      %c96 = arith.constant 96 : index
      %c768_74 = arith.constant 768 : index
      %161 = vector.load %arg8[%c96, %c768_74] : memref<128x1024xbf16, #tpu.memory_space<vmem>>, vector<16x128xbf16>
      tpu.vector_store %arg8[%c96, %c768_74], %160 {strides = array<i32>} : memref<128x1024xbf16, #tpu.memory_space<vmem>>, vector<16x128xbf16>,
      %162 = vector.extract_strided_slice %131 {offsets = [0, 96], sizes = [128, 16], strides = [1, 1]} : vector<128x128xbf16> to vector<128x16xbf16>
      %c768_75 = arith.constant 768 : index
      %c96_76 = arith.constant 96 : index
      %163 = vector.load %arg9[%c768_75, %c96_76] : memref<1024x128xbf16, #tpu.memory_space<vmem>>, vector<128x16xbf16>
      tpu.vector_store %arg9[%c768_75, %c96_76], %162 {strides = array<i32>} : memref<1024x128xbf16, #tpu.memory_space<vmem>>, vector<128x16xbf16>,
      %164 = vector.extract_strided_slice %129 {offsets = [112, 0], sizes = [16, 128], strides = [1, 1]} : vector<128x128xbf16> to vector<16x128xbf16>
      %c112 = arith.constant 112 : index
      %c896_77 = arith.constant 896 : index
      %165 = vector.load %arg8[%c112, %c896_77] : memref<128x1024xbf16, #tpu.memory_space<vmem>>, vector<16x128xbf16>
      tpu.vector_store %arg8[%c112, %c896_77], %164 {strides = array<i32>} : memref<128x1024xbf16, #tpu.memory_space<vmem>>, vector<16x128xbf16>,
      %166 = vector.extract_strided_slice %131 {offsets = [0, 112], sizes = [128, 16], strides = [1, 1]} : vector<128x128xbf16> to vector<128x16xbf16>
      %c896_78 = arith.constant 896 : index
      %c112_79 = arith.constant 112 : index
      %167 = vector.load %arg9[%c896_78, %c112_79] : memref<1024x128xbf16, #tpu.memory_space<vmem>>, vector<128x16xbf16>
      tpu.vector_store %arg9[%c896_78, %c112_79], %166 {strides = array<i32>} : memref<1024x128xbf16, #tpu.memory_space<vmem>>, vector<128x16xbf16>,
    } else {
    }
    %c0 = arith.constant 0 : index
    %c0_1 = arith.constant 0 : index
    %c0_2 = arith.constant 0 : index
    %3 = vector.load %arg2[%c0, %c0_1, %c0_2] : memref<1x128x128xbf16, #tpu.memory_space<vmem>>, vector<1x128x128xbf16>
    %4 = vector.shape_cast %3 : vector<1x128x128xbf16> to vector<128x128xbf16>
    %c0_3 = arith.constant 0 : index
    %c0_4 = arith.constant 0 : index
    %5 = vector.load %arg8[%c0_3, %c0_4] : memref<128x1024xbf16, #tpu.memory_space<vmem>>, vector<128x1024xbf16>
    %cst = arith.constant dense<0.000000e+00> : vector<128x1024xf32>
    %6 = tpu.matmul %4, %5, %cst {dimension_numbers = #tpu.dot_dimension_numbers<[1], [0], [0], [1], [0, 0, 1, 1], [], []>} : vector<128x128xbf16>, vector<128x1024xbf16>, vector<128x1024xf32> -> vector<128x1024xf32>
    %7 = vector.extract_strided_slice %6 {offsets = [0, 0], sizes = [128, 128], strides = [1, 1]} : vector<128x1024xf32> to vector<128x128xf32>
    %cst_5 = arith.constant dense<0xFF800000> : vector<128xf32>
    %8 = vector.multi_reduction <maximumf>, %7, %cst_5 [1] : vector<128x128xf32> to vector<128xf32>
    %9 = vector.shape_cast %8 : vector<128xf32> to vector<128x1xf32>
    %10 = vector.broadcast %9 : vector<128x1xf32> to vector<128x128xf32>
    %11 = arith.subf %7, %10 : vector<128x128xf32>
    %12 = math.exp %11 : vector<128x128xf32>
    %cst_6 = arith.constant dense<0.000000e+00> : vector<128xf32>
    %13 = vector.multi_reduction <add>, %12, %cst_6 [1] : vector<128x128xf32> to vector<128xf32>
    %14 = vector.shape_cast %13 : vector<128xf32> to vector<128x1xf32>
    %15 = tpu.reciprocal %14 {approx = true} : vector<128x1xf32> -> vector<128x1xf32>
    %16 = vector.broadcast %15 : vector<128x1xf32> to vector<128x128xf32>
    %17 = arith.mulf %12, %16 : vector<128x128xf32>
    %18 = arith.truncf %17 : vector<128x128xf32> to vector<128x128xbf16>
    %c0_7 = arith.constant 0 : index
    %c0_8 = arith.constant 0 : index
    %19 = vector.load %arg10[%c0_7, %c0_8] : memref<128x1024xbf16, #tpu.memory_space<vmem>>, vector<128x128xbf16>
    tpu.vector_store %arg10[%c0_7, %c0_8], %18 {strides = array<i32>} : memref<128x1024xbf16, #tpu.memory_space<vmem>>, vector<128x128xbf16>,
    %20 = vector.extract_strided_slice %6 {offsets = [0, 128], sizes = [128, 128], strides = [1, 1]} : vector<128x1024xf32> to vector<128x128xf32>
    %cst_9 = arith.constant dense<0xFF800000> : vector<128xf32>
    %21 = vector.multi_reduction <maximumf>, %20, %cst_9 [1] : vector<128x128xf32> to vector<128xf32>
    %22 = vector.shape_cast %21 : vector<128xf32> to vector<128x1xf32>
    %23 = vector.broadcast %22 : vector<128x1xf32> to vector<128x128xf32>
    %24 = arith.subf %20, %23 : vector<128x128xf32>
    %25 = math.exp %24 : vector<128x128xf32>
    %cst_10 = arith.constant dense<0.000000e+00> : vector<128xf32>
    %26 = vector.multi_reduction <add>, %25, %cst_10 [1] : vector<128x128xf32> to vector<128xf32>
    %27 = vector.shape_cast %26 : vector<128xf32> to vector<128x1xf32>
    %28 = tpu.reciprocal %27 {approx = true} : vector<128x1xf32> -> vector<128x1xf32>
    %29 = vector.broadcast %28 : vector<128x1xf32> to vector<128x128xf32>
    %30 = arith.mulf %25, %29 : vector<128x128xf32>
    %31 = arith.truncf %30 : vector<128x128xf32> to vector<128x128xbf16>
    %c0_11 = arith.constant 0 : index
    %c128 = arith.constant 128 : index
    %32 = vector.load %arg10[%c0_11, %c128] : memref<128x1024xbf16, #tpu.memory_space<vmem>>, vector<128x128xbf16>
    tpu.vector_store %arg10[%c0_11, %c128], %31 {strides = array<i32>} : memref<128x1024xbf16, #tpu.memory_space<vmem>>, vector<128x128xbf16>,
    %33 = vector.extract_strided_slice %6 {offsets = [0, 256], sizes = [128, 128], strides = [1, 1]} : vector<128x1024xf32> to vector<128x128xf32>
    %cst_12 = arith.constant dense<0xFF800000> : vector<128xf32>
    %34 = vector.multi_reduction <maximumf>, %33, %cst_12 [1] : vector<128x128xf32> to vector<128xf32>
    %35 = vector.shape_cast %34 : vector<128xf32> to vector<128x1xf32>
    %36 = vector.broadcast %35 : vector<128x1xf32> to vector<128x128xf32>
    %37 = arith.subf %33, %36 : vector<128x128xf32>
    %38 = math.exp %37 : vector<128x128xf32>
    %cst_13 = arith.constant dense<0.000000e+00> : vector<128xf32>
    %39 = vector.multi_reduction <add>, %38, %cst_13 [1] : vector<128x128xf32> to vector<128xf32>
    %40 = vector.shape_cast %39 : vector<128xf32> to vector<128x1xf32>
    %41 = tpu.reciprocal %40 {approx = true} : vector<128x1xf32> -> vector<128x1xf32>
    %42 = vector.broadcast %41 : vector<128x1xf32> to vector<128x128xf32>
    %43 = arith.mulf %38, %42 : vector<128x128xf32>
    %44 = arith.truncf %43 : vector<128x128xf32> to vector<128x128xbf16>
    %c0_14 = arith.constant 0 : index
    %c256 = arith.constant 256 : index
    %45 = vector.load %arg10[%c0_14, %c256] : memref<128x1024xbf16, #tpu.memory_space<vmem>>, vector<128x128xbf16>
    tpu.vector_store %arg10[%c0_14, %c256], %44 {strides = array<i32>} : memref<128x1024xbf16, #tpu.memory_space<vmem>>, vector<128x128xbf16>,
    %46 = vector.extract_strided_slice %6 {offsets = [0, 384], sizes = [128, 128], strides = [1, 1]} : vector<128x1024xf32> to vector<128x128xf32>
    %cst_15 = arith.constant dense<0xFF800000> : vector<128xf32>
    %47 = vector.multi_reduction <maximumf>, %46, %cst_15 [1] : vector<128x128xf32> to vector<128xf32>
    %48 = vector.shape_cast %47 : vector<128xf32> to vector<128x1xf32>
    %49 = vector.broadcast %48 : vector<128x1xf32> to vector<128x128xf32>
    %50 = arith.subf %46, %49 : vector<128x128xf32>
    %51 = math.exp %50 : vector<128x128xf32>
    %cst_16 = arith.constant dense<0.000000e+00> : vector<128xf32>
    %52 = vector.multi_reduction <add>, %51, %cst_16 [1] : vector<128x128xf32> to vector<128xf32>
    %53 = vector.shape_cast %52 : vector<128xf32> to vector<128x1xf32>
    %54 = tpu.reciprocal %53 {approx = true} : vector<128x1xf32> -> vector<128x1xf32>
    %55 = vector.broadcast %54 : vector<128x1xf32> to vector<128x128xf32>
    %56 = arith.mulf %51, %55 : vector<128x128xf32>
    %57 = arith.truncf %56 : vector<128x128xf32> to vector<128x128xbf16>
    %c0_17 = arith.constant 0 : index
    %c384 = arith.constant 384 : index
    %58 = vector.load %arg10[%c0_17, %c384] : memref<128x1024xbf16, #tpu.memory_space<vmem>>, vector<128x128xbf16>
    tpu.vector_store %arg10[%c0_17, %c384], %57 {strides = array<i32>} : memref<128x1024xbf16, #tpu.memory_space<vmem>>, vector<128x128xbf16>,
    %59 = vector.extract_strided_slice %6 {offsets = [0, 512], sizes = [128, 128], strides = [1, 1]} : vector<128x1024xf32> to vector<128x128xf32>
    %cst_18 = arith.constant dense<0xFF800000> : vector<128xf32>
    %60 = vector.multi_reduction <maximumf>, %59, %cst_18 [1] : vector<128x128xf32> to vector<128xf32>
    %61 = vector.shape_cast %60 : vector<128xf32> to vector<128x1xf32>
    %62 = vector.broadcast %61 : vector<128x1xf32> to vector<128x128xf32>
    %63 = arith.subf %59, %62 : vector<128x128xf32>
    %64 = math.exp %63 : vector<128x128xf32>
    %cst_19 = arith.constant dense<0.000000e+00> : vector<128xf32>
    %65 = vector.multi_reduction <add>, %64, %cst_19 [1] : vector<128x128xf32> to vector<128xf32>
    %66 = vector.shape_cast %65 : vector<128xf32> to vector<128x1xf32>
    %67 = tpu.reciprocal %66 {approx = true} : vector<128x1xf32> -> vector<128x1xf32>
    %68 = vector.broadcast %67 : vector<128x1xf32> to vector<128x128xf32>
    %69 = arith.mulf %64, %68 : vector<128x128xf32>
    %70 = arith.truncf %69 : vector<128x128xf32> to vector<128x128xbf16>
    %c0_20 = arith.constant 0 : index
    %c512 = arith.constant 512 : index
    %71 = vector.load %arg10[%c0_20, %c512] : memref<128x1024xbf16, #tpu.memory_space<vmem>>, vector<128x128xbf16>
    tpu.vector_store %arg10[%c0_20, %c512], %70 {strides = array<i32>} : memref<128x1024xbf16, #tpu.memory_space<vmem>>, vector<128x128xbf16>,
    %72 = vector.extract_strided_slice %6 {offsets = [0, 640], sizes = [128, 128], strides = [1, 1]} : vector<128x1024xf32> to vector<128x128xf32>
    %cst_21 = arith.constant dense<0xFF800000> : vector<128xf32>
    %73 = vector.multi_reduction <maximumf>, %72, %cst_21 [1] : vector<128x128xf32> to vector<128xf32>
    %74 = vector.shape_cast %73 : vector<128xf32> to vector<128x1xf32>
    %75 = vector.broadcast %74 : vector<128x1xf32> to vector<128x128xf32>
    %76 = arith.subf %72, %75 : vector<128x128xf32>
    %77 = math.exp %76 : vector<128x128xf32>
    %cst_22 = arith.constant dense<0.000000e+00> : vector<128xf32>
    %78 = vector.multi_reduction <add>, %77, %cst_22 [1] : vector<128x128xf32> to vector<128xf32>
    %79 = vector.shape_cast %78 : vector<128xf32> to vector<128x1xf32>
    %80 = tpu.reciprocal %79 {approx = true} : vector<128x1xf32> -> vector<128x1xf32>
    %81 = vector.broadcast %80 : vector<128x1xf32> to vector<128x128xf32>
    %82 = arith.mulf %77, %81 : vector<128x128xf32>
    %83 = arith.truncf %82 : vector<128x128xf32> to vector<128x128xbf16>
    %c0_23 = arith.constant 0 : index
    %c640 = arith.constant 640 : index
    %84 = vector.load %arg10[%c0_23, %c640] : memref<128x1024xbf16, #tpu.memory_space<vmem>>, vector<128x128xbf16>
    tpu.vector_store %arg10[%c0_23, %c640], %83 {strides = array<i32>} : memref<128x1024xbf16, #tpu.memory_space<vmem>>, vector<128x128xbf16>,
    %85 = vector.extract_strided_slice %6 {offsets = [0, 768], sizes = [128, 128], strides = [1, 1]} : vector<128x1024xf32> to vector<128x128xf32>
    %cst_24 = arith.constant dense<0xFF800000> : vector<128xf32>
    %86 = vector.multi_reduction <maximumf>, %85, %cst_24 [1] : vector<128x128xf32> to vector<128xf32>
    %87 = vector.shape_cast %86 : vector<128xf32> to vector<128x1xf32>
    %88 = vector.broadcast %87 : vector<128x1xf32> to vector<128x128xf32>
    %89 = arith.subf %85, %88 : vector<128x128xf32>
    %90 = math.exp %89 : vector<128x128xf32>
    %cst_25 = arith.constant dense<0.000000e+00> : vector<128xf32>
    %91 = vector.multi_reduction <add>, %90, %cst_25 [1] : vector<128x128xf32> to vector<128xf32>
    %92 = vector.shape_cast %91 : vector<128xf32> to vector<128x1xf32>
    %93 = tpu.reciprocal %92 {approx = true} : vector<128x1xf32> -> vector<128x1xf32>
    %94 = vector.broadcast %93 : vector<128x1xf32> to vector<128x128xf32>
    %95 = arith.mulf %90, %94 : vector<128x128xf32>
    %96 = arith.truncf %95 : vector<128x128xf32> to vector<128x128xbf16>
    %c0_26 = arith.constant 0 : index
    %c768 = arith.constant 768 : index
    %97 = vector.load %arg10[%c0_26, %c768] : memref<128x1024xbf16, #tpu.memory_space<vmem>>, vector<128x128xbf16>
    tpu.vector_store %arg10[%c0_26, %c768], %96 {strides = array<i32>} : memref<128x1024xbf16, #tpu.memory_space<vmem>>, vector<128x128xbf16>,
    %98 = vector.extract_strided_slice %6 {offsets = [0, 896], sizes = [128, 128], strides = [1, 1]} : vector<128x1024xf32> to vector<128x128xf32>
    %cst_27 = arith.constant dense<0xFF800000> : vector<128xf32>
    %99 = vector.multi_reduction <maximumf>, %98, %cst_27 [1] : vector<128x128xf32> to vector<128xf32>
    %100 = vector.shape_cast %99 : vector<128xf32> to vector<128x1xf32>
    %101 = vector.broadcast %100 : vector<128x1xf32> to vector<128x128xf32>
    %102 = arith.subf %98, %101 : vector<128x128xf32>
    %103 = math.exp %102 : vector<128x128xf32>
    %cst_28 = arith.constant dense<0.000000e+00> : vector<128xf32>
    %104 = vector.multi_reduction <add>, %103, %cst_28 [1] : vector<128x128xf32> to vector<128xf32>
    %105 = vector.shape_cast %104 : vector<128xf32> to vector<128x1xf32>
    %106 = tpu.reciprocal %105 {approx = true} : vector<128x1xf32> -> vector<128x1xf32>
    %107 = vector.broadcast %106 : vector<128x1xf32> to vector<128x128xf32>
    %108 = arith.mulf %103, %107 : vector<128x128xf32>
    %109 = arith.truncf %108 : vector<128x128xf32> to vector<128x128xbf16>
    %c0_29 = arith.constant 0 : index
    %c896 = arith.constant 896 : index
    %110 = vector.load %arg10[%c0_29, %c896] : memref<128x1024xbf16, #tpu.memory_space<vmem>>, vector<128x128xbf16>
    tpu.vector_store %arg10[%c0_29, %c896], %109 {strides = array<i32>} : memref<128x1024xbf16, #tpu.memory_space<vmem>>, vector<128x128xbf16>,
    %c0_30 = arith.constant 0 : index
    %c0_31 = arith.constant 0 : index
    %111 = vector.load %arg10[%c0_30, %c0_31] : memref<128x1024xbf16, #tpu.memory_space<vmem>>, vector<128x1024xbf16>
    %c0_32 = arith.constant 0 : index
    %c0_33 = arith.constant 0 : index
    %112 = vector.load %arg9[%c0_32, %c0_33] : memref<1024x128xbf16, #tpu.memory_space<vmem>>, vector<1024x128xbf16>
    %cst_34 = arith.constant dense<0.000000e+00> : vector<128x128xf32>
    %113 = tpu.matmul %111, %112, %cst_34 {dimension_numbers = #tpu.dot_dimension_numbers<[1], [0], [0], [1], [0, 0, 1, 1], [], []>} : vector<128x1024xbf16>, vector<1024x128xbf16>, vector<128x128xf32> -> vector<128x128xf32>
    %114 = arith.truncf %113 : vector<128x128xf32> to vector<128x128xbf16>
    %c0_35 = arith.constant 0 : index
    %c0_36 = arith.constant 0 : index
    %115 = vector.load %arg5[%c0_35, %c0_36] : memref<128x128xbf16, #tpu.memory_space<vmem>>, vector<128x128xbf16>
    %cst_37 = arith.constant dense<0.000000e+00> : vector<128x128xf32>
    %116 = tpu.matmul %114, %115, %cst_37 {dimension_numbers = #tpu.dot_dimension_numbers<[1], [0], [0], [1], [0, 0, 1, 1], [], []>} : vector<128x128xbf16>, vector<128x128xbf16>, vector<128x128xf32> -> vector<128x128xf32>
    %c0_38 = arith.constant 0 : index
    %c0_39 = arith.constant 0 : index
    %117 = vector.load %arg6[%c0_38, %c0_39] : memref<1x128xf32, #tpu.memory_space<vmem>>, vector<1x128xf32>
    %118 = vector.broadcast %117 : vector<1x128xf32> to vector<128x128xf32>
    %119 = arith.addf %116, %118 : vector<128x128xf32>
    %c0_40 = arith.constant 0 : index
    %c0_41 = arith.constant 0 : index
    %c0_42 = arith.constant 0 : index
    %120 = vector.load %arg7[%c0_40, %c0_41, %c0_42] : memref<1x128x128xf32, #tpu.memory_space<vmem>>, vector<1x128x128xf32>
    %121 = vector.shape_cast %120 : vector<1x128x128xf32> to vector<128x128xf32>
    %122 = vector.shape_cast %119 : vector<128x128xf32> to vector<1x128x128xf32>
    tpu.vector_store %arg7[%c0_40, %c0_41, %c0_42], %122 {strides = array<i32>} : memref<1x128x128xf32, #tpu.memory_space<vmem>>, vector<1x128x128xf32>,
    return
  }
  func.func @transform_0(%arg0: i32, %arg1: i32) -> (i32, i32, i32) {
    %c0_i32 = arith.constant 0 : i32
    %c0_i32_0 = arith.constant 0 : i32
    return %arg0, %arg1, %c0_i32 : i32, i32, i32
  }
  func.func @transform_1(%arg0: i32, %arg1: i32) -> (i32, i32, i32) {
    %c0_i32 = arith.constant 0 : i32
    %c0_i32_0 = arith.constant 0 : i32
    %c0_i32_1 = arith.constant 0 : i32
    return %arg0, %c0_i32, %c0_i32_0 : i32, i32, i32
  }
  func.func @transform_2(%arg0: i32, %arg1: i32) -> (i32, i32) {
    %c0_i32 = arith.constant 0 : i32
    %c0_i32_0 = arith.constant 0 : i32
    %c0_i32_1 = arith.constant 0 : i32
    return %c0_i32, %c0_i32_0 : i32, i32
  }
  func.func @transform_3(%arg0: i32, %arg1: i32) -> (i32, i32) {
    %c0_i32 = arith.constant 0 : i32
    %c0_i32_0 = arith.constant 0 : i32
    %c0_i32_1 = arith.constant 0 : i32
    return %c0_i32, %c0_i32_0 : i32, i32
  }
  func.func @transform_4(%arg0: i32, %arg1: i32) -> (i32, i32) {
    %c0_i32 = arith.constant 0 : i32
    %c0_i32_0 = arith.constant 0 : i32
    %c0_i32_1 = arith.constant 0 : i32
    return %c0_i32, %c0_i32_0 : i32, i32
  }
  func.func @transform_5(%arg0: i32, %arg1: i32) -> (i32, i32, i32) {
    %c0_i32 = arith.constant 0 : i32
    %c0_i32_0 = arith.constant 0 : i32
    return %arg0, %arg1, %c0_i32 : i32, i32, i32
  }
}

</mosaic_0001>

<llo_original>
// kernel: attention_forward.1
$region0: #{attention_forward.1}
  #allocation0 [shape = 'u32[]', space=smem, size = 0x4, offset = 0x4, fixed_abs, tag = 'smem constant byte address 0x4 - core index']
  #allocation1 [shape = 'u32[144,128]{1,0:T(1,128)}', space=vmem, size = 0x12000, scoped, tag = 'internal scratch']
  #allocation2 [shape = 'bf16[128,1024]{1,0:T(16,128)(2,1)}', space=vmem, size = 0x40000, scoped, tag = 'scratch operand']
  #allocation3 [shape = 'bf16[1024,128]{1,0:T(16,128)(2,1)}', space=vmem, size = 0x40000, scoped, tag = 'scratch operand']
  #allocation4 [shape = 'bf16[128,1024]{1,0:T(16,128)(2,1)}', space=vmem, size = 0x40000, scoped, tag = 'scratch operand']
  %s0 = inlined_call_operand.vmem [shape: bf16[2,256,128], index: 0, kind: input, shape index: {}]
  %s1 = inlined_call_operand.vmem [shape: bf16[2,128,128], index: 1, kind: input, shape index: {}]
  %s2 = inlined_call_operand.vmem [shape: bf16[128,256], index: 2, kind: input, shape index: {}]
  %s3 = inlined_call_operand.vmem [shape: bf16[128,128], index: 3, kind: input, shape index: {}]
  %s4 = inlined_call_operand.vmem [shape: f32[1,128], index: 4, kind: input, shape index: {}]
  %s5 = inlined_call_operand.hbm [shape: f32[2,256,128], index: 5, kind: output, shape index: {}]
  %s6 = sld [smem:[#allocation0]]
  $region57: #{attention_forward.1} parent=0
    _
  %s8 = ssub.s32 1, %s6
  %s9 = scalar_select 0, %s8, %s6
  $region1: #{attention_forward.1} parent=0
    #allocation5 [shape = 'u8[131072]{0}', space=vmem, size = 0x20000, scoped, tag = 'output window, operand 0']
    #allocation6 [shape = 's32[2]{0}', space=sflag, size = 0x8, scoped, tag = 'scoped memory for attention_forward.1']
    %10 = vsyncpa [#allocation6], 0
    %s11 = scalar_lea.sflag [#allocation6], 1
    %12 = vsyncpa %s11, 0
    loop: start=0, step=1, limit=6
    $region2: #{attention_forward.1} parent=1 // loop_pre_header
      _
    $region3: #{attention_forward.1} parent=1 // loop_header
      %s14 = sphi 0, %s18
      %p15 = scmp.ge.s32.totalorder %s14, 6
      %s21 = sphi 0, %s33
      %s22 = sphi 0, %s29
      %s23 = sphi 0, %s21
      %s24 = sphi 0, %s22
      %s25 = sphi 0, %s23
      %s26 = sphi 0, %s24
      %s38 = sphi 0, %s40
      %s41 = sphi 0, %s38
      %s42 = sphi 0, %s41
      %s58 = sphi 0, %s42
      %s64 = sphi 0, %s66
      %s67 = sphi 0, %s64
      %s68 = sphi 0, %s67
      %s84 = sphi 0, %s68
      %s88 = sphi 0, %s88
      %s90 = sphi 0, %s88
      %s91 = sphi 0, %s90
      %s105 = sphi 0, %s91
      %s109 = sphi 0, %s109
      %s111 = sphi 0, %s109
      %s112 = sphi 0, %s111
      %s126 = sphi 0, %s112
      %s130 = sphi 0, %s130
      %s132 = sphi 0, %s130
      %s133 = sphi 0, %s132
      %s147 = sphi 0, %s133
      %s155 = sphi 0, %s157
      %s158 = sphi 0, %s155
      %s159 = sphi 0, %s158
      %s175 = sphi 0, %s159
    $region4: #{attention_forward.1} parent=1 // loop_header_branch
      %17 = sbr.rel (%p15) target = $region8
    $region5: #{attention_forward.1} parent=1 // loop_body
      %s19 = ssub.s32 %s14, 1
      %s20 = ssub.s32 %s14, 2
      %s27 = sadd.s32 1, %s22
      %p28 = scmp.ge.s32.totalorder %s27, 2
      %s29 = scalar_select %p28, 0, %s27
      %s30 = sadd.s32 1, %s21
      %s31 = scalar_select %p28, %s30, %s21
      %p32 = scmp.ge.s32.totalorder %s31, 2
      %s33 = scalar_select %p32, 0, %s31
      %s34 = ssub.s32 %s21, %s33
      %s35 = ssub.s32 %s22, %s29
      %s36 = sor.u32 %s34, %s35
      %p37 = scmp.eq.s32.totalorder %s36, 0
      %s39 = sadd.s32 %s38, 1
      %s40 = scalar_select %p37, %s38, %s39
      %p43 = pneg %p37
      %p44 = scmp.eq.s32.totalorder %s14, 3
      %p45 = por %p43, %p44
      %p46 = scmp.ne.s32.totalorder %s38, %s41
      %p47 = scmp.eq.s32.totalorder %s14, 0
      %p48 = por %p46, %p47
      %p49 = scmp.ne.s32.totalorder %s38, %s41
      %p50 = scmp.eq.s32.totalorder %s19, 3
      %p51 = por %p49, %p50
      %p52 = scmp.ne.s32.totalorder %s41, %s42
      %p53 = scmp.eq.s32.totalorder %s19, 0
      %p54 = por %p52, %p53
      %p55 = scmp.ne.s32.totalorder %s41, %s42
      %p56 = scmp.eq.s32.totalorder %s20, 3
      %p57 = por %p55, %p56
      %p59 = scmp.ne.s32.totalorder %s42, %s58
      %p60 = scmp.eq.s32.totalorder %s20, 0
      %p61 = por %p59, %p60
      %s62 = ssub.s32 %s21, %s33
      %p63 = scmp.eq.s32.totalorder %s62, 0
      %s65 = sadd.s32 %s64, 1
      %s66 = scalar_select %p63, %s64, %s65
      %p69 = pneg %p63
      %p70 = scmp.eq.s32.totalorder %s14, 3
      %p71 = por %p69, %p70
      %p72 = scmp.ne.s32.totalorder %s64, %s67
      %p73 = scmp.eq.s32.totalorder %s14, 0
      %p74 = por %p72, %p73
      %p75 = scmp.ne.s32.totalorder %s64, %s67
      %p76 = scmp.eq.s32.totalorder %s19, 3
      %p77 = por %p75, %p76
      %p78 = scmp.ne.s32.totalorder %s67, %s68
      %p79 = scmp.eq.s32.totalorder %s19, 0
      %p80 = por %p78, %p79
      %p81 = scmp.ne.s32.totalorder %s67, %s68
      %p82 = scmp.eq.s32.totalorder %s20, 3
      %p83 = por %p81, %p82
      %p85 = scmp.ne.s32.totalorder %s68, %s84
      %p86 = scmp.eq.s32.totalorder %s20, 0
      %p87 = por %p85, %p86
      %s89 = sadd.s32 %s88, 1
      %p92 = scmp.eq.s32.totalorder %s14, 3
      %p93 = scmp.ne.s32.totalorder %s88, %s90
      %p94 = scmp.eq.s32.totalorder %s14, 0
      %p95 = por %p93, %p94
      %p96 = scmp.ne.s32.totalorder %s88, %s90
      %p97 = scmp.eq.s32.totalorder %s19, 3
      %p98 = por %p96, %p97
      %p99 = scmp.ne.s32.totalorder %s90, %s91
      %p100 = scmp.eq.s32.totalorder %s19, 0
      %p101 = por %p99, %p100
      %p102 = scmp.ne.s32.totalorder %s90, %s91
      %p103 = scmp.eq.s32.totalorder %s20, 3
      %p104 = por %p102, %p103
      %p106 = scmp.ne.s32.totalorder %s91, %s105
      %p107 = scmp.eq.s32.totalorder %s20, 0
      %p108 = por %p106, %p107
      %s110 = sadd.s32 %s109, 1
      %p113 = scmp.eq.s32.totalorder %s14, 3
      %p114 = scmp.ne.s32.totalorder %s109, %s111
      %p115 = scmp.eq.s32.totalorder %s14, 0
      %p116 = por %p114, %p115
      %p117 = scmp.ne.s32.totalorder %s109, %s111
      %p118 = scmp.eq.s32.totalorder %s19, 3
      %p119 = por %p117, %p118
      %p120 = scmp.ne.s32.totalorder %s111, %s112
      %p121 = scmp.eq.s32.totalorder %s19, 0
      %p122 = por %p120, %p121
      %p123 = scmp.ne.s32.totalorder %s111, %s112
      %p124 = scmp.eq.s32.totalorder %s20, 3
      %p125 = por %p123, %p124
      %p127 = scmp.ne.s32.totalorder %s112, %s126
      %p128 = scmp.eq.s32.totalorder %s20, 0
      %p129 = por %p127, %p128
      %s131 = sadd.s32 %s130, 1
      %p134 = scmp.eq.s32.totalorder %s14, 3
      %p135 = scmp.ne.s32.totalorder %s130, %s132
      %p136 = scmp.eq.s32.totalorder %s14, 0
      %p137 = por %p135, %p136
      %p138 = scmp.ne.s32.totalorder %s130, %s132
      %p139 = scmp.eq.s32.totalorder %s19, 3
      %p140 = por %p138, %p139
      %p141 = scmp.ne.s32.totalorder %s132, %s133
      %p142 = scmp.eq.s32.totalorder %s19, 0
      %p143 = por %p141, %p142
      %p144 = scmp.ne.s32.totalorder %s132, %s133
      %p145 = scmp.eq.s32.totalorder %s20, 3
      %p146 = por %p144, %p145
      %p148 = scmp.ne.s32.totalorder %s133, %s147
      %p149 = scmp.eq.s32.totalorder %s20, 0
      %p150 = por %p148, %p149
      %s151 = ssub.s32 %s21, %s33
      %s152 = ssub.s32 %s22, %s29
      %s153 = sor.u32 %s151, %s152
      %p154 = scmp.eq.s32.totalorder %s153, 0
      %s156 = sadd.s32 %s155, 1
      %s157 = scalar_select %p154, %s155, %s156
      %p160 = pneg %p154
      %p161 = scmp.eq.s32.totalorder %s14, 3
      %p162 = por %p160, %p161
      %p163 = scmp.ne.s32.totalorder %s155, %s158
      %p164 = scmp.eq.s32.totalorder %s14, 0
      %p165 = por %p163, %p164
      %p166 = scmp.ne.s32.totalorder %s155, %s158
      %p167 = scmp.eq.s32.totalorder %s19, 3
      %p168 = por %p166, %p167
      %p169 = scmp.ne.s32.totalorder %s158, %s159
      %p170 = scmp.eq.s32.totalorder %s19, 0
      %p171 = por %p169, %p170
      %p172 = scmp.ne.s32.totalorder %s158, %s159
      %p173 = scmp.eq.s32.totalorder %s20, 3
      %p174 = por %p172, %p173
      %p176 = scmp.ne.s32.totalorder %s159, %s175
      %p177 = scmp.eq.s32.totalorder %s20, 0
      %p178 = por %p176, %p177
      %p179 = scmp.le.s32.totalorder 1, %s14
      %p180 = scmp.lt.s32.totalorder %s14, 5
      %p181 = pnand %p179, %p180
      %p182 = pneg %p181
      // Predicated region
      $region9: #{attention_forward.1} parent=5 // pred_check
        _
      $region10: #{attention_forward.1} parent=5 // pred_check_branch
        %184 = sbr.rel (%p181) target = $region12
      $region11: #{attention_forward.1} parent=5 // pred_region
        %s185 = ssub.s32 %s14, 1
        // Predicated region
        $region13: #{attention_forward.1} parent=11 // pred_check
          %p186 = pneg %p101
        $region14: #{attention_forward.1} parent=11 // pred_check_branch
          %188 = sbr.rel (%p186) target = $region16
        $region15: #{attention_forward.1} parent=11 // pred_region
          _
        $region16: #{attention_forward.1} parent=11 // pred_fallthru
          _
        // Predicated region
        $region17: #{attention_forward.1} parent=11 // pred_check
          %p189 = pneg %p122
        $region18: #{attention_forward.1} parent=11 // pred_check_branch
          %191 = sbr.rel (%p189) target = $region20
        $region19: #{attention_forward.1} parent=11 // pred_region
          _
        $region20: #{attention_forward.1} parent=11 // pred_fallthru
          _
        // Predicated region
        $region21: #{attention_forward.1} parent=11 // pred_check
          %p192 = pneg %p143
        $region22: #{attention_forward.1} parent=11 // pred_check_branch
          %194 = sbr.rel (%p192) target = $region24
        $region23: #{attention_forward.1} parent=11 // pred_region
          _
        $region24: #{attention_forward.1} parent=11 // pred_fallthru
          _
      $region12: #{attention_forward.1} parent=5 // pred_fallthru
        _
      %p195 = scmp.lt.s32.totalorder %s14, 4
      // Predicated region
      $region25: #{attention_forward.1} parent=5 // pred_check
        %p196 = pneg %p195
      $region26: #{attention_forward.1} parent=5 // pred_check_branch
        %198 = sbr.rel (%p196) target = $region28
      $region27: #{attention_forward.1} parent=5 // pred_region
        // Predicated region
        $region29: #{attention_forward.1} parent=27 // pred_check
          %p199 = pneg %p48
        $region30: #{attention_forward.1} parent=27 // pred_check_branch
          %201 = sbr.rel (%p199) target = $region32
        $region31: #{attention_forward.1} parent=27 // pred_region
          %s202 = smul.u32 16, %s22
          %p203 = scmp.lt.s32.totalorder %s21, 1
          %s204 = scalar_select %p203, %s21, 1
          %p205 = scmp.lt.s32.totalorder %s202, 31
          %s206 = scalar_select %p205, %s202, 31
          %s207 = smul.addr %s204, 32
          %s208 = sadd.s32 %s206, %s207
          %s209 = smul.addr %s208, 4
          %s210 = scalar_lea.vmem %s0, %s209
          %s211 = smul.u32 16, %s22
        $region32: #{attention_forward.1} parent=27 // pred_fallthru
          _
        // Predicated region
        $region33: #{attention_forward.1} parent=27 // pred_check
          %p212 = pneg %p74
        $region34: #{attention_forward.1} parent=27 // pred_check_branch
          %214 = sbr.rel (%p212) target = $region36
        $region35: #{attention_forward.1} parent=27 // pred_region
          %p215 = scmp.lt.s32.totalorder %s21, 1
          %s216 = scalar_select %p215, %s21, 1
          %s217 = smul.addr %s216, 16
          %s218 = smul.addr %s217, 4
          %s219 = scalar_lea.vmem %s1, %s218
        $region36: #{attention_forward.1} parent=27 // pred_fallthru
          _
      $region28: #{attention_forward.1} parent=5 // pred_fallthru
        _
      %p220 = scmp.le.s32.totalorder 1, %s14
      %p221 = scmp.lt.s32.totalorder %s14, 5
      %p222 = pnand %p220, %p221
      %p223 = pneg %p222
      // Predicated region
      $region37: #{attention_forward.1} parent=5 // pred_check
        _
      $region38: #{attention_forward.1} parent=5 // pred_check_branch
        %225 = sbr.rel (%p222) target = $region40
      $region39: #{attention_forward.1} parent=5 // pred_region
        %s226 = ssub.s32 %s14, 1
        %s227 = smul.u32 16, %s24
        %p228 = scmp.lt.s32.totalorder %s23, 1
        %s229 = scalar_select %p228, %s23, 1
        %p230 = scmp.lt.s32.totalorder %s227, 31
        %s231 = scalar_select %p230, %s227, 31
        %s232 = smul.addr %s229, 32
        %s233 = sadd.s32 %s231, %s232
        %s234 = smul.addr %s233, 4
        %s235 = scalar_lea.vmem %s0, %s234
        %p236 = pneg %p54
        %p237 = pneg %p51
        %p238 = scmp.lt.s32.totalorder %s23, 1
        %s239 = scalar_select %p238, %s23, 1
        %s240 = smul.addr %s239, 16
        %s241 = smul.addr %s240, 4
        %s242 = scalar_lea.vmem %s1, %s241
        %p243 = pneg %p80
        %p244 = pneg %p77
        %p245 = pneg %p101
        %p246 = pneg %p98
        %p247 = pneg %p122
        %p248 = pneg %p119
        %p249 = pneg %p143
        %p250 = pneg %p140
        %p251 = pneg %p171
        %p252 = pneg %p168
        %s253 = sand.u32 %s158, 1
        %s254 = scalar_lea.sflag [#allocation6], %s253
        %s255 = sand.u32 %s158, 1
        %s256 = smul.addr %s255, 128
        %s257 = scalar_lea.vmem [#allocation5], %s256
        %s258 = smul.u32 16, %s24
        %p259 = scmp.lt.s32.totalorder %s23, 1
        %s260 = scalar_select %p259, %s23, 1
        %p261 = scmp.lt.s32.totalorder %s258, 31
        %s262 = scalar_select %p261, %s258, 31
        %s263 = smul.addr %s260, 32
        %s264 = sadd.s32 %s262, %s263
        %s265 = smul.addr %s264, 4
        %s266 = scalar_lea.vmem %s0, %s265
        %s267 = smul.u32 16, %s24
        %p268 = scmp.lt.s32.totalorder %s23, 1
        %s269 = scalar_select %p268, %s23, 1
        %s270 = smul.addr %s269, 16
        %s271 = smul.addr %s270, 4
        %s272 = scalar_lea.vmem %s1, %s271
        %s273 = smul.u32 16, %s24
        %p275 = scmp.eq.s32.totalorder %s24, 0
        // Predicated region
        $region41: #{attention_forward.1} parent=39 // pred_check
          %p276 = pneg %p275
        $region42: #{attention_forward.1} parent=39 // pred_check_branch
          %278 = sbr.rel (%p276) target = $region44
        $region43: #{attention_forward.1} parent=39 // pred_region
          %v279 = vld [vmem:[%s272] sm:$0xf]
          %v280 = vld [vmem:[%s272 + $0x4] sm:$0xf]
          %v281 = vld [vmem:[%s272 + $0x8] sm:$0xf]
          %v282 = vld [vmem:[%s272 + $0xc] sm:$0xf]
          %v283 = vld [vmem:[%s272 + $0x10] sm:$0xf]
          %v284 = vld [vmem:[%s272 + $0x14] sm:$0xf]
          %v285 = vld [vmem:[%s272 + $0x18] sm:$0xf]
          %v286 = vld [vmem:[%s272 + $0x1c] sm:$0xf]
          %v287 = vld [vmem:[%s272 + $0x20] sm:$0xf]
          %v288 = vld [vmem:[%s272 + $0x24] sm:$0xf]
          %v289 = vld [vmem:[%s272 + $0x28] sm:$0xf]
          %v290 = vld [vmem:[%s272 + $0x2c] sm:$0xf]
          %v291 = vld [vmem:[%s272 + $0x30] sm:$0xf]
          %v292 = vld [vmem:[%s272 + $0x34] sm:$0xf]
          %v293 = vld [vmem:[%s272 + $0x38] sm:$0xf]
          %v294 = vld [vmem:[%s272 + $0x3c] sm:$0xf]
          %v295 = vld [vmem:[%s2] sm:$0xff]
          %v296 = vld [vmem:[%s2 + $0x8] sm:$0xff]
          %v297 = vld [vmem:[%s2 + $0x10] sm:$0xff]
          %v298 = vld [vmem:[%s2 + $0x18] sm:$0xff]
          %v299 = vld [vmem:[%s2 + $0x20] sm:$0xff]
          %v300 = vld [vmem:[%s2 + $0x28] sm:$0xff]
          %v301 = vld [vmem:[%s2 + $0x30] sm:$0xff]
          %v302 = vld [vmem:[%s2 + $0x38] sm:$0xff]
          %v303 = vld [vmem:[%s2 + $0x40] sm:$0xff]
          %v304 = vld [vmem:[%s2 + $0x48] sm:$0xff]
          %v305 = vld [vmem:[%s2 + $0x50] sm:$0xff]
          %v306 = vld [vmem:[%s2 + $0x58] sm:$0xff]
          %v307 = vld [vmem:[%s2 + $0x60] sm:$0xff]
          %v308 = vld [vmem:[%s2 + $0x68] sm:$0xff]
          %v309 = vld [vmem:[%s2 + $0x70] sm:$0xff]
          %v310 = vld [vmem:[%s2 + $0x78] sm:$0xff]
          %v327 = vunpack.c.l.b16 %v279
          %v328 = vunpack.c.l.b16 %v280
          %v329 = vunpack.c.l.b16 %v281
          %v330 = vunpack.c.l.b16 %v282
          %v331 = vunpack.c.l.b16 %v283
          %v332 = vunpack.c.l.b16 %v284
          %v333 = vunpack.c.l.b16 %v285
          %v334 = vunpack.c.l.b16 %v286
          %v335 = vunpack.c.l.b16 %v287
          %v336 = vunpack.c.l.b16 %v288
          %v337 = vunpack.c.l.b16 %v289
          %v338 = vunpack.c.l.b16 %v290
          %v339 = vunpack.c.l.b16 %v291
          %v340 = vunpack.c.l.b16 %v292
          %v341 = vunpack.c.l.b16 %v293
          %v342 = vunpack.c.l.b16 %v294
          %v343 = vpack.c.b16 %v328, %v327
          %v344 = vpack.c.b16 %v330, %v329
          %v345 = vpack.c.b16 %v332, %v331
          %v346 = vpack.c.b16 %v334, %v333
          %v347 = vpack.c.b16 %v336, %v335
          %v348 = vpack.c.b16 %v338, %v337
          %v349 = vpack.c.b16 %v340, %v339
          %v350 = vpack.c.b16 %v342, %v341
          %v375 = vunpack.c.l.b16 %v295
          %v376 = vunpack.c.h.b16 %v295
          %v377 = vunpack.c.l.b16 %v296
          %v378 = vunpack.c.h.b16 %v296
          %v379 = vunpack.c.l.b16 %v297
          %v380 = vunpack.c.h.b16 %v297
          %v381 = vunpack.c.l.b16 %v298
          %v382 = vunpack.c.h.b16 %v298
          %v383 = vunpack.c.l.b16 %v299
          %v384 = vunpack.c.h.b16 %v299
          %v385 = vunpack.c.l.b16 %v300
          %v386 = vunpack.c.h.b16 %v300
          %v387 = vunpack.c.l.b16 %v301
          %v388 = vunpack.c.h.b16 %v301
          %v389 = vunpack.c.l.b16 %v302
          %v390 = vunpack.c.h.b16 %v302
          %v391 = vunpack.c.l.b16 %v303
          %v392 = vunpack.c.h.b16 %v303
          %v393 = vunpack.c.l.b16 %v304
          %v394 = vunpack.c.h.b16 %v304
          %v395 = vunpack.c.l.b16 %v305
          %v396 = vunpack.c.h.b16 %v305
          %v397 = vunpack.c.l.b16 %v306
          %v398 = vunpack.c.h.b16 %v306
          %v399 = vunpack.c.l.b16 %v307
          %v400 = vunpack.c.h.b16 %v307
          %v401 = vunpack.c.l.b16 %v308
          %v402 = vunpack.c.h.b16 %v308
          %v403 = vunpack.c.l.b16 %v309
          %v404 = vunpack.c.h.b16 %v309
          %v405 = vunpack.c.l.b16 %v310
          %v406 = vunpack.c.h.b16 %v310
          %v407 = vpack.c.b16 %v377, %v375
          %v408 = vpack.c.b16 %v378, %v376
          %v409 = vpack.c.b16 %v381, %v379
          %v410 = vpack.c.b16 %v382, %v380
          %v411 = vpack.c.b16 %v385, %v383
          %v412 = vpack.c.b16 %v386, %v384
          %v413 = vpack.c.b16 %v389, %v387
          %v414 = vpack.c.b16 %v390, %v388
          %v415 = vpack.c.b16 %v393, %v391
          %v416 = vpack.c.b16 %v394, %v392
          %v417 = vpack.c.b16 %v397, %v395
          %v418 = vpack.c.b16 %v398, %v396
          %v419 = vpack.c.b16 %v401, %v399
          %v420 = vpack.c.b16 %v402, %v400
          %v421 = vpack.c.b16 %v405, %v403
          %v422 = vpack.c.b16 %v406, %v404
          %439 = vmatprep.subr.bf16.mxu0 %v408
          %440 = vmatpush1.bf16.msra.mxu0 %v407
          %441 = vmatprep.subr.bf16.mxu0 %v410
          %442 = vmatpush1.bf16.msra.mxu0 %v409
          %443 = vmatprep.subr.bf16.mxu0 %v412
          %444 = vmatpush1.bf16.msra.mxu0 %v411
          %445 = vmatprep.subr.bf16.mxu0 %v414
          %446 = vmatpush1.bf16.msra.mxu0 %v413
          %447 = vmatprep.subr.bf16.mxu0 %v416
          %448 = vmatpush1.bf16.msra.mxu0 %v415
          %449 = vmatprep.subr.bf16.mxu0 %v418
          %450 = vmatpush1.bf16.msra.mxu0 %v417
          %451 = vmatprep.subr.bf16.mxu0 %v420
          %452 = vmatpush1.bf16.msra.mxu0 %v419
          %453 = vmatprep.subr.bf16.mxu0 %v422
          %454 = vmatpush1.bf16.msra.mxu0 %v421
          %455 = vmatprep.subr.bf16.mxu0 0
          %456 = vmatpush1.bf16.msra.mxu0 0
          %457 = vmatprep.subr.bf16.mxu0 0
          %458 = vmatpush1.bf16.msra.mxu0 0
          %459 = vmatprep.subr.bf16.mxu0 0
          %460 = vmatpush1.bf16.msra.mxu0 0
          %461 = vmatprep.subr.bf16.mxu0 0
          %462 = vmatpush1.bf16.msra.mxu0 0
          %463 = vmatprep.subr.bf16.mxu0 0
          %464 = vmatpush1.bf16.msra.mxu0 0
          %465 = vmatprep.subr.bf16.mxu0 0
          %466 = vmatpush1.bf16.msra.mxu0 0
          %467 = vmatprep.subr.bf16.mxu0 0
          %468 = vmatpush1.bf16.msra.mxu0 0
          %469 = vmatprep.subr.bf16.mxu0 0
          %470 = vmatpush1.bf16.msra.mxu0 0
          %471 = vmatprep.mubr.bf16.mxu0 0
          %472 = vmatmul.mubr.bf16.gmra.mrb[0].mxu0 %v343
          %v473 = vpop.f32.mrb[0].mxu0
          %v474 = vadd.f32 0.0, %v473
          %v475 = vpop.f32.mrb[0].mxu0
          %v476 = vadd.f32 0.0, %v475
          %v477 = vpop.f32.mrb[0].mxu0
          %v478 = vadd.f32 0.0, %v477
          %v479 = vpop.f32.mrb[0].mxu0
          %v480 = vadd.f32 0.0, %v479
          %481 = vmatprep.mubr.bf16.mxu0 0
          %482 = vmatmul.mubr.bf16.gmra.mrb[0].mxu0 %v344
          %v483 = vpop.f32.mrb[0].mxu0
          %v484 = vadd.f32 0.0, %v483
          %v485 = vpop.f32.mrb[0].mxu0
          %v486 = vadd.f32 0.0, %v485
          %v487 = vpop.f32.mrb[0].mxu0
          %v488 = vadd.f32 0.0, %v487
          %v489 = vpop.f32.mrb[0].mxu0
          %v490 = vadd.f32 0.0, %v489
          %491 = vmatprep.mubr.bf16.mxu0 0
          %492 = vmatmul.mubr.bf16.gmra.mrb[0].mxu0 %v345
          %v493 = vpop.f32.mrb[0].mxu0
          %v494 = vadd.f32 0.0, %v493
          %v495 = vpop.f32.mrb[0].mxu0
          %v496 = vadd.f32 0.0, %v495
          %v497 = vpop.f32.mrb[0].mxu0
          %v498 = vadd.f32 0.0, %v497
          %v499 = vpop.f32.mrb[0].mxu0
          %v500 = vadd.f32 0.0, %v499
          %501 = vmatprep.mubr.bf16.mxu0 0
          %502 = vmatmul.mubr.bf16.gmra.mrb[0].mxu0 %v346
          %v503 = vpop.f32.mrb[0].mxu0
          %v504 = vadd.f32 0.0, %v503
          %v505 = vpop.f32.mrb[0].mxu0
          %v506 = vadd.f32 0.0, %v505
          %v507 = vpop.f32.mrb[0].mxu0
          %v508 = vadd.f32 0.0, %v507
          %v509 = vpop.f32.mrb[0].mxu0
          %v510 = vadd.f32 0.0, %v509
          %511 = vmatprep.mubr.bf16.mxu0 0
          %512 = vmatmul.mubr.bf16.gmra.mrb[0].mxu0 %v347
          %v513 = vpop.f32.mrb[0].mxu0
          %v514 = vadd.f32 0.0, %v513
          %v515 = vpop.f32.mrb[0].mxu0
          %v516 = vadd.f32 0.0, %v515
          %v517 = vpop.f32.mrb[0].mxu0
          %v518 = vadd.f32 0.0, %v517
          %v519 = vpop.f32.mrb[0].mxu0
          %v520 = vadd.f32 0.0, %v519
          %521 = vmatprep.mubr.bf16.mxu0 0
          %522 = vmatmul.mubr.bf16.gmra.mrb[0].mxu0 %v348
          %v523 = vpop.f32.mrb[0].mxu0
          %v524 = vadd.f32 0.0, %v523
          %v525 = vpop.f32.mrb[0].mxu0
          %v526 = vadd.f32 0.0, %v525
          %v527 = vpop.f32.mrb[0].mxu0
          %v528 = vadd.f32 0.0, %v527
          %v529 = vpop.f32.mrb[0].mxu0
          %v530 = vadd.f32 0.0, %v529
          %531 = vmatprep.mubr.bf16.mxu0 0
          %532 = vmatmul.mubr.bf16.gmra.mrb[0].mxu0 %v349
          %v533 = vpop.f32.mrb[0].mxu0
          %v534 = vadd.f32 0.0, %v533
          %v535 = vpop.f32.mrb[0].mxu0
          %v536 = vadd.f32 0.0, %v535
          %v537 = vpop.f32.mrb[0].mxu0
          %v538 = vadd.f32 0.0, %v537
          %v539 = vpop.f32.mrb[0].mxu0
          %v540 = vadd.f32 0.0, %v539
          %541 = vmatprep.mubr.bf16.mxu0 0
          %542 = vmatmul.mubr.bf16.gmra.mrb[0].mxu0 %v350
          %v543 = vpop.f32.mrb[0].mxu0
          %v544 = vadd.f32 0.0, %v543
          %v545 = vpop.f32.mrb[0].mxu0
          %v546 = vadd.f32 0.0, %v545
          %v547 = vpop.f32.mrb[0].mxu0
          %v548 = vadd.f32 0.0, %v547
          %v549 = vpop.f32.mrb[0].mxu0
          %v550 = vadd.f32 0.0, %v549
          %551 = vdwg.mxu0
          %552 = vxpose.xlu0.b32.start [1/16] %v474, 128
          %553 = vxpose.xlu0.b32.cont [2/16] %v478, 128
          %554 = vxpose.xlu0.b32.cont [3/16] %v484, 128
          %555 = vxpose.xlu0.b32.cont [4/16] %v488, 128
          %556 = vxpose.xlu0.b32.cont [5/16] %v494, 128
          %557 = vxpose.xlu0.b32.cont [6/16] %v498, 128
          %558 = vxpose.xlu0.b32.cont [7/16] %v504, 128
          %559 = vxpose.xlu0.b32.cont [8/16] %v508, 128
          %560 = vxpose.xlu0.b32.cont [9/16] %v514, 128
          %561 = vxpose.xlu0.b32.cont [10/16] %v518, 128
          %562 = vxpose.xlu0.b32.cont [11/16] %v524, 128
          %563 = vxpose.xlu0.b32.cont [12/16] %v528, 128
          %564 = vxpose.xlu0.b32.cont [13/16] %v534, 128
          %565 = vxpose.xlu0.b32.cont [14/16] %v538, 128
          %566 = vxpose.xlu0.b32.cont [15/16] %v544, 128
          %567 = vxpose.xlu0.b32.end [16/16] %v548, 128
          %v568 = vpop.trf.xlu0
          %v569 = vpop.trf.xlu0
          %v570 = vpop.trf.xlu0
          %v571 = vpop.trf.xlu0
          %v572 = vpop.trf.xlu0
          %v573 = vpop.trf.xlu0
          %v574 = vpop.trf.xlu0
          %v575 = vpop.trf.xlu0
          %v576 = vpop.trf.xlu0
          %v577 = vpop.trf.xlu0
          %v578 = vpop.trf.xlu0
          %v579 = vpop.trf.xlu0
          %v580 = vpop.trf.xlu0
          %v581 = vpop.trf.xlu0
          %v582 = vpop.trf.xlu0
          %v583 = vpop.trf.xlu0
          %v584 = vpack.c.bf16 %v569, %v568
          %v585 = vpack.c.bf16 %v571, %v570
          %v586 = vpack.c.bf16 %v573, %v572
          %v587 = vpack.c.bf16 %v575, %v574
          %v588 = vpack.c.bf16 %v577, %v576
          %v589 = vpack.c.bf16 %v579, %v578
          %v590 = vpack.c.bf16 %v581, %v580
          %v591 = vpack.c.bf16 %v583, %v582
          %v592 = vpack.c.bf16 %v480, %v476
          %v593 = vpack.c.bf16 %v490, %v486
          %v594 = vpack.c.bf16 %v500, %v496
          %v595 = vpack.c.bf16 %v510, %v506
          %v596 = vpack.c.bf16 %v520, %v516
          %v597 = vpack.c.bf16 %v530, %v526
          %v598 = vpack.c.bf16 %v540, %v536
          %v599 = vpack.c.bf16 %v550, %v546
          %600 = vst [vmem:[#allocation2] sm:$0xff] 0
          %601 = vst [vmem:[#allocation2 + $0x8] sm:$0xff] 0
          %602 = vst [vmem:[#allocation2 + $0x10] sm:$0xff] 0
          %603 = vst [vmem:[#allocation2 + $0x18] sm:$0xff] 0
          %604 = vst [vmem:[#allocation2 + $0x20] sm:$0xff] 0
          %605 = vst [vmem:[#allocation2 + $0x28] sm:$0xff] 0
          %606 = vst [vmem:[#allocation2 + $0x30] sm:$0xff] 0
          %607 = vst [vmem:[#allocation2 + $0x38] sm:$0xff] 0
          %608 = vst [vmem:[#allocation2 + $0x40] sm:$0xff] 0
          %609 = vst [vmem:[#allocation2 + $0x48] sm:$0xff] 0
          %610 = vst [vmem:[#allocation2 + $0x50] sm:$0xff] 0
          %611 = vst [vmem:[#allocation2 + $0x58] sm:$0xff] 0
          %612 = vst [vmem:[#allocation2 + $0x60] sm:$0xff] 0
          %613 = vst [vmem:[#allocation2 + $0x68] sm:$0xff] 0
          %614 = vst [vmem:[#allocation2 + $0x70] sm:$0xff] 0
          %615 = vst [vmem:[#allocation2 + $0x78] sm:$0xff] 0
          %616 = vst [vmem:[#allocation2 + $0x80] sm:$0xff] 0
          %617 = vst [vmem:[#allocation2 + $0x88] sm:$0xff] 0
          %618 = vst [vmem:[#allocation2 + $0x90] sm:$0xff] 0
          %619 = vst [vmem:[#allocation2 + $0x98] sm:$0xff] 0
          %620 = vst [vmem:[#allocation2 + $0xa0] sm:$0xff] 0
          %621 = vst [vmem:[#allocation2 + $0xa8] sm:$0xff] 0
          %622 = vst [vmem:[#allocation2 + $0xb0] sm:$0xff] 0
          %623 = vst [vmem:[#allocation2 + $0xb8] sm:$0xff] 0
          %624 = vst [vmem:[#allocation2 + $0xc0] sm:$0xff] 0
          %625 = vst [vmem:[#allocation2 + $0xc8] sm:$0xff] 0
          %626 = vst [vmem:[#allocation2 + $0xd0] sm:$0xff] 0
          %627 = vst [vmem:[#allocation2 + $0xd8] sm:$0xff] 0
          %628 = vst [vmem:[#allocation2 + $0xe0] sm:$0xff] 0
          %629 = vst [vmem:[#allocation2 + $0xe8] sm:$0xff] 0
          %630 = vst [vmem:[#allocation2 + $0xf0] sm:$0xff] 0
          %631 = vst [vmem:[#allocation2 + $0xf8] sm:$0xff] 0
          %632 = vst [vmem:[#allocation2 + $0x100] sm:$0xff] 0
          %633 = vst [vmem:[#allocation2 + $0x108] sm:$0xff] 0
          %634 = vst [vmem:[#allocation2 + $0x110] sm:$0xff] 0
          %635 = vst [vmem:[#allocation2 + $0x118] sm:$0xff] 0
          %636 = vst [vmem:[#allocation2 + $0x120] sm:$0xff] 0
          %637 = vst [vmem:[#allocation2 + $0x128] sm:$0xff] 0
          %638 = vst [vmem:[#allocation2 + $0x130] sm:$0xff] 0
          %639 = vst [vmem:[#allocation2 + $0x138] sm:$0xff] 0
          %640 = vst [vmem:[#allocation2 + $0x140] sm:$0xff] 0
          %641 = vst [vmem:[#allocation2 + $0x148] sm:$0xff] 0
          %642 = vst [vmem:[#allocation2 + $0x150] sm:$0xff] 0
          %643 = vst [vmem:[#allocation2 + $0x158] sm:$0xff] 0
          %644 = vst [vmem:[#allocation2 + $0x160] sm:$0xff] 0
          %645 = vst [vmem:[#allocation2 + $0x168] sm:$0xff] 0
          %646 = vst [vmem:[#allocation2 + $0x170] sm:$0xff] 0
          %647 = vst [vmem:[#allocation2 + $0x178] sm:$0xff] 0
          %648 = vst [vmem:[#allocation2 + $0x180] sm:$0xff] 0
          %649 = vst [vmem:[#allocation2 + $0x188] sm:$0xff] 0
          %650 = vst [vmem:[#allocation2 + $0x190] sm:$0xff] 0
          %651 = vst [vmem:[#allocation2 + $0x198] sm:$0xff] 0
          %652 = vst [vmem:[#allocation2 + $0x1a0] sm:$0xff] 0
          %653 = vst [vmem:[#allocation2 + $0x1a8] sm:$0xff] 0
          %654 = vst [vmem:[#allocation2 + $0x1b0] sm:$0xff] 0
          %655 = vst [vmem:[#allocation2 + $0x1b8] sm:$0xff] 0
          %656 = vst [vmem:[#allocation2 + $0x1c0] sm:$0xff] 0
          %657 = vst [vmem:[#allocation2 + $0x1c8] sm:$0xff] 0
          %658 = vst [vmem:[#allocation2 + $0x1d0] sm:$0xff] 0
          %659 = vst [vmem:[#allocation2 + $0x1d8] sm:$0xff] 0
          %660 = vst [vmem:[#allocation2 + $0x1e0] sm:$0xff] 0
          %661 = vst [vmem:[#allocation2 + $0x1e8] sm:$0xff] 0
          %662 = vst [vmem:[#allocation2 + $0x1f0] sm:$0xff] 0
          %663 = vst [vmem:[#allocation2 + $0x1f8] sm:$0xff] 0
          %664 = vst [vmem:[#allocation3] sm:$0xff] 0
          %665 = vst [vmem:[#allocation3 + $0x8] sm:$0xff] 0
          %666 = vst [vmem:[#allocation3 + $0x10] sm:$0xff] 0
          %667 = vst [vmem:[#allocation3 + $0x18] sm:$0xff] 0
          %668 = vst [vmem:[#allocation3 + $0x20] sm:$0xff] 0
          %669 = vst [vmem:[#allocation3 + $0x28] sm:$0xff] 0
          %670 = vst [vmem:[#allocation3 + $0x30] sm:$0xff] 0
          %671 = vst [vmem:[#allocation3 + $0x38] sm:$0xff] 0
          %672 = vst [vmem:[#allocation3 + $0x40] sm:$0xff] 0
          %673 = vst [vmem:[#allocation3 + $0x48] sm:$0xff] 0
          %674 = vst [vmem:[#allocation3 + $0x50] sm:$0xff] 0
          %675 = vst [vmem:[#allocation3 + $0x58] sm:$0xff] 0
          %676 = vst [vmem:[#allocation3 + $0x60] sm:$0xff] 0
          %677 = vst [vmem:[#allocation3 + $0x68] sm:$0xff] 0
          %678 = vst [vmem:[#allocation3 + $0x70] sm:$0xff] 0
          %679 = vst [vmem:[#allocation3 + $0x78] sm:$0xff] 0
          %680 = vst [vmem:[#allocation3 + $0x80] sm:$0xff] 0
          %681 = vst [vmem:[#allocation3 + $0x88] sm:$0xff] 0
          %682 = vst [vmem:[#allocation3 + $0x90] sm:$0xff] 0
          %683 = vst [vmem:[#allocation3 + $0x98] sm:$0xff] 0
          %684 = vst [vmem:[#allocation3 + $0xa0] sm:$0xff] 0
          %685 = vst [vmem:[#allocation3 + $0xa8] sm:$0xff] 0
          %686 = vst [vmem:[#allocation3 + $0xb0] sm:$0xff] 0
          %687 = vst [vmem:[#allocation3 + $0xb8] sm:$0xff] 0
          %688 = vst [vmem:[#allocation3 + $0xc0] sm:$0xff] 0
          %689 = vst [vmem:[#allocation3 + $0xc8] sm:$0xff] 0
          %690 = vst [vmem:[#allocation3 + $0xd0] sm:$0xff] 0
          %691 = vst [vmem:[#allocation3 + $0xd8] sm:$0xff] 0
          %692 = vst [vmem:[#allocation3 + $0xe0] sm:$0xff] 0
          %693 = vst [vmem:[#allocation3 + $0xe8] sm:$0xff] 0
          %694 = vst [vmem:[#allocation3 + $0xf0] sm:$0xff] 0
          %695 = vst [vmem:[#allocation3 + $0xf8] sm:$0xff] 0
          %696 = vst [vmem:[#allocation3 + $0x100] sm:$0xff] 0
          %697 = vst [vmem:[#allocation3 + $0x108] sm:$0xff] 0
          %698 = vst [vmem:[#allocation3 + $0x110] sm:$0xff] 0
          %699 = vst [vmem:[#allocation3 + $0x118] sm:$0xff] 0
          %700 = vst [vmem:[#allocation3 + $0x120] sm:$0xff] 0
          %701 = vst [vmem:[#allocation3 + $0x128] sm:$0xff] 0
          %702 = vst [vmem:[#allocation3 + $0x130] sm:$0xff] 0
          %703 = vst [vmem:[#allocation3 + $0x138] sm:$0xff] 0
          %704 = vst [vmem:[#allocation3 + $0x140] sm:$0xff] 0
          %705 = vst [vmem:[#allocation3 + $0x148] sm:$0xff] 0
          %706 = vst [vmem:[#allocation3 + $0x150] sm:$0xff] 0
          %707 = vst [vmem:[#allocation3 + $0x158] sm:$0xff] 0
          %708 = vst [vmem:[#allocation3 + $0x160] sm:$0xff] 0
          %709 = vst [vmem:[#allocation3 + $0x168] sm:$0xff] 0
          %710 = vst [vmem:[#allocation3 + $0x170] sm:$0xff] 0
          %711 = vst [vmem:[#allocation3 + $0x178] sm:$0xff] 0
          %712 = vst [vmem:[#allocation3 + $0x180] sm:$0xff] 0
          %713 = vst [vmem:[#allocation3 + $0x188] sm:$0xff] 0
          %714 = vst [vmem:[#allocation3 + $0x190] sm:$0xff] 0
          %715 = vst [vmem:[#allocation3 + $0x198] sm:$0xff] 0
          %716 = vst [vmem:[#allocation3 + $0x1a0] sm:$0xff] 0
          %717 = vst [vmem:[#allocation3 + $0x1a8] sm:$0xff] 0
          %718 = vst [vmem:[#allocation3 + $0x1b0] sm:$0xff] 0
          %719 = vst [vmem:[#allocation3 + $0x1b8] sm:$0xff] 0
          %720 = vst [vmem:[#allocation3 + $0x1c0] sm:$0xff] 0
          %721 = vst [vmem:[#allocation3 + $0x1c8] sm:$0xff] 0
          %722 = vst [vmem:[#allocation3 + $0x1d0] sm:$0xff] 0
          %723 = vst [vmem:[#allocation3 + $0x1d8] sm:$0xff] 0
          %724 = vst [vmem:[#allocation3 + $0x1e0] sm:$0xff] 0
          %725 = vst [vmem:[#allocation3 + $0x1e8] sm:$0xff] 0
          %726 = vst [vmem:[#allocation3 + $0x1f0] sm:$0xff] 0
          %727 = vst [vmem:[#allocation3 + $0x1f8] sm:$0xff] 0
          %728 = vst [vmem:[#allocation2] sm:$0xff] %v584
          %vm729 = vcmask 130048
          %730 = vst.msk [vmem:[#allocation3] sm:$0xff] %vm729, %v592
          %731 = vst.msk [vmem:[#allocation3 + $0x8] sm:$0xff] %vm729, %v593
          %732 = vst.msk [vmem:[#allocation3 + $0x10] sm:$0xff] %vm729, %v594
          %733 = vst.msk [vmem:[#allocation3 + $0x18] sm:$0xff] %vm729, %v595
          %734 = vst.msk [vmem:[#allocation3 + $0x20] sm:$0xff] %vm729, %v596
          %735 = vst.msk [vmem:[#allocation3 + $0x28] sm:$0xff] %vm729, %v597
          %736 = vst.msk [vmem:[#allocation3 + $0x30] sm:$0xff] %vm729, %v598
          %737 = vst.msk [vmem:[#allocation3 + $0x38] sm:$0xff] %vm729, %v599
          %738 = vst [vmem:[#allocation2 + $0x48] sm:$0xff] %v585
          %vm739 = vcmask 261248
          %740 = vst.msk [vmem:[#allocation3 + $0x40] sm:$0xff] %vm739, %v592
          %741 = vst.msk [vmem:[#allocation3 + $0x48] sm:$0xff] %vm739, %v593
          %742 = vst.msk [vmem:[#allocation3 + $0x50] sm:$0xff] %vm739, %v594
          %743 = vst.msk [vmem:[#allocation3 + $0x58] sm:$0xff] %vm739, %v595
          %744 = vst.msk [vmem:[#allocation3 + $0x60] sm:$0xff] %vm739, %v596
          %745 = vst.msk [vmem:[#allocation3 + $0x68] sm:$0xff] %vm739, %v597
          %746 = vst.msk [vmem:[#allocation3 + $0x70] sm:$0xff] %vm739, %v598
          %747 = vst.msk [vmem:[#allocation3 + $0x78] sm:$0xff] %vm739, %v599
          %748 = vst [vmem:[#allocation2 + $0x90] sm:$0xff] %v586
          %vm749 = vcmask 392448
          %750 = vst.msk [vmem:[#allocation3 + $0x80] sm:$0xff] %vm749, %v592
          %751 = vst.msk [vmem:[#allocation3 + $0x88] sm:$0xff] %vm749, %v593
          %752 = vst.msk [vmem:[#allocation3 + $0x90] sm:$0xff] %vm749, %v594
          %753 = vst.msk [vmem:[#allocation3 + $0x98] sm:$0xff] %vm749, %v595
          %754 = vst.msk [vmem:[#allocation3 + $0xa0] sm:$0xff] %vm749, %v596
          %755 = vst.msk [vmem:[#allocation3 + $0xa8] sm:$0xff] %vm749, %v597
          %756 = vst.msk [vmem:[#allocation3 + $0xb0] sm:$0xff] %vm749, %v598
          %757 = vst.msk [vmem:[#allocation3 + $0xb8] sm:$0xff] %vm749, %v599
          %758 = vst [vmem:[#allocation2 + $0xd8] sm:$0xff] %v587
          %vm759 = vcmask 523648
          %760 = vst.msk [vmem:[#allocation3 + $0xc0] sm:$0xff] %vm759, %v592
          %761 = vst.msk [vmem:[#allocation3 + $0xc8] sm:$0xff] %vm759, %v593
          %762 = vst.msk [vmem:[#allocation3 + $0xd0] sm:$0xff] %vm759, %v594
          %763 = vst.msk [vmem:[#allocation3 + $0xd8] sm:$0xff] %vm759, %v595
          %764 = vst.msk [vmem:[#allocation3 + $0xe0] sm:$0xff] %vm759, %v596
          %765 = vst.msk [vmem:[#allocation3 + $0xe8] sm:$0xff] %vm759, %v597
          %766 = vst.msk [vmem:[#allocation3 + $0xf0] sm:$0xff] %vm759, %v598
          %767 = vst.msk [vmem:[#allocation3 + $0xf8] sm:$0xff] %vm759, %v599
          %768 = vst [vmem:[#allocation2 + $0x120] sm:$0xff] %v588
          %vm769 = vcmask 654848
          %770 = vst.msk [vmem:[#allocation3 + $0x100] sm:$0xff] %vm769, %v592
          %771 = vst.msk [vmem:[#allocation3 + $0x108] sm:$0xff] %vm769, %v593
          %772 = vst.msk [vmem:[#allocation3 + $0x110] sm:$0xff] %vm769, %v594
          %773 = vst.msk [vmem:[#allocation3 + $0x118] sm:$0xff] %vm769, %v595
          %774 = vst.msk [vmem:[#allocation3 + $0x120] sm:$0xff] %vm769, %v596
          %775 = vst.msk [vmem:[#allocation3 + $0x128] sm:$0xff] %vm769, %v597
          %776 = vst.msk [vmem:[#allocation3 + $0x130] sm:$0xff] %vm769, %v598
          %777 = vst.msk [vmem:[#allocation3 + $0x138] sm:$0xff] %vm769, %v599
          %778 = vst [vmem:[#allocation2 + $0x168] sm:$0xff] %v589
          %vm779 = vcmask 786048
          %780 = vst.msk [vmem:[#allocation3 + $0x140] sm:$0xff] %vm779, %v592
          %781 = vst.msk [vmem:[#allocation3 + $0x148] sm:$0xff] %vm779, %v593
          %782 = vst.msk [vmem:[#allocation3 + $0x150] sm:$0xff] %vm779, %v594
          %783 = vst.msk [vmem:[#allocation3 + $0x158] sm:$0xff] %vm779, %v595
          %784 = vst.msk [vmem:[#allocation3 + $0x160] sm:$0xff] %vm779, %v596
          %785 = vst.msk [vmem:[#allocation3 + $0x168] sm:$0xff] %vm779, %v597
          %786 = vst.msk [vmem:[#allocation3 + $0x170] sm:$0xff] %vm779, %v598
          %787 = vst.msk [vmem:[#allocation3 + $0x178] sm:$0xff] %vm779, %v599
          %788 = vst [vmem:[#allocation2 + $0x1b0] sm:$0xff] %v590
          %vm789 = vcmask 917248
          %790 = vst.msk [vmem:[#allocation3 + $0x180] sm:$0xff] %vm789, %v592
          %791 = vst.msk [vmem:[#allocation3 + $0x188] sm:$0xff] %vm789, %v593
          %792 = vst.msk [vmem:[#allocation3 + $0x190] sm:$0xff] %vm789, %v594
          %793 = vst.msk [vmem:[#allocation3 + $0x198] sm:$0xff] %vm789, %v595
          %794 = vst.msk [vmem:[#allocation3 + $0x1a0] sm:$0xff] %vm789, %v596
          %795 = vst.msk [vmem:[#allocation3 + $0x1a8] sm:$0xff] %vm789, %v597
          %796 = vst.msk [vmem:[#allocation3 + $0x1b0] sm:$0xff] %vm789, %v598
          %797 = vst.msk [vmem:[#allocation3 + $0x1b8] sm:$0xff] %vm789, %v599
          %798 = vst [vmem:[#allocation2 + $0x1f8] sm:$0xff] %v591
          %vm799 = vcmask 1048448
          %800 = vst.msk [vmem:[#allocation3 + $0x1c0] sm:$0xff] %vm799, %v592
          %801 = vst.msk [vmem:[#allocation3 + $0x1c8] sm:$0xff] %vm799, %v593
          %802 = vst.msk [vmem:[#allocation3 + $0x1d0] sm:$0xff] %vm799, %v594
          %803 = vst.msk [vmem:[#allocation3 + $0x1d8] sm:$0xff] %vm799, %v595
          %804 = vst.msk [vmem:[#allocation3 + $0x1e0] sm:$0xff] %vm799, %v596
          %805 = vst.msk [vmem:[#allocation3 + $0x1e8] sm:$0xff] %vm799, %v597
          %806 = vst.msk [vmem:[#allocation3 + $0x1f0] sm:$0xff] %vm799, %v598
          %807 = vst.msk [vmem:[#allocation3 + $0x1f8] sm:$0xff] %vm799, %v599
        $region44: #{attention_forward.1} parent=39 // pred_fallthru
          _
        %v808 = vld [vmem:[%s266] sm:$0xf]
        %v809 = vld [vmem:[%s266 + $0x4] sm:$0xf]
        %v810 = vld [vmem:[%s266 + $0x8] sm:$0xf]
        %v811 = vld [vmem:[%s266 + $0xc] sm:$0xf]
        %v812 = vld [vmem:[%s266 + $0x10] sm:$0xf]
        %v813 = vld [vmem:[%s266 + $0x14] sm:$0xf]
        %v814 = vld [vmem:[%s266 + $0x18] sm:$0xf]
        %v815 = vld [vmem:[%s266 + $0x1c] sm:$0xf]
        %v816 = vld [vmem:[%s266 + $0x20] sm:$0xf]
        %v817 = vld [vmem:[%s266 + $0x24] sm:$0xf]
        %v818 = vld [vmem:[%s266 + $0x28] sm:$0xf]
        %v819 = vld [vmem:[%s266 + $0x2c] sm:$0xf]
        %v820 = vld [vmem:[%s266 + $0x30] sm:$0xf]
        %v821 = vld [vmem:[%s266 + $0x34] sm:$0xf]
        %v822 = vld [vmem:[%s266 + $0x38] sm:$0xf]
        %v823 = vld [vmem:[%s266 + $0x3c] sm:$0xf]
        %v824 = vld [vmem:[#allocation2] sm:$0xff]
        %v825 = vld [vmem:[#allocation2 + $0x8] sm:$0xff]
        %v826 = vld [vmem:[#allocation2 + $0x10] sm:$0xff]
        %v827 = vld [vmem:[#allocation2 + $0x18] sm:$0xff]
        %v828 = vld [vmem:[#allocation2 + $0x20] sm:$0xff]
        %v829 = vld [vmem:[#allocation2 + $0x28] sm:$0xff]
        %v830 = vld [vmem:[#allocation2 + $0x30] sm:$0xff]
        %v831 = vld [vmem:[#allocation2 + $0x38] sm:$0xff]
        %v832 = vld [vmem:[#allocation2 + $0x40] sm:$0xff]
        %v833 = vld [vmem:[#allocation2 + $0x48] sm:$0xff]
        %v834 = vld [vmem:[#allocation2 + $0x50] sm:$0xff]
        %v835 = vld [vmem:[#allocation2 + $0x58] sm:$0xff]
        %v836 = vld [vmem:[#allocation2 + $0x60] sm:$0xff]
        %v837 = vld [vmem:[#allocation2 + $0x68] sm:$0xff]
        %v838 = vld [vmem:[#allocation2 + $0x70] sm:$0xff]
        %v839 = vld [vmem:[#allocation2 + $0x78] sm:$0xff]
        %v840 = vld [vmem:[#allocation2 + $0x80] sm:$0xff]
        %v841 = vld [vmem:[#allocation2 + $0x88] sm:$0xff]
        %v842 = vld [vmem:[#allocation2 + $0x90] sm:$0xff]
        %v843 = vld [vmem:[#allocation2 + $0x98] sm:$0xff]
        %v844 = vld [vmem:[#allocation2 + $0xa0] sm:$0xff]
        %v845 = vld [vmem:[#allocation2 + $0xa8] sm:$0xff]
        %v846 = vld [vmem:[#allocation2 + $0xb0] sm:$0xff]
        %v847 = vld [vmem:[#allocation2 + $0xb8] sm:$0xff]
        %v848 = vld [vmem:[#allocation2 + $0xc0] sm:$0xff]
        %v849 = vld [vmem:[#allocation2 + $0xc8] sm:$0xff]
        %v850 = vld [vmem:[#allocation2 + $0xd0] sm:$0xff]
        %v851 = vld [vmem:[#allocation2 + $0xd8] sm:$0xff]
        %v852 = vld [vmem:[#allocation2 + $0xe0] sm:$0xff]
        %v853 = vld [vmem:[#allocation2 + $0xe8] sm:$0xff]
        %v854 = vld [vmem:[#allocation2 + $0xf0] sm:$0xff]
        %v855 = vld [vmem:[#allocation2 + $0xf8] sm:$0xff]
        %v856 = vld [vmem:[#allocation2 + $0x100] sm:$0xff]
        %v857 = vld [vmem:[#allocation2 + $0x108] sm:$0xff]
        %v858 = vld [vmem:[#allocation2 + $0x110] sm:$0xff]
        %v859 = vld [vmem:[#allocation2 + $0x118] sm:$0xff]
        %v860 = vld [vmem:[#allocation2 + $0x120] sm:$0xff]
        %v861 = vld [vmem:[#allocation2 + $0x128] sm:$0xff]
        %v862 = vld [vmem:[#allocation2 + $0x130] sm:$0xff]
        %v863 = vld [vmem:[#allocation2 + $0x138] sm:$0xff]
        %v864 = vld [vmem:[#allocation2 + $0x140] sm:$0xff]
        %v865 = vld [vmem:[#allocation2 + $0x148] sm:$0xff]
        %v866 = vld [vmem:[#allocation2 + $0x150] sm:$0xff]
        %v867 = vld [vmem:[#allocation2 + $0x158] sm:$0xff]
        %v868 = vld [vmem:[#allocation2 + $0x160] sm:$0xff]
        %v869 = vld [vmem:[#allocation2 + $0x168] sm:$0xff]
        %v870 = vld [vmem:[#allocation2 + $0x170] sm:$0xff]
        %v871 = vld [vmem:[#allocation2 + $0x178] sm:$0xff]
        %v872 = vld [vmem:[#allocation2 + $0x180] sm:$0xff]
        %v873 = vld [vmem:[#allocation2 + $0x188] sm:$0xff]
        %v874 = vld [vmem:[#allocation2 + $0x190] sm:$0xff]
        %v875 = vld [vmem:[#allocation2 + $0x198] sm:$0xff]
        %v876 = vld [vmem:[#allocation2 + $0x1a0] sm:$0xff]
        %v877 = vld [vmem:[#allocation2 + $0x1a8] sm:$0xff]
        %v878 = vld [vmem:[#allocation2 + $0x1b0] sm:$0xff]
        %v879 = vld [vmem:[#allocation2 + $0x1b8] sm:$0xff]
        %v880 = vld [vmem:[#allocation2 + $0x1c0] sm:$0xff]
        %v881 = vld [vmem:[#allocation2 + $0x1c8] sm:$0xff]
        %v882 = vld [vmem:[#allocation2 + $0x1d0] sm:$0xff]
        %v883 = vld [vmem:[#allocation2 + $0x1d8] sm:$0xff]
        %v884 = vld [vmem:[#allocation2 + $0x1e0] sm:$0xff]
        %v885 = vld [vmem:[#allocation2 + $0x1e8] sm:$0xff]
        %v886 = vld [vmem:[#allocation2 + $0x1f0] sm:$0xff]
        %v887 = vld [vmem:[#allocation2 + $0x1f8] sm:$0xff]
        %v904 = vunpack.c.l.b16 %v808
        %v905 = vunpack.c.l.b16 %v809
        %v906 = vunpack.c.l.b16 %v810
        %v907 = vunpack.c.l.b16 %v811
        %v908 = vunpack.c.l.b16 %v812
        %v909 = vunpack.c.l.b16 %v813
        %v910 = vunpack.c.l.b16 %v814
        %v911 = vunpack.c.l.b16 %v815
        %v912 = vunpack.c.l.b16 %v816
        %v913 = vunpack.c.l.b16 %v817
        %v914 = vunpack.c.l.b16 %v818
        %v915 = vunpack.c.l.b16 %v819
        %v916 = vunpack.c.l.b16 %v820
        %v917 = vunpack.c.l.b16 %v821
        %v918 = vunpack.c.l.b16 %v822
        %v919 = vunpack.c.l.b16 %v823
        %v920 = vpack.c.b16 %v905, %v904
        %v921 = vpack.c.b16 %v907, %v906
        %v922 = vpack.c.b16 %v909, %v908
        %v923 = vpack.c.b16 %v911, %v910
        %v924 = vpack.c.b16 %v913, %v912
        %v925 = vpack.c.b16 %v915, %v914
        %v926 = vpack.c.b16 %v917, %v916
        %v927 = vpack.c.b16 %v919, %v918
        %936 = vmatprep.subr.bf16.mxu0 %v825
        %937 = vmatpush1.bf16.msra.mxu0 %v824
        %938 = vmatprep.subr.bf16.mxu0 %v833
        %939 = vmatpush1.bf16.msra.mxu0 %v832
        %940 = vmatprep.subr.bf16.mxu0 %v841
        %941 = vmatpush1.bf16.msra.mxu0 %v840
        %942 = vmatprep.subr.bf16.mxu0 %v849
        %943 = vmatpush1.bf16.msra.mxu0 %v848
        %944 = vmatprep.subr.bf16.mxu0 %v857
        %945 = vmatpush1.bf16.msra.mxu0 %v856
        %946 = vmatprep.subr.bf16.mxu0 %v865
        %947 = vmatpush1.bf16.msra.mxu0 %v864
        %948 = vmatprep.subr.bf16.mxu0 %v873
        %949 = vmatpush1.bf16.msra.mxu0 %v872
        %950 = vmatprep.subr.bf16.mxu0 %v881
        %951 = vmatpush1.bf16.msra.mxu0 %v880
        %952 = vmatprep.subr.bf16.mxu0 0
        %953 = vmatpush1.bf16.msra.mxu0 0
        %954 = vmatprep.subr.bf16.mxu0 0
        %955 = vmatpush1.bf16.msra.mxu0 0
        %956 = vmatprep.subr.bf16.mxu0 0
        %957 = vmatpush1.bf16.msra.mxu0 0
        %958 = vmatprep.subr.bf16.mxu0 0
        %959 = vmatpush1.bf16.msra.mxu0 0
        %960 = vmatprep.subr.bf16.mxu0 0
        %961 = vmatpush1.bf16.msra.mxu0 0
        %962 = vmatprep.subr.bf16.mxu0 0
        %963 = vmatpush1.bf16.msra.mxu0 0
        %964 = vmatprep.subr.bf16.mxu0 0
        %965 = vmatpush1.bf16.msra.mxu0 0
        %966 = vmatprep.subr.bf16.mxu0 0
        %967 = vmatpush1.bf16.msra.mxu0 0
        %968 = vmatprep.mubr.bf16.mxu0 0
        %969 = vmatmul.mubr.bf16.gmra.mrb[0].mxu0 %v920
        %v970 = vpop.f32.mrb[0].mxu0
        %v971 = vadd.f32 0.0, %v970
        %v972 = vpop.f32.mrb[0].mxu0
        %v973 = vadd.f32 0.0, %v972
        %v974 = vpop.f32.mrb[0].mxu0
        %v975 = vadd.f32 0.0, %v974
        %v976 = vpop.f32.mrb[0].mxu0
        %v977 = vadd.f32 0.0, %v976
        %978 = vmatprep.mubr.bf16.mxu0 0
        %979 = vmatmul.mubr.bf16.gmra.mrb[0].mxu0 %v921
        %v980 = vpop.f32.mrb[0].mxu0
        %v981 = vadd.f32 0.0, %v980
        %v982 = vpop.f32.mrb[0].mxu0
        %v983 = vadd.f32 0.0, %v982
        %v984 = vpop.f32.mrb[0].mxu0
        %v985 = vadd.f32 0.0, %v984
        %v986 = vpop.f32.mrb[0].mxu0
        %v987 = vadd.f32 0.0, %v986
        %988 = vmatprep.mubr.bf16.mxu0 0
        %989 = vmatmul.mubr.bf16.gmra.mrb[0].mxu0 %v922
        %v990 = vpop.f32.mrb[0].mxu0
        %v991 = vadd.f32 0.0, %v990
        %v992 = vpop.f32.mrb[0].mxu0
        %v993 = vadd.f32 0.0, %v992
        %v994 = vpop.f32.mrb[0].mxu0
        %v995 = vadd.f32 0.0, %v994
        %v996 = vpop.f32.mrb[0].mxu0
        %v997 = vadd.f32 0.0, %v996
        %998 = vmatprep.mubr.bf16.mxu0 0
        %999 = vmatmul.mubr.bf16.gmra.mrb[0].mxu0 %v923
        %v1000 = vpop.f32.mrb[0].mxu0
        %v1001 = vadd.f32 0.0, %v1000
        %v1002 = vpop.f32.mrb[0].mxu0
        %v1003 = vadd.f32 0.0, %v1002
        %v1004 = vpop.f32.mrb[0].mxu0
        %v1005 = vadd.f32 0.0, %v1004
        %v1006 = vpop.f32.mrb[0].mxu0
        %v1007 = vadd.f32 0.0, %v1006
        %1008 = vmatprep.mubr.bf16.mxu0 0
        %1009 = vmatmul.mubr.bf16.gmra.mrb[0].mxu0 %v924
        %v1010 = vpop.f32.mrb[0].mxu0
        %v1011 = vadd.f32 0.0, %v1010
        %v1012 = vpop.f32.mrb[0].mxu0
        %v1013 = vadd.f32 0.0, %v1012
        %v1014 = vpop.f32.mrb[0].mxu0
        %v1015 = vadd.f32 0.0, %v1014
        %v1016 = vpop.f32.mrb[0].mxu0
        %v1017 = vadd.f32 0.0, %v1016
        %1018 = vmatprep.mubr.bf16.mxu0 0
        %1019 = vmatmul.mubr.bf16.gmra.mrb[0].mxu0 %v925
        %v1020 = vpop.f32.mrb[0].mxu0
        %v1021 = vadd.f32 0.0, %v1020
        %v1022 = vpop.f32.mrb[0].mxu0
        %v1023 = vadd.f32 0.0, %v1022
        %v1024 = vpop.f32.mrb[0].mxu0
        %v1025 = vadd.f32 0.0, %v1024
        %v1026 = vpop.f32.mrb[0].mxu0
        %v1027 = vadd.f32 0.0, %v1026
        %1028 = vmatprep.mubr.bf16.mxu0 0
        %1029 = vmatmul.mubr.bf16.gmra.mrb[0].mxu0 %v926
        %v1030 = vpop.f32.mrb[0].mxu0
        %v1031 = vadd.f32 0.0, %v1030
        %v1032 = vpop.f32.mrb[0].mxu0
        %v1033 = vadd.f32 0.0, %v1032
        %v1034 = vpop.f32.mrb[0].mxu0
        %v1035 = vadd.f32 0.0, %v1034
        %v1036 = vpop.f32.mrb[0].mxu0
        %v1037 = vadd.f32 0.0, %v1036
        %1038 = vmatprep.mubr.bf16.mxu0 0
        %1039 = vmatmul.mubr.bf16.gmra.mrb[0].mxu0 %v927
        %v1040 = vpop.f32.mrb[0].mxu0
        %v1041 = vadd.f32 0.0, %v1040
        %v1042 = vpop.f32.mrb[0].mxu0
        %v1043 = vadd.f32 0.0, %v1042
        %v1044 = vpop.f32.mrb[0].mxu0
        %v1045 = vadd.f32 0.0, %v1044
        %v1046 = vpop.f32.mrb[0].mxu0
        %v1047 = vadd.f32 0.0, %v1046
        %1048 = vdwg.mxu0
        %1049 = vmatprep.subr.bf16.mxu0 %v827
        %1050 = vmatpush1.bf16.msra.mxu0 %v826
        %1051 = vmatprep.subr.bf16.mxu0 %v835
        %1052 = vmatpush1.bf16.msra.mxu0 %v834
        %1053 = vmatprep.subr.bf16.mxu0 %v843
        %1054 = vmatpush1.bf16.msra.mxu0 %v842
        %1055 = vmatprep.subr.bf16.mxu0 %v851
        %1056 = vmatpush1.bf16.msra.mxu0 %v850
        %1057 = vmatprep.subr.bf16.mxu0 %v859
        %1058 = vmatpush1.bf16.msra.mxu0 %v858
        %1059 = vmatprep.subr.bf16.mxu0 %v867
        %1060 = vmatpush1.bf16.msra.mxu0 %v866
        %1061 = vmatprep.subr.bf16.mxu0 %v875
        %1062 = vmatpush1.bf16.msra.mxu0 %v874
        %1063 = vmatprep.subr.bf16.mxu0 %v883
        %1064 = vmatpush1.bf16.msra.mxu0 %v882
        %1065 = vmatprep.subr.bf16.mxu0 0
        %1066 = vmatpush1.bf16.msra.mxu0 0
        %1067 = vmatprep.subr.bf16.mxu0 0
        %1068 = vmatpush1.bf16.msra.mxu0 0
        %1069 = vmatprep.subr.bf16.mxu0 0
        %1070 = vmatpush1.bf16.msra.mxu0 0
        %1071 = vmatprep.subr.bf16.mxu0 0
        %1072 = vmatpush1.bf16.msra.mxu0 0
        %1073 = vmatprep.subr.bf16.mxu0 0
        %1074 = vmatpush1.bf16.msra.mxu0 0
        %1075 = vmatprep.subr.bf16.mxu0 0
        %1076 = vmatpush1.bf16.msra.mxu0 0
        %1077 = vmatprep.subr.bf16.mxu0 0
        %1078 = vmatpush1.bf16.msra.mxu0 0
        %1079 = vmatprep.subr.bf16.mxu0 0
        %1080 = vmatpush1.bf16.msra.mxu0 0
        %1081 = vmatprep.mubr.bf16.mxu0 0
        %1082 = vmatmul.mubr.bf16.gmra.mrb[0].mxu0 %v920
        %v1083 = vpop.f32.mrb[0].mxu0
        %v1084 = vadd.f32 0.0, %v1083
        %v1085 = vpop.f32.mrb[0].mxu0
        %v1086 = vadd.f32 0.0, %v1085
        %v1087 = vpop.f32.mrb[0].mxu0
        %v1088 = vadd.f32 0.0, %v1087
        %v1089 = vpop.f32.mrb[0].mxu0
        %v1090 = vadd.f32 0.0, %v1089
        %1091 = vmatprep.mubr.bf16.mxu0 0
        %1092 = vmatmul.mubr.bf16.gmra.mrb[0].mxu0 %v921
        %v1093 = vpop.f32.mrb[0].mxu0
        %v1094 = vadd.f32 0.0, %v1093
        %v1095 = vpop.f32.mrb[0].mxu0
        %v1096 = vadd.f32 0.0, %v1095
        %v1097 = vpop.f32.mrb[0].mxu0
        %v1098 = vadd.f32 0.0, %v1097
        %v1099 = vpop.f32.mrb[0].mxu0
        %v1100 = vadd.f32 0.0, %v1099
        %1101 = vmatprep.mubr.bf16.mxu0 0
        %1102 = vmatmul.mubr.bf16.gmra.mrb[0].mxu0 %v922
        %v1103 = vpop.f32.mrb[0].mxu0
        %v1104 = vadd.f32 0.0, %v1103
        %v1105 = vpop.f32.mrb[0].mxu0
        %v1106 = vadd.f32 0.0, %v1105
        %v1107 = vpop.f32.mrb[0].mxu0
        %v1108 = vadd.f32 0.0, %v1107
        %v1109 = vpop.f32.mrb[0].mxu0
        %v1110 = vadd.f32 0.0, %v1109
        %1111 = vmatprep.mubr.bf16.mxu0 0
        %1112 = vmatmul.mubr.bf16.gmra.mrb[0].mxu0 %v923
        %v1113 = vpop.f32.mrb[0].mxu0
        %v1114 = vadd.f32 0.0, %v1113
        %v1115 = vpop.f32.mrb[0].mxu0
        %v1116 = vadd.f32 0.0, %v1115
        %v1117 = vpop.f32.mrb[0].mxu0
        %v1118 = vadd.f32 0.0, %v1117
        %v1119 = vpop.f32.mrb[0].mxu0
        %v1120 = vadd.f32 0.0, %v1119
        %1121 = vmatprep.mubr.bf16.mxu0 0
        %1122 = vmatmul.mubr.bf16.gmra.mrb[0].mxu0 %v924
        %v1123 = vpop.f32.mrb[0].mxu0
        %v1124 = vadd.f32 0.0, %v1123
        %v1125 = vpop.f32.mrb[0].mxu0
        %v1126 = vadd.f32 0.0, %v1125
        %v1127 = vpop.f32.mrb[0].mxu0
        %v1128 = vadd.f32 0.0, %v1127
        %v1129 = vpop.f32.mrb[0].mxu0
        %v1130 = vadd.f32 0.0, %v1129
        %1131 = vmatprep.mubr.bf16.mxu0 0
        %1132 = vmatmul.mubr.bf16.gmra.mrb[0].mxu0 %v925
        %v1133 = vpop.f32.mrb[0].mxu0
        %v1134 = vadd.f32 0.0, %v1133
        %v1135 = vpop.f32.mrb[0].mxu0
        %v1136 = vadd.f32 0.0, %v1135
        %v1137 = vpop.f32.mrb[0].mxu0
        %v1138 = vadd.f32 0.0, %v1137
        %v1139 = vpop.f32.mrb[0].mxu0
        %v1140 = vadd.f32 0.0, %v1139
        %1141 = vmatprep.mubr.bf16.mxu0 0
        %1142 = vmatmul.mubr.bf16.gmra.mrb[0].mxu0 %v926
        %v1143 = vpop.f32.mrb[0].mxu0
        %v1144 = vadd.f32 0.0, %v1143
        %v1145 = vpop.f32.mrb[0].mxu0
        %v1146 = vadd.f32 0.0, %v1145
        %v1147 = vpop.f32.mrb[0].mxu0
        %v1148 = vadd.f32 0.0, %v1147
        %v1149 = vpop.f32.mrb[0].mxu0
        %v1150 = vadd.f32 0.0, %v1149
        %1151 = vmatprep.mubr.bf16.mxu0 0
        %1152 = vmatmul.mubr.bf16.gmra.mrb[0].mxu0 %v927
        %v1153 = vpop.f32.mrb[0].mxu0
        %v1154 = vadd.f32 0.0, %v1153
        %v1155 = vpop.f32.mrb[0].mxu0
        %v1156 = vadd.f32 0.0, %v1155
        %v1157 = vpop.f32.mrb[0].mxu0
        %v1158 = vadd.f32 0.0, %v1157
        %v1159 = vpop.f32.mrb[0].mxu0
        %v1160 = vadd.f32 0.0, %v1159
        %1161 = vdwg.mxu0
        %1162 = vmatprep.subr.bf16.mxu0 %v829
        %1163 = vmatpush1.bf16.msra.mxu0 %v828
        %1164 = vmatprep.subr.bf16.mxu0 %v837
        %1165 = vmatpush1.bf16.msra.mxu0 %v836
        %1166 = vmatprep.subr.bf16.mxu0 %v845
        %1167 = vmatpush1.bf16.msra.mxu0 %v844
        %1168 = vmatprep.subr.bf16.mxu0 %v853
        %1169 = vmatpush1.bf16.msra.mxu0 %v852
        %1170 = vmatprep.subr.bf16.mxu0 %v861
        %1171 = vmatpush1.bf16.msra.mxu0 %v860
        %1172 = vmatprep.subr.bf16.mxu0 %v869
        %1173 = vmatpush1.bf16.msra.mxu0 %v868
        %1174 = vmatprep.subr.bf16.mxu0 %v877
        %1175 = vmatpush1.bf16.msra.mxu0 %v876
        %1176 = vmatprep.subr.bf16.mxu0 %v885
        %1177 = vmatpush1.bf16.msra.mxu0 %v884
        %1178 = vmatprep.subr.bf16.mxu0 0
        %1179 = vmatpush1.bf16.msra.mxu0 0
        %1180 = vmatprep.subr.bf16.mxu0 0
        %1181 = vmatpush1.bf16.msra.mxu0 0
        %1182 = vmatprep.subr.bf16.mxu0 0
        %1183 = vmatpush1.bf16.msra.mxu0 0
        %1184 = vmatprep.subr.bf16.mxu0 0
        %1185 = vmatpush1.bf16.msra.mxu0 0
        %1186 = vmatprep.subr.bf16.mxu0 0
        %1187 = vmatpush1.bf16.msra.mxu0 0
        %1188 = vmatprep.subr.bf16.mxu0 0
        %1189 = vmatpush1.bf16.msra.mxu0 0
        %1190 = vmatprep.subr.bf16.mxu0 0
        %1191 = vmatpush1.bf16.msra.mxu0 0
        %1192 = vmatprep.subr.bf16.mxu0 0
        %1193 = vmatpush1.bf16.msra.mxu0 0
        %1194 = vmatprep.mubr.bf16.mxu0 0
        %1195 = vmatmul.mubr.bf16.gmra.mrb[0].mxu0 %v920
        %v1196 = vpop.f32.mrb[0].mxu0
        %v1197 = vadd.f32 0.0, %v1196
        %v1198 = vpop.f32.mrb[0].mxu0
        %v1199 = vadd.f32 0.0, %v1198
        %v1200 = vpop.f32.mrb[0].mxu0
        %v1201 = vadd.f32 0.0, %v1200
        %v1202 = vpop.f32.mrb[0].mxu0
        %v1203 = vadd.f32 0.0, %v1202
        %1204 = vmatprep.mubr.bf16.mxu0 0
        %1205 = vmatmul.mubr.bf16.gmra.mrb[0].mxu0 %v921
        %v1206 = vpop.f32.mrb[0].mxu0
        %v1207 = vadd.f32 0.0, %v1206
        %v1208 = vpop.f32.mrb[0].mxu0
        %v1209 = vadd.f32 0.0, %v1208
        %v1210 = vpop.f32.mrb[0].mxu0
        %v1211 = vadd.f32 0.0, %v1210
        %v1212 = vpop.f32.mrb[0].mxu0
        %v1213 = vadd.f32 0.0, %v1212
        %1214 = vmatprep.mubr.bf16.mxu0 0
        %1215 = vmatmul.mubr.bf16.gmra.mrb[0].mxu0 %v922
        %v1216 = vpop.f32.mrb[0].mxu0
        %v1217 = vadd.f32 0.0, %v1216
        %v1218 = vpop.f32.mrb[0].mxu0
        %v1219 = vadd.f32 0.0, %v1218
        %v1220 = vpop.f32.mrb[0].mxu0
        %v1221 = vadd.f32 0.0, %v1220
        %v1222 = vpop.f32.mrb[0].mxu0
        %v1223 = vadd.f32 0.0, %v1222
        %1224 = vmatprep.mubr.bf16.mxu0 0
        %1225 = vmatmul.mubr.bf16.gmra.mrb[0].mxu0 %v923
        %v1226 = vpop.f32.mrb[0].mxu0
        %v1227 = vadd.f32 0.0, %v1226
        %v1228 = vpop.f32.mrb[0].mxu0
        %v1229 = vadd.f32 0.0, %v1228
        %v1230 = vpop.f32.mrb[0].mxu0
        %v1231 = vadd.f32 0.0, %v1230
        %v1232 = vpop.f32.mrb[0].mxu0
        %v1233 = vadd.f32 0.0, %v1232
        %1234 = vmatprep.mubr.bf16.mxu0 0
        %1235 = vmatmul.mubr.bf16.gmra.mrb[0].mxu0 %v924
        %v1236 = vpop.f32.mrb[0].mxu0
        %v1237 = vadd.f32 0.0, %v1236
        %v1238 = vpop.f32.mrb[0].mxu0
        %v1239 = vadd.f32 0.0, %v1238
        %v1240 = vpop.f32.mrb[0].mxu0
        %v1241 = vadd.f32 0.0, %v1240
        %v1242 = vpop.f32.mrb[0].mxu0
        %v1243 = vadd.f32 0.0, %v1242
        %1244 = vmatprep.mubr.bf16.mxu0 0
        %1245 = vmatmul.mubr.bf16.gmra.mrb[0].mxu0 %v925
        %v1246 = vpop.f32.mrb[0].mxu0
        %v1247 = vadd.f32 0.0, %v1246
        %v1248 = vpop.f32.mrb[0].mxu0
        %v1249 = vadd.f32 0.0, %v1248
        %v1250 = vpop.f32.mrb[0].mxu0
        %v1251 = vadd.f32 0.0, %v1250
        %v1252 = vpop.f32.mrb[0].mxu0
        %v1253 = vadd.f32 0.0, %v1252
        %1254 = vmatprep.mubr.bf16.mxu0 0
        %1255 = vmatmul.mubr.bf16.gmra.mrb[0].mxu0 %v926
        %v1256 = vpop.f32.mrb[0].mxu0
        %v1257 = vadd.f32 0.0, %v1256
        %v1258 = vpop.f32.mrb[0].mxu0
        %v1259 = vadd.f32 0.0, %v1258
        %v1260 = vpop.f32.mrb[0].mxu0
        %v1261 = vadd.f32 0.0, %v1260
        %v1262 = vpop.f32.mrb[0].mxu0
        %v1263 = vadd.f32 0.0, %v1262
        %1264 = vmatprep.mubr.bf16.mxu0 0
        %1265 = vmatmul.mubr.bf16.gmra.mrb[0].mxu0 %v927
        %v1266 = vpop.f32.mrb[0].mxu0
        %v1267 = vadd.f32 0.0, %v1266
        %v1268 = vpop.f32.mrb[0].mxu0
        %v1269 = vadd.f32 0.0, %v1268
        %v1270 = vpop.f32.mrb[0].mxu0
        %v1271 = vadd.f32 0.0, %v1270
        %v1272 = vpop.f32.mrb[0].mxu0
        %v1273 = vadd.f32 0.0, %v1272
        %1274 = vdwg.mxu0
        %1275 = vmatprep.subr.bf16.mxu0 %v831
        %1276 = vmatpush1.bf16.msra.mxu0 %v830
        %1277 = vmatprep.subr.bf16.mxu0 %v839
        %1278 = vmatpush1.bf16.msra.mxu0 %v838
        %1279 = vmatprep.subr.bf16.mxu0 %v847
        %1280 = vmatpush1.bf16.msra.mxu0 %v846
        %1281 = vmatprep.subr.bf16.mxu0 %v855
        %1282 = vmatpush1.bf16.msra.mxu0 %v854
        %1283 = vmatprep.subr.bf16.mxu0 %v863
        %1284 = vmatpush1.bf16.msra.mxu0 %v862
        %1285 = vmatprep.subr.bf16.mxu0 %v871
        %1286 = vmatpush1.bf16.msra.mxu0 %v870
        %1287 = vmatprep.subr.bf16.mxu0 %v879
        %1288 = vmatpush1.bf16.msra.mxu0 %v878
        %1289 = vmatprep.subr.bf16.mxu0 %v887
        %1290 = vmatpush1.bf16.msra.mxu0 %v886
        %1291 = vmatprep.subr.bf16.mxu0 0
        %1292 = vmatpush1.bf16.msra.mxu0 0
        %1293 = vmatprep.subr.bf16.mxu0 0
        %1294 = vmatpush1.bf16.msra.mxu0 0
        %1295 = vmatprep.subr.bf16.mxu0 0
        %1296 = vmatpush1.bf16.msra.mxu0 0
        %1297 = vmatprep.subr.bf16.mxu0 0
        %1298 = vmatpush1.bf16.msra.mxu0 0
        %1299 = vmatprep.subr.bf16.mxu0 0
        %1300 = vmatpush1.bf16.msra.mxu0 0
        %1301 = vmatprep.subr.bf16.mxu0 0
        %1302 = vmatpush1.bf16.msra.mxu0 0
        %1303 = vmatprep.subr.bf16.mxu0 0
        %1304 = vmatpush1.bf16.msra.mxu0 0
        %1305 = vmatprep.subr.bf16.mxu0 0
        %1306 = vmatpush1.bf16.msra.mxu0 0
        %1307 = vmatprep.mubr.bf16.mxu0 0
        %1308 = vmatmul.mubr.bf16.gmra.mrb[0].mxu0 %v920
        %v1309 = vpop.f32.mrb[0].mxu0
        %v1310 = vadd.f32 0.0, %v1309
        %v1311 = vpop.f32.mrb[0].mxu0
        %v1312 = vadd.f32 0.0, %v1311
        %v1313 = vpop.f32.mrb[0].mxu0
        %v1314 = vadd.f32 0.0, %v1313
        %v1315 = vpop.f32.mrb[0].mxu0
        %v1316 = vadd.f32 0.0, %v1315
        %1317 = vmatprep.mubr.bf16.mxu0 0
        %1318 = vmatmul.mubr.bf16.gmra.mrb[0].mxu0 %v921
        %v1319 = vpop.f32.mrb[0].mxu0
        %v1320 = vadd.f32 0.0, %v1319
        %v1321 = vpop.f32.mrb[0].mxu0
        %v1322 = vadd.f32 0.0, %v1321
        %v1323 = vpop.f32.mrb[0].mxu0
        %v1324 = vadd.f32 0.0, %v1323
        %v1325 = vpop.f32.mrb[0].mxu0
        %v1326 = vadd.f32 0.0, %v1325
        %1327 = vmatprep.mubr.bf16.mxu0 0
        %1328 = vmatmul.mubr.bf16.gmra.mrb[0].mxu0 %v922
        %v1329 = vpop.f32.mrb[0].mxu0
        %v1330 = vadd.f32 0.0, %v1329
        %v1331 = vpop.f32.mrb[0].mxu0
        %v1332 = vadd.f32 0.0, %v1331
        %v1333 = vpop.f32.mrb[0].mxu0
        %v1334 = vadd.f32 0.0, %v1333
        %v1335 = vpop.f32.mrb[0].mxu0
        %v1336 = vadd.f32 0.0, %v1335
        %1337 = vmatprep.mubr.bf16.mxu0 0
        %1338 = vmatmul.mubr.bf16.gmra.mrb[0].mxu0 %v923
        %v1339 = vpop.f32.mrb[0].mxu0
        %v1340 = vadd.f32 0.0, %v1339
        %v1341 = vpop.f32.mrb[0].mxu0
        %v1342 = vadd.f32 0.0, %v1341
        %v1343 = vpop.f32.mrb[0].mxu0
        %v1344 = vadd.f32 0.0, %v1343
        %v1345 = vpop.f32.mrb[0].mxu0
        %v1346 = vadd.f32 0.0, %v1345
        %1347 = vmatprep.mubr.bf16.mxu0 0
        %1348 = vmatmul.mubr.bf16.gmra.mrb[0].mxu0 %v924
        %v1349 = vpop.f32.mrb[0].mxu0
        %v1350 = vadd.f32 0.0, %v1349
        %v1351 = vpop.f32.mrb[0].mxu0
        %v1352 = vadd.f32 0.0, %v1351
        %v1353 = vpop.f32.mrb[0].mxu0
        %v1354 = vadd.f32 0.0, %v1353
        %v1355 = vpop.f32.mrb[0].mxu0
        %v1356 = vadd.f32 0.0, %v1355
        %1357 = vmatprep.mubr.bf16.mxu0 0
        %1358 = vmatmul.mubr.bf16.gmra.mrb[0].mxu0 %v925
        %v1359 = vpop.f32.mrb[0].mxu0
        %v1360 = vadd.f32 0.0, %v1359
        %v1361 = vpop.f32.mrb[0].mxu0
        %v1362 = vadd.f32 0.0, %v1361
        %v1363 = vpop.f32.mrb[0].mxu0
        %v1364 = vadd.f32 0.0, %v1363
        %v1365 = vpop.f32.mrb[0].mxu0
        %v1366 = vadd.f32 0.0, %v1365
        %1367 = vmatprep.mubr.bf16.mxu0 0
        %1368 = vmatmul.mubr.bf16.gmra.mrb[0].mxu0 %v926
        %v1369 = vpop.f32.mrb[0].mxu0
        %v1370 = vadd.f32 0.0, %v1369
        %v1371 = vpop.f32.mrb[0].mxu0
        %v1372 = vadd.f32 0.0, %v1371
        %v1373 = vpop.f32.mrb[0].mxu0
        %v1374 = vadd.f32 0.0, %v1373
        %v1375 = vpop.f32.mrb[0].mxu0
        %v1376 = vadd.f32 0.0, %v1375
        %1377 = vmatprep.mubr.bf16.mxu0 0
        %1378 = vmatmul.mubr.bf16.gmra.mrb[0].mxu0 %v927
        %v1379 = vpop.f32.mrb[0].mxu0
        %v1380 = vadd.f32 0.0, %v1379
        %v1381 = vpop.f32.mrb[0].mxu0
        %v1382 = vadd.f32 0.0, %v1381
        %v1383 = vpop.f32.mrb[0].mxu0
        %v1384 = vadd.f32 0.0, %v1383
        %v1385 = vpop.f32.mrb[0].mxu0
        %v1386 = vadd.f32 0.0, %v1385
        %1387 = vdwg.mxu0
        %1388 = vmax.xlane.f32.xlu0 %v971
        %v1389 = vpop.xlane.xlu0 %1388
        %1390 = vmax.xlane.f32.xlu0 %v975
        %v1391 = vpop.xlane.xlu0 %1390
        %1392 = vmax.xlane.f32.xlu0 %v981
        %v1393 = vpop.xlane.xlu0 %1392
        %1394 = vmax.xlane.f32.xlu0 %v985
        %v1395 = vpop.xlane.xlu0 %1394
        %1396 = vmax.xlane.f32.xlu0 %v991
        %v1397 = vpop.xlane.xlu0 %1396
        %1398 = vmax.xlane.f32.xlu0 %v995
        %v1399 = vpop.xlane.xlu0 %1398
        %1400 = vmax.xlane.f32.xlu0 %v1001
        %v1401 = vpop.xlane.xlu0 %1400
        %1402 = vmax.xlane.f32.xlu0 %v1005
        %v1403 = vpop.xlane.xlu0 %1402
        %1404 = vmax.xlane.f32.xlu0 %v1011
        %v1405 = vpop.xlane.xlu0 %1404
        %1406 = vmax.xlane.f32.xlu0 %v1015
        %v1407 = vpop.xlane.xlu0 %1406
        %1408 = vmax.xlane.f32.xlu0 %v1021
        %v1409 = vpop.xlane.xlu0 %1408
        %1410 = vmax.xlane.f32.xlu0 %v1025
        %v1411 = vpop.xlane.xlu0 %1410
        %1412 = vmax.xlane.f32.xlu0 %v1031
        %v1413 = vpop.xlane.xlu0 %1412
        %1414 = vmax.xlane.f32.xlu0 %v1035
        %v1415 = vpop.xlane.xlu0 %1414
        %1416 = vmax.xlane.f32.xlu0 %v1041
        %v1417 = vpop.xlane.xlu0 %1416
        %1418 = vmax.xlane.f32.xlu0 %v1045
        %v1419 = vpop.xlane.xlu0 %1418
        %v1420 = vsub.f32 %v971, %v1389
        %v1421 = vsub.f32 %v975, %v1391
        %v1422 = vsub.f32 %v981, %v1393
        %v1423 = vsub.f32 %v985, %v1395
        %v1424 = vsub.f32 %v991, %v1397
        %v1425 = vsub.f32 %v995, %v1399
        %v1426 = vsub.f32 %v1001, %v1401
        %v1427 = vsub.f32 %v1005, %v1403
        %v1428 = vsub.f32 %v1011, %v1405
        %v1429 = vsub.f32 %v1015, %v1407
        %v1430 = vsub.f32 %v1021, %v1409
        %v1431 = vsub.f32 %v1025, %v1411
        %v1432 = vsub.f32 %v1031, %v1413
        %v1433 = vsub.f32 %v1035, %v1415
        %v1434 = vsub.f32 %v1041, %v1417
        %v1435 = vsub.f32 %v1045, %v1419
        %v1436 = vmul.f32 %v1420, 1.442695
        %v1437 = vpow.pop %v1436
        %v1438 = vmul.f32 %v1421, 1.442695
        %v1439 = vpow.pop %v1438
        %v1440 = vmul.f32 %v1422, 1.442695
        %v1441 = vpow.pop %v1440
        %v1442 = vmul.f32 %v1423, 1.442695
        %v1443 = vpow.pop %v1442
        %v1444 = vmul.f32 %v1424, 1.442695
        %v1445 = vpow.pop %v1444
        %v1446 = vmul.f32 %v1425, 1.442695
        %v1447 = vpow.pop %v1446
        %v1448 = vmul.f32 %v1426, 1.442695
        %v1449 = vpow.pop %v1448
        %v1450 = vmul.f32 %v1427, 1.442695
        %v1451 = vpow.pop %v1450
        %v1452 = vmul.f32 %v1428, 1.442695
        %v1453 = vpow.pop %v1452
        %v1454 = vmul.f32 %v1429, 1.442695
        %v1455 = vpow.pop %v1454
        %v1456 = vmul.f32 %v1430, 1.442695
        %v1457 = vpow.pop %v1456
        %v1458 = vmul.f32 %v1431, 1.442695
        %v1459 = vpow.pop %v1458
        %v1460 = vmul.f32 %v1432, 1.442695
        %v1461 = vpow.pop %v1460
        %v1462 = vmul.f32 %v1433, 1.442695
        %v1463 = vpow.pop %v1462
        %v1464 = vmul.f32 %v1434, 1.442695
        %v1465 = vpow.pop %v1464
        %v1466 = vmul.f32 %v1435, 1.442695
        %v1467 = vpow.pop %v1466
        %1468 = vadd.xlane.f32.xlu0 %v1437
        %v1469 = vpop.xlane.xlu0 %1468
        %1470 = vadd.xlane.f32.xlu0 %v1439
        %v1471 = vpop.xlane.xlu0 %1470
        %1472 = vadd.xlane.f32.xlu0 %v1441
        %v1473 = vpop.xlane.xlu0 %1472
        %1474 = vadd.xlane.f32.xlu0 %v1443
        %v1475 = vpop.xlane.xlu0 %1474
        %1476 = vadd.xlane.f32.xlu0 %v1445
        %v1477 = vpop.xlane.xlu0 %1476
        %1478 = vadd.xlane.f32.xlu0 %v1447
        %v1479 = vpop.xlane.xlu0 %1478
        %1480 = vadd.xlane.f32.xlu0 %v1449
        %v1481 = vpop.xlane.xlu0 %1480
        %1482 = vadd.xlane.f32.xlu0 %v1451
        %v1483 = vpop.xlane.xlu0 %1482
        %1484 = vadd.xlane.f32.xlu0 %v1453
        %v1485 = vpop.xlane.xlu0 %1484
        %1486 = vadd.xlane.f32.xlu0 %v1455
        %v1487 = vpop.xlane.xlu0 %1486
        %1488 = vadd.xlane.f32.xlu0 %v1457
        %v1489 = vpop.xlane.xlu0 %1488
        %1490 = vadd.xlane.f32.xlu0 %v1459
        %v1491 = vpop.xlane.xlu0 %1490
        %1492 = vadd.xlane.f32.xlu0 %v1461
        %v1493 = vpop.xlane.xlu0 %1492
        %1494 = vadd.xlane.f32.xlu0 %v1463
        %v1495 = vpop.xlane.xlu0 %1494
        %1496 = vadd.xlane.f32.xlu0 %v1465
        %v1497 = vpop.xlane.xlu0 %1496
        %1498 = vadd.xlane.f32.xlu0 %v1467
        %v1499 = vpop.xlane.xlu0 %1498
        %v1500 = vrcp.pop %v1469
        %v1501 = vrcp.pop %v1471
        %v1502 = vrcp.pop %v1473
        %v1503 = vrcp.pop %v1475
        %v1504 = vrcp.pop %v1477
        %v1505 = vrcp.pop %v1479
        %v1506 = vrcp.pop %v1481
        %v1507 = vrcp.pop %v1483
        %v1508 = vrcp.pop %v1485
        %v1509 = vrcp.pop %v1487
        %v1510 = vrcp.pop %v1489
        %v1511 = vrcp.pop %v1491
        %v1512 = vrcp.pop %v1493
        %v1513 = vrcp.pop %v1495
        %v1514 = vrcp.pop %v1497
        %v1515 = vrcp.pop %v1499
        %v1516 = vmul.f32 %v1437, %v1500
        %v1517 = vmul.f32 %v1439, %v1501
        %v1518 = vmul.f32 %v1441, %v1502
        %v1519 = vmul.f32 %v1443, %v1503
        %v1520 = vmul.f32 %v1445, %v1504
        %v1521 = vmul.f32 %v1447, %v1505
        %v1522 = vmul.f32 %v1449, %v1506
        %v1523 = vmul.f32 %v1451, %v1507
        %v1524 = vmul.f32 %v1453, %v1508
        %v1525 = vmul.f32 %v1455, %v1509
        %v1526 = vmul.f32 %v1457, %v1510
        %v1527 = vmul.f32 %v1459, %v1511
        %v1528 = vmul.f32 %v1461, %v1512
        %v1529 = vmul.f32 %v1463, %v1513
        %v1530 = vmul.f32 %v1465, %v1514
        %v1531 = vmul.f32 %v1467, %v1515
        %v1532 = vpack.c.bf16 %v1517, %v1516
        %v1533 = vpack.c.bf16 %v1519, %v1518
        %v1534 = vpack.c.bf16 %v1521, %v1520
        %v1535 = vpack.c.bf16 %v1523, %v1522
        %v1536 = vpack.c.bf16 %v1525, %v1524
        %v1537 = vpack.c.bf16 %v1527, %v1526
        %v1538 = vpack.c.bf16 %v1529, %v1528
        %v1539 = vpack.c.bf16 %v1531, %v1530
        %1540 = vst [vmem:[#allocation4] sm:$0xff] %v1532
        %1541 = vst [vmem:[#allocation4 + $0x40] sm:$0xff] %v1533
        %1542 = vst [vmem:[#allocation4 + $0x80] sm:$0xff] %v1534
        %1543 = vst [vmem:[#allocation4 + $0xc0] sm:$0xff] %v1535
        %1544 = vst [vmem:[#allocation4 + $0x100] sm:$0xff] %v1536
        %1545 = vst [vmem:[#allocation4 + $0x140] sm:$0xff] %v1537
        %1546 = vst [vmem:[#allocation4 + $0x180] sm:$0xff] %v1538
        %1547 = vst [vmem:[#allocation4 + $0x1c0] sm:$0xff] %v1539
        %1548 = vmax.xlane.f32.xlu0 %v973
        %v1549 = vpop.xlane.xlu0 %1548
        %1550 = vmax.xlane.f32.xlu0 %v977
        %v1551 = vpop.xlane.xlu0 %1550
        %1552 = vmax.xlane.f32.xlu0 %v983
        %v1553 = vpop.xlane.xlu0 %1552
        %1554 = vmax.xlane.f32.xlu0 %v987
        %v1555 = vpop.xlane.xlu0 %1554
        %1556 = vmax.xlane.f32.xlu0 %v993
        %v1557 = vpop.xlane.xlu0 %1556
        %1558 = vmax.xlane.f32.xlu0 %v997
        %v1559 = vpop.xlane.xlu0 %1558
        %1560 = vmax.xlane.f32.xlu0 %v1003
        %v1561 = vpop.xlane.xlu0 %1560
        %1562 = vmax.xlane.f32.xlu0 %v1007
        %v1563 = vpop.xlane.xlu0 %1562
        %1564 = vmax.xlane.f32.xlu0 %v1013
        %v1565 = vpop.xlane.xlu0 %1564
        %1566 = vmax.xlane.f32.xlu0 %v1017
        %v1567 = vpop.xlane.xlu0 %1566
        %1568 = vmax.xlane.f32.xlu0 %v1023
        %v1569 = vpop.xlane.xlu0 %1568
        %1570 = vmax.xlane.f32.xlu0 %v1027
        %v1571 = vpop.xlane.xlu0 %1570
        %1572 = vmax.xlane.f32.xlu0 %v1033
        %v1573 = vpop.xlane.xlu0 %1572
        %1574 = vmax.xlane.f32.xlu0 %v1037
        %v1575 = vpop.xlane.xlu0 %1574
        %1576 = vmax.xlane.f32.xlu0 %v1043
        %v1577 = vpop.xlane.xlu0 %1576
        %1578 = vmax.xlane.f32.xlu0 %v1047
        %v1579 = vpop.xlane.xlu0 %1578
        %v1580 = vsub.f32 %v973, %v1549
        %v1581 = vsub.f32 %v977, %v1551
        %v1582 = vsub.f32 %v983, %v1553
        %v1583 = vsub.f32 %v987, %v1555
        %v1584 = vsub.f32 %v993, %v1557
        %v1585 = vsub.f32 %v997, %v1559
        %v1586 = vsub.f32 %v1003, %v1561
        %v1587 = vsub.f32 %v1007, %v1563
        %v1588 = vsub.f32 %v1013, %v1565
        %v1589 = vsub.f32 %v1017, %v1567
        %v1590 = vsub.f32 %v1023, %v1569
        %v1591 = vsub.f32 %v1027, %v1571
        %v1592 = vsub.f32 %v1033, %v1573
        %v1593 = vsub.f32 %v1037, %v1575
        %v1594 = vsub.f32 %v1043, %v1577
        %v1595 = vsub.f32 %v1047, %v1579
        %v1596 = vmul.f32 %v1580, 1.442695
        %v1597 = vpow.pop %v1596
        %v1598 = vmul.f32 %v1581, 1.442695
        %v1599 = vpow.pop %v1598
        %v1600 = vmul.f32 %v1582, 1.442695
        %v1601 = vpow.pop %v1600
        %v1602 = vmul.f32 %v1583, 1.442695
        %v1603 = vpow.pop %v1602
        %v1604 = vmul.f32 %v1584, 1.442695
        %v1605 = vpow.pop %v1604
        %v1606 = vmul.f32 %v1585, 1.442695
        %v1607 = vpow.pop %v1606
        %v1608 = vmul.f32 %v1586, 1.442695
        %v1609 = vpow.pop %v1608
        %v1610 = vmul.f32 %v1587, 1.442695
        %v1611 = vpow.pop %v1610
        %v1612 = vmul.f32 %v1588, 1.442695
        %v1613 = vpow.pop %v1612
        %v1614 = vmul.f32 %v1589, 1.442695
        %v1615 = vpow.pop %v1614
        %v1616 = vmul.f32 %v1590, 1.442695
        %v1617 = vpow.pop %v1616
        %v1618 = vmul.f32 %v1591, 1.442695
        %v1619 = vpow.pop %v1618
        %v1620 = vmul.f32 %v1592, 1.442695
        %v1621 = vpow.pop %v1620
        %v1622 = vmul.f32 %v1593, 1.442695
        %v1623 = vpow.pop %v1622
        %v1624 = vmul.f32 %v1594, 1.442695
        %v1625 = vpow.pop %v1624
        %v1626 = vmul.f32 %v1595, 1.442695
        %v1627 = vpow.pop %v1626
        %1628 = vadd.xlane.f32.xlu0 %v1597
        %v1629 = vpop.xlane.xlu0 %1628
        %1630 = vadd.xlane.f32.xlu0 %v1599
        %v1631 = vpop.xlane.xlu0 %1630
        %1632 = vadd.xlane.f32.xlu0 %v1601
        %v1633 = vpop.xlane.xlu0 %1632
        %1634 = vadd.xlane.f32.xlu0 %v1603
        %v1635 = vpop.xlane.xlu0 %1634
        %1636 = vadd.xlane.f32.xlu0 %v1605
        %v1637 = vpop.xlane.xlu0 %1636
        %1638 = vadd.xlane.f32.xlu0 %v1607
        %v1639 = vpop.xlane.xlu0 %1638
        %1640 = vadd.xlane.f32.xlu0 %v1609
        %v1641 = vpop.xlane.xlu0 %1640
        %1642 = vadd.xlane.f32.xlu0 %v1611
        %v1643 = vpop.xlane.xlu0 %1642
        %1644 = vadd.xlane.f32.xlu0 %v1613
        %v1645 = vpop.xlane.xlu0 %1644
        %1646 = vadd.xlane.f32.xlu0 %v1615
        %v1647 = vpop.xlane.xlu0 %1646
        %1648 = vadd.xlane.f32.xlu0 %v1617
        %v1649 = vpop.xlane.xlu0 %1648
        %1650 = vadd.xlane.f32.xlu0 %v1619
        %v1651 = vpop.xlane.xlu0 %1650
        %1652 = vadd.xlane.f32.xlu0 %v1621
        %v1653 = vpop.xlane.xlu0 %1652
        %1654 = vadd.xlane.f32.xlu0 %v1623
        %v1655 = vpop.xlane.xlu0 %1654
        %1656 = vadd.xlane.f32.xlu0 %v1625
        %v1657 = vpop.xlane.xlu0 %1656
        %1658 = vadd.xlane.f32.xlu0 %v1627
        %v1659 = vpop.xlane.xlu0 %1658
        %v1660 = vrcp.pop %v1629
        %v1661 = vrcp.pop %v1631
        %v1662 = vrcp.pop %v1633
        %v1663 = vrcp.pop %v1635
        %v1664 = vrcp.pop %v1637
        %v1665 = vrcp.pop %v1639
        %v1666 = vrcp.pop %v1641
        %v1667 = vrcp.pop %v1643
        %v1668 = vrcp.pop %v1645
        %v1669 = vrcp.pop %v1647
        %v1670 = vrcp.pop %v1649
        %v1671 = vrcp.pop %v1651
        %v1672 = vrcp.pop %v1653
        %v1673 = vrcp.pop %v1655
        %v1674 = vrcp.pop %v1657
        %v1675 = vrcp.pop %v1659
        %v1676 = vmul.f32 %v1597, %v1660
        %v1677 = vmul.f32 %v1599, %v1661
        %v1678 = vmul.f32 %v1601, %v1662
        %v1679 = vmul.f32 %v1603, %v1663
        %v1680 = vmul.f32 %v1605, %v1664
        %v1681 = vmul.f32 %v1607, %v1665
        %v1682 = vmul.f32 %v1609, %v1666
        %v1683 = vmul.f32 %v1611, %v1667
        %v1684 = vmul.f32 %v1613, %v1668
        %v1685 = vmul.f32 %v1615, %v1669
        %v1686 = vmul.f32 %v1617, %v1670
        %v1687 = vmul.f32 %v1619, %v1671
        %v1688 = vmul.f32 %v1621, %v1672
        %v1689 = vmul.f32 %v1623, %v1673
        %v1690 = vmul.f32 %v1625, %v1674
        %v1691 = vmul.f32 %v1627, %v1675
        %v1692 = vpack.c.bf16 %v1677, %v1676
        %v1693 = vpack.c.bf16 %v1679, %v1678
        %v1694 = vpack.c.bf16 %v1681, %v1680
        %v1695 = vpack.c.bf16 %v1683, %v1682
        %v1696 = vpack.c.bf16 %v1685, %v1684
        %v1697 = vpack.c.bf16 %v1687, %v1686
        %v1698 = vpack.c.bf16 %v1689, %v1688
        %v1699 = vpack.c.bf16 %v1691, %v1690
        %1700 = vst [vmem:[#allocation4 + $0x8] sm:$0xff] %v1692
        %1701 = vst [vmem:[#allocation4 + $0x48] sm:$0xff] %v1693
        %1702 = vst [vmem:[#allocation4 + $0x88] sm:$0xff] %v1694
        %1703 = vst [vmem:[#allocation4 + $0xc8] sm:$0xff] %v1695
        %1704 = vst [vmem:[#allocation4 + $0x108] sm:$0xff] %v1696
        %1705 = vst [vmem:[#allocation4 + $0x148] sm:$0xff] %v1697
        %1706 = vst [vmem:[#allocation4 + $0x188] sm:$0xff] %v1698
        %1707 = vst [vmem:[#allocation4 + $0x1c8] sm:$0xff] %v1699
        %1708 = vmax.xlane.f32.xlu0 %v1084
        %v1709 = vpop.xlane.xlu0 %1708
        %1710 = vmax.xlane.f32.xlu0 %v1088
        %v1711 = vpop.xlane.xlu0 %1710
        %1712 = vmax.xlane.f32.xlu0 %v1094
        %v1713 = vpop.xlane.xlu0 %1712
        %1714 = vmax.xlane.f32.xlu0 %v1098
        %v1715 = vpop.xlane.xlu0 %1714
        %1716 = vmax.xlane.f32.xlu0 %v1104
        %v1717 = vpop.xlane.xlu0 %1716
        %1718 = vmax.xlane.f32.xlu0 %v1108
        %v1719 = vpop.xlane.xlu0 %1718
        %1720 = vmax.xlane.f32.xlu0 %v1114
        %v1721 = vpop.xlane.xlu0 %1720
        %1722 = vmax.xlane.f32.xlu0 %v1118
        %v1723 = vpop.xlane.xlu0 %1722
        %1724 = vmax.xlane.f32.xlu0 %v1124
        %v1725 = vpop.xlane.xlu0 %1724
        %1726 = vmax.xlane.f32.xlu0 %v1128
        %v1727 = vpop.xlane.xlu0 %1726
        %1728 = vmax.xlane.f32.xlu0 %v1134
        %v1729 = vpop.xlane.xlu0 %1728
        %1730 = vmax.xlane.f32.xlu0 %v1138
        %v1731 = vpop.xlane.xlu0 %1730
        %1732 = vmax.xlane.f32.xlu0 %v1144
        %v1733 = vpop.xlane.xlu0 %1732
        %1734 = vmax.xlane.f32.xlu0 %v1148
        %v1735 = vpop.xlane.xlu0 %1734
        %1736 = vmax.xlane.f32.xlu0 %v1154
        %v1737 = vpop.xlane.xlu0 %1736
        %1738 = vmax.xlane.f32.xlu0 %v1158
        %v1739 = vpop.xlane.xlu0 %1738
        %v1740 = vsub.f32 %v1084, %v1709
        %v1741 = vsub.f32 %v1088, %v1711
        %v1742 = vsub.f32 %v1094, %v1713
        %v1743 = vsub.f32 %v1098, %v1715
        %v1744 = vsub.f32 %v1104, %v1717
        %v1745 = vsub.f32 %v1108, %v1719
        %v1746 = vsub.f32 %v1114, %v1721
        %v1747 = vsub.f32 %v1118, %v1723
        %v1748 = vsub.f32 %v1124, %v1725
        %v1749 = vsub.f32 %v1128, %v1727
        %v1750 = vsub.f32 %v1134, %v1729
        %v1751 = vsub.f32 %v1138, %v1731
        %v1752 = vsub.f32 %v1144, %v1733
        %v1753 = vsub.f32 %v1148, %v1735
        %v1754 = vsub.f32 %v1154, %v1737
        %v1755 = vsub.f32 %v1158, %v1739
        %v1756 = vmul.f32 %v1740, 1.442695
        %v1757 = vpow.pop %v1756
        %v1758 = vmul.f32 %v1741, 1.442695
        %v1759 = vpow.pop %v1758
        %v1760 = vmul.f32 %v1742, 1.442695
        %v1761 = vpow.pop %v1760
        %v1762 = vmul.f32 %v1743, 1.442695
        %v1763 = vpow.pop %v1762
        %v1764 = vmul.f32 %v1744, 1.442695
        %v1765 = vpow.pop %v1764
        %v1766 = vmul.f32 %v1745, 1.442695
        %v1767 = vpow.pop %v1766
        %v1768 = vmul.f32 %v1746, 1.442695
        %v1769 = vpow.pop %v1768
        %v1770 = vmul.f32 %v1747, 1.442695
        %v1771 = vpow.pop %v1770
        %v1772 = vmul.f32 %v1748, 1.442695
        %v1773 = vpow.pop %v1772
        %v1774 = vmul.f32 %v1749, 1.442695
        %v1775 = vpow.pop %v1774
        %v1776 = vmul.f32 %v1750, 1.442695
        %v1777 = vpow.pop %v1776
        %v1778 = vmul.f32 %v1751, 1.442695
        %v1779 = vpow.pop %v1778
        %v1780 = vmul.f32 %v1752, 1.442695
        %v1781 = vpow.pop %v1780
        %v1782 = vmul.f32 %v1753, 1.442695
        %v1783 = vpow.pop %v1782
        %v1784 = vmul.f32 %v1754, 1.442695
        %v1785 = vpow.pop %v1784
        %v1786 = vmul.f32 %v1755, 1.442695
        %v1787 = vpow.pop %v1786
        %1788 = vadd.xlane.f32.xlu0 %v1757
        %v1789 = vpop.xlane.xlu0 %1788
        %1790 = vadd.xlane.f32.xlu0 %v1759
        %v1791 = vpop.xlane.xlu0 %1790
        %1792 = vadd.xlane.f32.xlu0 %v1761
        %v1793 = vpop.xlane.xlu0 %1792
        %1794 = vadd.xlane.f32.xlu0 %v1763
        %v1795 = vpop.xlane.xlu0 %1794
        %1796 = vadd.xlane.f32.xlu0 %v1765
        %v1797 = vpop.xlane.xlu0 %1796
        %1798 = vadd.xlane.f32.xlu0 %v1767
        %v1799 = vpop.xlane.xlu0 %1798
        %1800 = vadd.xlane.f32.xlu0 %v1769
        %v1801 = vpop.xlane.xlu0 %1800
        %1802 = vadd.xlane.f32.xlu0 %v1771
        %v1803 = vpop.xlane.xlu0 %1802
        %1804 = vadd.xlane.f32.xlu0 %v1773
        %v1805 = vpop.xlane.xlu0 %1804
        %1806 = vadd.xlane.f32.xlu0 %v1775
        %v1807 = vpop.xlane.xlu0 %1806
        %1808 = vadd.xlane.f32.xlu0 %v1777
        %v1809 = vpop.xlane.xlu0 %1808
        %1810 = vadd.xlane.f32.xlu0 %v1779
        %v1811 = vpop.xlane.xlu0 %1810
        %1812 = vadd.xlane.f32.xlu0 %v1781
        %v1813 = vpop.xlane.xlu0 %1812
        %1814 = vadd.xlane.f32.xlu0 %v1783
        %v1815 = vpop.xlane.xlu0 %1814
        %1816 = vadd.xlane.f32.xlu0 %v1785
        %v1817 = vpop.xlane.xlu0 %1816
        %1818 = vadd.xlane.f32.xlu0 %v1787
        %v1819 = vpop.xlane.xlu0 %1818
        %v1820 = vrcp.pop %v1789
        %v1821 = vrcp.pop %v1791
        %v1822 = vrcp.pop %v1793
        %v1823 = vrcp.pop %v1795
        %v1824 = vrcp.pop %v1797
        %v1825 = vrcp.pop %v1799
        %v1826 = vrcp.pop %v1801
        %v1827 = vrcp.pop %v1803
        %v1828 = vrcp.pop %v1805
        %v1829 = vrcp.pop %v1807
        %v1830 = vrcp.pop %v1809
        %v1831 = vrcp.pop %v1811
        %v1832 = vrcp.pop %v1813
        %v1833 = vrcp.pop %v1815
        %v1834 = vrcp.pop %v1817
        %v1835 = vrcp.pop %v1819
        %v1836 = vmul.f32 %v1757, %v1820
        %v1837 = vmul.f32 %v1759, %v1821
        %v1838 = vmul.f32 %v1761, %v1822
        %v1839 = vmul.f32 %v1763, %v1823
        %v1840 = vmul.f32 %v1765, %v1824
        %v1841 = vmul.f32 %v1767, %v1825
        %v1842 = vmul.f32 %v1769, %v1826
        %v1843 = vmul.f32 %v1771, %v1827
        %v1844 = vmul.f32 %v1773, %v1828
        %v1845 = vmul.f32 %v1775, %v1829
        %v1846 = vmul.f32 %v1777, %v1830
        %v1847 = vmul.f32 %v1779, %v1831
        %v1848 = vmul.f32 %v1781, %v1832
        %v1849 = vmul.f32 %v1783, %v1833
        %v1850 = vmul.f32 %v1785, %v1834
        %v1851 = vmul.f32 %v1787, %v1835
        %v1852 = vpack.c.bf16 %v1837, %v1836
        %v1853 = vpack.c.bf16 %v1839, %v1838
        %v1854 = vpack.c.bf16 %v1841, %v1840
        %v1855 = vpack.c.bf16 %v1843, %v1842
        %v1856 = vpack.c.bf16 %v1845, %v1844
        %v1857 = vpack.c.bf16 %v1847, %v1846
        %v1858 = vpack.c.bf16 %v1849, %v1848
        %v1859 = vpack.c.bf16 %v1851, %v1850
        %1860 = vst [vmem:[#allocation4 + $0x10] sm:$0xff] %v1852
        %1861 = vst [vmem:[#allocation4 + $0x50] sm:$0xff] %v1853
        %1862 = vst [vmem:[#allocation4 + $0x90] sm:$0xff] %v1854
        %1863 = vst [vmem:[#allocation4 + $0xd0] sm:$0xff] %v1855
        %1864 = vst [vmem:[#allocation4 + $0x110] sm:$0xff] %v1856
        %1865 = vst [vmem:[#allocation4 + $0x150] sm:$0xff] %v1857
        %1866 = vst [vmem:[#allocation4 + $0x190] sm:$0xff] %v1858
        %1867 = vst [vmem:[#allocation4 + $0x1d0] sm:$0xff] %v1859
        %1868 = vmax.xlane.f32.xlu0 %v1086
        %v1869 = vpop.xlane.xlu0 %1868
        %1870 = vmax.xlane.f32.xlu0 %v1090
        %v1871 = vpop.xlane.xlu0 %1870
        %1872 = vmax.xlane.f32.xlu0 %v1096
        %v1873 = vpop.xlane.xlu0 %1872
        %1874 = vmax.xlane.f32.xlu0 %v1100
        %v1875 = vpop.xlane.xlu0 %1874
        %1876 = vmax.xlane.f32.xlu0 %v1106
        %v1877 = vpop.xlane.xlu0 %1876
        %1878 = vmax.xlane.f32.xlu0 %v1110
        %v1879 = vpop.xlane.xlu0 %1878
        %1880 = vmax.xlane.f32.xlu0 %v1116
        %v1881 = vpop.xlane.xlu0 %1880
        %1882 = vmax.xlane.f32.xlu0 %v1120
        %v1883 = vpop.xlane.xlu0 %1882
        %1884 = vmax.xlane.f32.xlu0 %v1126
        %v1885 = vpop.xlane.xlu0 %1884
        %1886 = vmax.xlane.f32.xlu0 %v1130
        %v1887 = vpop.xlane.xlu0 %1886
        %1888 = vmax.xlane.f32.xlu0 %v1136
        %v1889 = vpop.xlane.xlu0 %1888
        %1890 = vmax.xlane.f32.xlu0 %v1140
        %v1891 = vpop.xlane.xlu0 %1890
        %1892 = vmax.xlane.f32.xlu0 %v1146
        %v1893 = vpop.xlane.xlu0 %1892
        %1894 = vmax.xlane.f32.xlu0 %v1150
        %v1895 = vpop.xlane.xlu0 %1894
        %1896 = vmax.xlane.f32.xlu0 %v1156
        %v1897 = vpop.xlane.xlu0 %1896
        %1898 = vmax.xlane.f32.xlu0 %v1160
        %v1899 = vpop.xlane.xlu0 %1898
        %v1900 = vsub.f32 %v1086, %v1869
        %v1901 = vsub.f32 %v1090, %v1871
        %v1902 = vsub.f32 %v1096, %v1873
        %v1903 = vsub.f32 %v1100, %v1875
        %v1904 = vsub.f32 %v1106, %v1877
        %v1905 = vsub.f32 %v1110, %v1879
        %v1906 = vsub.f32 %v1116, %v1881
        %v1907 = vsub.f32 %v1120, %v1883
        %v1908 = vsub.f32 %v1126, %v1885
        %v1909 = vsub.f32 %v1130, %v1887
        %v1910 = vsub.f32 %v1136, %v1889
        %v1911 = vsub.f32 %v1140, %v1891
        %v1912 = vsub.f32 %v1146, %v1893
        %v1913 = vsub.f32 %v1150, %v1895
        %v1914 = vsub.f32 %v1156, %v1897
        %v1915 = vsub.f32 %v1160, %v1899
        %v1916 = vmul.f32 %v1900, 1.442695
        %v1917 = vpow.pop %v1916
        %v1918 = vmul.f32 %v1901, 1.442695
        %v1919 = vpow.pop %v1918
        %v1920 = vmul.f32 %v1902, 1.442695
        %v1921 = vpow.pop %v1920
        %v1922 = vmul.f32 %v1903, 1.442695
        %v1923 = vpow.pop %v1922
        %v1924 = vmul.f32 %v1904, 1.442695
        %v1925 = vpow.pop %v1924
        %v1926 = vmul.f32 %v1905, 1.442695
        %v1927 = vpow.pop %v1926
        %v1928 = vmul.f32 %v1906, 1.442695
        %v1929 = vpow.pop %v1928
        %v1930 = vmul.f32 %v1907, 1.442695
        %v1931 = vpow.pop %v1930
        %v1932 = vmul.f32 %v1908, 1.442695
        %v1933 = vpow.pop %v1932
        %v1934 = vmul.f32 %v1909, 1.442695
        %v1935 = vpow.pop %v1934
        %v1936 = vmul.f32 %v1910, 1.442695
        %v1937 = vpow.pop %v1936
        %v1938 = vmul.f32 %v1911, 1.442695
        %v1939 = vpow.pop %v1938
        %v1940 = vmul.f32 %v1912, 1.442695
        %v1941 = vpow.pop %v1940
        %v1942 = vmul.f32 %v1913, 1.442695
        %v1943 = vpow.pop %v1942
        %v1944 = vmul.f32 %v1914, 1.442695
        %v1945 = vpow.pop %v1944
        %v1946 = vmul.f32 %v1915, 1.442695
        %v1947 = vpow.pop %v1946
        %1948 = vadd.xlane.f32.xlu0 %v1917
        %v1949 = vpop.xlane.xlu0 %1948
        %1950 = vadd.xlane.f32.xlu0 %v1919
        %v1951 = vpop.xlane.xlu0 %1950
        %1952 = vadd.xlane.f32.xlu0 %v1921
        %v1953 = vpop.xlane.xlu0 %1952
        %1954 = vadd.xlane.f32.xlu0 %v1923
        %v1955 = vpop.xlane.xlu0 %1954
        %1956 = vadd.xlane.f32.xlu0 %v1925
        %v1957 = vpop.xlane.xlu0 %1956
        %1958 = vadd.xlane.f32.xlu0 %v1927
        %v1959 = vpop.xlane.xlu0 %1958
        %1960 = vadd.xlane.f32.xlu0 %v1929
        %v1961 = vpop.xlane.xlu0 %1960
        %1962 = vadd.xlane.f32.xlu0 %v1931
        %v1963 = vpop.xlane.xlu0 %1962
        %1964 = vadd.xlane.f32.xlu0 %v1933
        %v1965 = vpop.xlane.xlu0 %1964
        %1966 = vadd.xlane.f32.xlu0 %v1935
        %v1967 = vpop.xlane.xlu0 %1966
        %1968 = vadd.xlane.f32.xlu0 %v1937
        %v1969 = vpop.xlane.xlu0 %1968
        %1970 = vadd.xlane.f32.xlu0 %v1939
        %v1971 = vpop.xlane.xlu0 %1970
        %1972 = vadd.xlane.f32.xlu0 %v1941
        %v1973 = vpop.xlane.xlu0 %1972
        %1974 = vadd.xlane.f32.xlu0 %v1943
        %v1975 = vpop.xlane.xlu0 %1974
        %1976 = vadd.xlane.f32.xlu0 %v1945
        %v1977 = vpop.xlane.xlu0 %1976
        %1978 = vadd.xlane.f32.xlu0 %v1947
        %v1979 = vpop.xlane.xlu0 %1978
        %v1980 = vrcp.pop %v1949
        %v1981 = vrcp.pop %v1951
        %v1982 = vrcp.pop %v1953
        %v1983 = vrcp.pop %v1955
        %v1984 = vrcp.pop %v1957
        %v1985 = vrcp.pop %v1959
        %v1986 = vrcp.pop %v1961
        %v1987 = vrcp.pop %v1963
        %v1988 = vrcp.pop %v1965
        %v1989 = vrcp.pop %v1967
        %v1990 = vrcp.pop %v1969
        %v1991 = vrcp.pop %v1971
        %v1992 = vrcp.pop %v1973
        %v1993 = vrcp.pop %v1975
        %v1994 = vrcp.pop %v1977
        %v1995 = vrcp.pop %v1979
        %v1996 = vmul.f32 %v1917, %v1980
        %v1997 = vmul.f32 %v1919, %v1981
        %v1998 = vmul.f32 %v1921, %v1982
        %v1999 = vmul.f32 %v1923, %v1983
        %v2000 = vmul.f32 %v1925, %v1984
        %v2001 = vmul.f32 %v1927, %v1985
        %v2002 = vmul.f32 %v1929, %v1986
        %v2003 = vmul.f32 %v1931, %v1987
        %v2004 = vmul.f32 %v1933, %v1988
        %v2005 = vmul.f32 %v1935, %v1989
        %v2006 = vmul.f32 %v1937, %v1990
        %v2007 = vmul.f32 %v1939, %v1991
        %v2008 = vmul.f32 %v1941, %v1992
        %v2009 = vmul.f32 %v1943, %v1993
        %v2010 = vmul.f32 %v1945, %v1994
        %v2011 = vmul.f32 %v1947, %v1995
        %v2012 = vpack.c.bf16 %v1997, %v1996
        %v2013 = vpack.c.bf16 %v1999, %v1998
        %v2014 = vpack.c.bf16 %v2001, %v2000
        %v2015 = vpack.c.bf16 %v2003, %v2002
        %v2016 = vpack.c.bf16 %v2005, %v2004
        %v2017 = vpack.c.bf16 %v2007, %v2006
        %v2018 = vpack.c.bf16 %v2009, %v2008
        %v2019 = vpack.c.bf16 %v2011, %v2010
        %2020 = vst [vmem:[#allocation4 + $0x18] sm:$0xff] %v2012
        %2021 = vst [vmem:[#allocation4 + $0x58] sm:$0xff] %v2013
        %2022 = vst [vmem:[#allocation4 + $0x98] sm:$0xff] %v2014
        %2023 = vst [vmem:[#allocation4 + $0xd8] sm:$0xff] %v2015
        %2024 = vst [vmem:[#allocation4 + $0x118] sm:$0xff] %v2016
        %2025 = vst [vmem:[#allocation4 + $0x158] sm:$0xff] %v2017
        %2026 = vst [vmem:[#allocation4 + $0x198] sm:$0xff] %v2018
        %2027 = vst [vmem:[#allocation4 + $0x1d8] sm:$0xff] %v2019
        %2028 = vmax.xlane.f32.xlu0 %v1197
        %v2029 = vpop.xlane.xlu0 %2028
        %2030 = vmax.xlane.f32.xlu0 %v1201
        %v2031 = vpop.xlane.xlu0 %2030
        %2032 = vmax.xlane.f32.xlu0 %v1207
        %v2033 = vpop.xlane.xlu0 %2032
        %2034 = vmax.xlane.f32.xlu0 %v1211
        %v2035 = vpop.xlane.xlu0 %2034
        %2036 = vmax.xlane.f32.xlu0 %v1217
        %v2037 = vpop.xlane.xlu0 %2036
        %2038 = vmax.xlane.f32.xlu0 %v1221
        %v2039 = vpop.xlane.xlu0 %2038
        %2040 = vmax.xlane.f32.xlu0 %v1227
        %v2041 = vpop.xlane.xlu0 %2040
        %2042 = vmax.xlane.f32.xlu0 %v1231
        %v2043 = vpop.xlane.xlu0 %2042
        %2044 = vmax.xlane.f32.xlu0 %v1237
        %v2045 = vpop.xlane.xlu0 %2044
        %2046 = vmax.xlane.f32.xlu0 %v1241
        %v2047 = vpop.xlane.xlu0 %2046
        %2048 = vmax.xlane.f32.xlu0 %v1247
        %v2049 = vpop.xlane.xlu0 %2048
        %2050 = vmax.xlane.f32.xlu0 %v1251
        %v2051 = vpop.xlane.xlu0 %2050
        %2052 = vmax.xlane.f32.xlu0 %v1257
        %v2053 = vpop.xlane.xlu0 %2052
        %2054 = vmax.xlane.f32.xlu0 %v1261
        %v2055 = vpop.xlane.xlu0 %2054
        %2056 = vmax.xlane.f32.xlu0 %v1267
        %v2057 = vpop.xlane.xlu0 %2056
        %2058 = vmax.xlane.f32.xlu0 %v1271
        %v2059 = vpop.xlane.xlu0 %2058
        %v2060 = vsub.f32 %v1197, %v2029
        %v2061 = vsub.f32 %v1201, %v2031
        %v2062 = vsub.f32 %v1207, %v2033
        %v2063 = vsub.f32 %v1211, %v2035
        %v2064 = vsub.f32 %v1217, %v2037
        %v2065 = vsub.f32 %v1221, %v2039
        %v2066 = vsub.f32 %v1227, %v2041
        %v2067 = vsub.f32 %v1231, %v2043
        %v2068 = vsub.f32 %v1237, %v2045
        %v2069 = vsub.f32 %v1241, %v2047
        %v2070 = vsub.f32 %v1247, %v2049
        %v2071 = vsub.f32 %v1251, %v2051
        %v2072 = vsub.f32 %v1257, %v2053
        %v2073 = vsub.f32 %v1261, %v2055
        %v2074 = vsub.f32 %v1267, %v2057
        %v2075 = vsub.f32 %v1271, %v2059
        %v2076 = vmul.f32 %v2060, 1.442695
        %v2077 = vpow.pop %v2076
        %v2078 = vmul.f32 %v2061, 1.442695
        %v2079 = vpow.pop %v2078
        %v2080 = vmul.f32 %v2062, 1.442695
        %v2081 = vpow.pop %v2080
        %v2082 = vmul.f32 %v2063, 1.442695
        %v2083 = vpow.pop %v2082
        %v2084 = vmul.f32 %v2064, 1.442695
        %v2085 = vpow.pop %v2084
        %v2086 = vmul.f32 %v2065, 1.442695
        %v2087 = vpow.pop %v2086
        %v2088 = vmul.f32 %v2066, 1.442695
        %v2089 = vpow.pop %v2088
        %v2090 = vmul.f32 %v2067, 1.442695
        %v2091 = vpow.pop %v2090
        %v2092 = vmul.f32 %v2068, 1.442695
        %v2093 = vpow.pop %v2092
        %v2094 = vmul.f32 %v2069, 1.442695
        %v2095 = vpow.pop %v2094
        %v2096 = vmul.f32 %v2070, 1.442695
        %v2097 = vpow.pop %v2096
        %v2098 = vmul.f32 %v2071, 1.442695
        %v2099 = vpow.pop %v2098
        %v2100 = vmul.f32 %v2072, 1.442695
        %v2101 = vpow.pop %v2100
        %v2102 = vmul.f32 %v2073, 1.442695
        %v2103 = vpow.pop %v2102
        %v2104 = vmul.f32 %v2074, 1.442695
        %v2105 = vpow.pop %v2104
        %v2106 = vmul.f32 %v2075, 1.442695
        %v2107 = vpow.pop %v2106
        %2108 = vadd.xlane.f32.xlu0 %v2077
        %v2109 = vpop.xlane.xlu0 %2108
        %2110 = vadd.xlane.f32.xlu0 %v2079
        %v2111 = vpop.xlane.xlu0 %2110
        %2112 = vadd.xlane.f32.xlu0 %v2081
        %v2113 = vpop.xlane.xlu0 %2112
        %2114 = vadd.xlane.f32.xlu0 %v2083
        %v2115 = vpop.xlane.xlu0 %2114
        %2116 = vadd.xlane.f32.xlu0 %v2085
        %v2117 = vpop.xlane.xlu0 %2116
        %2118 = vadd.xlane.f32.xlu0 %v2087
        %v2119 = vpop.xlane.xlu0 %2118
        %2120 = vadd.xlane.f32.xlu0 %v2089
        %v2121 = vpop.xlane.xlu0 %2120
        %2122 = vadd.xlane.f32.xlu0 %v2091
        %v2123 = vpop.xlane.xlu0 %2122
        %2124 = vadd.xlane.f32.xlu0 %v2093
        %v2125 = vpop.xlane.xlu0 %2124
        %2126 = vadd.xlane.f32.xlu0 %v2095
        %v2127 = vpop.xlane.xlu0 %2126
        %2128 = vadd.xlane.f32.xlu0 %v2097
        %v2129 = vpop.xlane.xlu0 %2128
        %2130 = vadd.xlane.f32.xlu0 %v2099
        %v2131 = vpop.xlane.xlu0 %2130
        %2132 = vadd.xlane.f32.xlu0 %v2101
        %v2133 = vpop.xlane.xlu0 %2132
        %2134 = vadd.xlane.f32.xlu0 %v2103
        %v2135 = vpop.xlane.xlu0 %2134
        %2136 = vadd.xlane.f32.xlu0 %v2105
        %v2137 = vpop.xlane.xlu0 %2136
        %2138 = vadd.xlane.f32.xlu0 %v2107
        %v2139 = vpop.xlane.xlu0 %2138
        %v2140 = vrcp.pop %v2109
        %v2141 = vrcp.pop %v2111
        %v2142 = vrcp.pop %v2113
        %v2143 = vrcp.pop %v2115
        %v2144 = vrcp.pop %v2117
        %v2145 = vrcp.pop %v2119
        %v2146 = vrcp.pop %v2121
        %v2147 = vrcp.pop %v2123
        %v2148 = vrcp.pop %v2125
        %v2149 = vrcp.pop %v2127
        %v2150 = vrcp.pop %v2129
        %v2151 = vrcp.pop %v2131
        %v2152 = vrcp.pop %v2133
        %v2153 = vrcp.pop %v2135
        %v2154 = vrcp.pop %v2137
        %v2155 = vrcp.pop %v2139
        %v2156 = vmul.f32 %v2077, %v2140
        %v2157 = vmul.f32 %v2079, %v2141
        %v2158 = vmul.f32 %v2081, %v2142
        %v2159 = vmul.f32 %v2083, %v2143
        %v2160 = vmul.f32 %v2085, %v2144
        %v2161 = vmul.f32 %v2087, %v2145
        %v2162 = vmul.f32 %v2089, %v2146
        %v2163 = vmul.f32 %v2091, %v2147
        %v2164 = vmul.f32 %v2093, %v2148
        %v2165 = vmul.f32 %v2095, %v2149
        %v2166 = vmul.f32 %v2097, %v2150
        %v2167 = vmul.f32 %v2099, %v2151
        %v2168 = vmul.f32 %v2101, %v2152
        %v2169 = vmul.f32 %v2103, %v2153
        %v2170 = vmul.f32 %v2105, %v2154
        %v2171 = vmul.f32 %v2107, %v2155
        %v2172 = vpack.c.bf16 %v2157, %v2156
        %v2173 = vpack.c.bf16 %v2159, %v2158
        %v2174 = vpack.c.bf16 %v2161, %v2160
        %v2175 = vpack.c.bf16 %v2163, %v2162
        %v2176 = vpack.c.bf16 %v2165, %v2164
        %v2177 = vpack.c.bf16 %v2167, %v2166
        %v2178 = vpack.c.bf16 %v2169, %v2168
        %v2179 = vpack.c.bf16 %v2171, %v2170
        %2180 = vst [vmem:[#allocation4 + $0x20] sm:$0xff] %v2172
        %2181 = vst [vmem:[#allocation4 + $0x60] sm:$0xff] %v2173
        %2182 = vst [vmem:[#allocation4 + $0xa0] sm:$0xff] %v2174
        %2183 = vst [vmem:[#allocation4 + $0xe0] sm:$0xff] %v2175
        %2184 = vst [vmem:[#allocation4 + $0x120] sm:$0xff] %v2176
        %2185 = vst [vmem:[#allocation4 + $0x160] sm:$0xff] %v2177
        %2186 = vst [vmem:[#allocation4 + $0x1a0] sm:$0xff] %v2178
        %2187 = vst [vmem:[#allocation4 + $0x1e0] sm:$0xff] %v2179
        %2188 = vmax.xlane.f32.xlu0 %v1199
        %v2189 = vpop.xlane.xlu0 %2188
        %2190 = vmax.xlane.f32.xlu0 %v1203
        %v2191 = vpop.xlane.xlu0 %2190
        %2192 = vmax.xlane.f32.xlu0 %v1209
        %v2193 = vpop.xlane.xlu0 %2192
        %2194 = vmax.xlane.f32.xlu0 %v1213
        %v2195 = vpop.xlane.xlu0 %2194
        %2196 = vmax.xlane.f32.xlu0 %v1219
        %v2197 = vpop.xlane.xlu0 %2196
        %2198 = vmax.xlane.f32.xlu0 %v1223
        %v2199 = vpop.xlane.xlu0 %2198
        %2200 = vmax.xlane.f32.xlu0 %v1229
        %v2201 = vpop.xlane.xlu0 %2200
        %2202 = vmax.xlane.f32.xlu0 %v1233
        %v2203 = vpop.xlane.xlu0 %2202
        %2204 = vmax.xlane.f32.xlu0 %v1239
        %v2205 = vpop.xlane.xlu0 %2204
        %2206 = vmax.xlane.f32.xlu0 %v1243
        %v2207 = vpop.xlane.xlu0 %2206
        %2208 = vmax.xlane.f32.xlu0 %v1249
        %v2209 = vpop.xlane.xlu0 %2208
        %2210 = vmax.xlane.f32.xlu0 %v1253
        %v2211 = vpop.xlane.xlu0 %2210
        %2212 = vmax.xlane.f32.xlu0 %v1259
        %v2213 = vpop.xlane.xlu0 %2212
        %2214 = vmax.xlane.f32.xlu0 %v1263
        %v2215 = vpop.xlane.xlu0 %2214
        %2216 = vmax.xlane.f32.xlu0 %v1269
        %v2217 = vpop.xlane.xlu0 %2216
        %2218 = vmax.xlane.f32.xlu0 %v1273
        %v2219 = vpop.xlane.xlu0 %2218
        %v2220 = vsub.f32 %v1199, %v2189
        %v2221 = vsub.f32 %v1203, %v2191
        %v2222 = vsub.f32 %v1209, %v2193
        %v2223 = vsub.f32 %v1213, %v2195
        %v2224 = vsub.f32 %v1219, %v2197
        %v2225 = vsub.f32 %v1223, %v2199
        %v2226 = vsub.f32 %v1229, %v2201
        %v2227 = vsub.f32 %v1233, %v2203
        %v2228 = vsub.f32 %v1239, %v2205
        %v2229 = vsub.f32 %v1243, %v2207
        %v2230 = vsub.f32 %v1249, %v2209
        %v2231 = vsub.f32 %v1253, %v2211
        %v2232 = vsub.f32 %v1259, %v2213
        %v2233 = vsub.f32 %v1263, %v2215
        %v2234 = vsub.f32 %v1269, %v2217
        %v2235 = vsub.f32 %v1273, %v2219
        %v2236 = vmul.f32 %v2220, 1.442695
        %v2237 = vpow.pop %v2236
        %v2238 = vmul.f32 %v2221, 1.442695
        %v2239 = vpow.pop %v2238
        %v2240 = vmul.f32 %v2222, 1.442695
        %v2241 = vpow.pop %v2240
        %v2242 = vmul.f32 %v2223, 1.442695
        %v2243 = vpow.pop %v2242
        %v2244 = vmul.f32 %v2224, 1.442695
        %v2245 = vpow.pop %v2244
        %v2246 = vmul.f32 %v2225, 1.442695
        %v2247 = vpow.pop %v2246
        %v2248 = vmul.f32 %v2226, 1.442695
        %v2249 = vpow.pop %v2248
        %v2250 = vmul.f32 %v2227, 1.442695
        %v2251 = vpow.pop %v2250
        %v2252 = vmul.f32 %v2228, 1.442695
        %v2253 = vpow.pop %v2252
        %v2254 = vmul.f32 %v2229, 1.442695
        %v2255 = vpow.pop %v2254
        %v2256 = vmul.f32 %v2230, 1.442695
        %v2257 = vpow.pop %v2256
        %v2258 = vmul.f32 %v2231, 1.442695
        %v2259 = vpow.pop %v2258
        %v2260 = vmul.f32 %v2232, 1.442695
        %v2261 = vpow.pop %v2260
        %v2262 = vmul.f32 %v2233, 1.442695
        %v2263 = vpow.pop %v2262
        %v2264 = vmul.f32 %v2234, 1.442695
        %v2265 = vpow.pop %v2264
        %v2266 = vmul.f32 %v2235, 1.442695
        %v2267 = vpow.pop %v2266
        %2268 = vadd.xlane.f32.xlu0 %v2237
        %v2269 = vpop.xlane.xlu0 %2268
        %2270 = vadd.xlane.f32.xlu0 %v2239
        %v2271 = vpop.xlane.xlu0 %2270
        %2272 = vadd.xlane.f32.xlu0 %v2241
        %v2273 = vpop.xlane.xlu0 %2272
        %2274 = vadd.xlane.f32.xlu0 %v2243
        %v2275 = vpop.xlane.xlu0 %2274
        %2276 = vadd.xlane.f32.xlu0 %v2245
        %v2277 = vpop.xlane.xlu0 %2276
        %2278 = vadd.xlane.f32.xlu0 %v2247
        %v2279 = vpop.xlane.xlu0 %2278
        %2280 = vadd.xlane.f32.xlu0 %v2249
        %v2281 = vpop.xlane.xlu0 %2280
        %2282 = vadd.xlane.f32.xlu0 %v2251
        %v2283 = vpop.xlane.xlu0 %2282
        %2284 = vadd.xlane.f32.xlu0 %v2253
        %v2285 = vpop.xlane.xlu0 %2284
        %2286 = vadd.xlane.f32.xlu0 %v2255
        %v2287 = vpop.xlane.xlu0 %2286
        %2288 = vadd.xlane.f32.xlu0 %v2257
        %v2289 = vpop.xlane.xlu0 %2288
        %2290 = vadd.xlane.f32.xlu0 %v2259
        %v2291 = vpop.xlane.xlu0 %2290
        %2292 = vadd.xlane.f32.xlu0 %v2261
        %v2293 = vpop.xlane.xlu0 %2292
        %2294 = vadd.xlane.f32.xlu0 %v2263
        %v2295 = vpop.xlane.xlu0 %2294
        %2296 = vadd.xlane.f32.xlu0 %v2265
        %v2297 = vpop.xlane.xlu0 %2296
        %2298 = vadd.xlane.f32.xlu0 %v2267
        %v2299 = vpop.xlane.xlu0 %2298
        %v2300 = vrcp.pop %v2269
        %v2301 = vrcp.pop %v2271
        %v2302 = vrcp.pop %v2273
        %v2303 = vrcp.pop %v2275
        %v2304 = vrcp.pop %v2277
        %v2305 = vrcp.pop %v2279
        %v2306 = vrcp.pop %v2281
        %v2307 = vrcp.pop %v2283
        %v2308 = vrcp.pop %v2285
        %v2309 = vrcp.pop %v2287
        %v2310 = vrcp.pop %v2289
        %v2311 = vrcp.pop %v2291
        %v2312 = vrcp.pop %v2293
        %v2313 = vrcp.pop %v2295
        %v2314 = vrcp.pop %v2297
        %v2315 = vrcp.pop %v2299
        %v2316 = vmul.f32 %v2237, %v2300
        %v2317 = vmul.f32 %v2239, %v2301
        %v2318 = vmul.f32 %v2241, %v2302
        %v2319 = vmul.f32 %v2243, %v2303
        %v2320 = vmul.f32 %v2245, %v2304
        %v2321 = vmul.f32 %v2247, %v2305
        %v2322 = vmul.f32 %v2249, %v2306
        %v2323 = vmul.f32 %v2251, %v2307
        %v2324 = vmul.f32 %v2253, %v2308
        %v2325 = vmul.f32 %v2255, %v2309
        %v2326 = vmul.f32 %v2257, %v2310
        %v2327 = vmul.f32 %v2259, %v2311
        %v2328 = vmul.f32 %v2261, %v2312
        %v2329 = vmul.f32 %v2263, %v2313
        %v2330 = vmul.f32 %v2265, %v2314
        %v2331 = vmul.f32 %v2267, %v2315
        %v2332 = vpack.c.bf16 %v2317, %v2316
        %v2333 = vpack.c.bf16 %v2319, %v2318
        %v2334 = vpack.c.bf16 %v2321, %v2320
        %v2335 = vpack.c.bf16 %v2323, %v2322
        %v2336 = vpack.c.bf16 %v2325, %v2324
        %v2337 = vpack.c.bf16 %v2327, %v2326
        %v2338 = vpack.c.bf16 %v2329, %v2328
        %v2339 = vpack.c.bf16 %v2331, %v2330
        %2340 = vst [vmem:[#allocation4 + $0x28] sm:$0xff] %v2332
        %2341 = vst [vmem:[#allocation4 + $0x68] sm:$0xff] %v2333
        %2342 = vst [vmem:[#allocation4 + $0xa8] sm:$0xff] %v2334
        %2343 = vst [vmem:[#allocation4 + $0xe8] sm:$0xff] %v2335
        %2344 = vst [vmem:[#allocation4 + $0x128] sm:$0xff] %v2336
        %2345 = vst [vmem:[#allocation4 + $0x168] sm:$0xff] %v2337
        %2346 = vst [vmem:[#allocation4 + $0x1a8] sm:$0xff] %v2338
        %2347 = vst [vmem:[#allocation4 + $0x1e8] sm:$0xff] %v2339
        %2348 = vmax.xlane.f32.xlu0 %v1310
        %v2349 = vpop.xlane.xlu0 %2348
        %2350 = vmax.xlane.f32.xlu0 %v1314
        %v2351 = vpop.xlane.xlu0 %2350
        %2352 = vmax.xlane.f32.xlu0 %v1320
        %v2353 = vpop.xlane.xlu0 %2352
        %2354 = vmax.xlane.f32.xlu0 %v1324
        %v2355 = vpop.xlane.xlu0 %2354
        %2356 = vmax.xlane.f32.xlu0 %v1330
        %v2357 = vpop.xlane.xlu0 %2356
        %2358 = vmax.xlane.f32.xlu0 %v1334
        %v2359 = vpop.xlane.xlu0 %2358
        %2360 = vmax.xlane.f32.xlu0 %v1340
        %v2361 = vpop.xlane.xlu0 %2360
        %2362 = vmax.xlane.f32.xlu0 %v1344
        %v2363 = vpop.xlane.xlu0 %2362
        %2364 = vmax.xlane.f32.xlu0 %v1350
        %v2365 = vpop.xlane.xlu0 %2364
        %2366 = vmax.xlane.f32.xlu0 %v1354
        %v2367 = vpop.xlane.xlu0 %2366
        %2368 = vmax.xlane.f32.xlu0 %v1360
        %v2369 = vpop.xlane.xlu0 %2368
        %2370 = vmax.xlane.f32.xlu0 %v1364
        %v2371 = vpop.xlane.xlu0 %2370
        %2372 = vmax.xlane.f32.xlu0 %v1370
        %v2373 = vpop.xlane.xlu0 %2372
        %2374 = vmax.xlane.f32.xlu0 %v1374
        %v2375 = vpop.xlane.xlu0 %2374
        %2376 = vmax.xlane.f32.xlu0 %v1380
        %v2377 = vpop.xlane.xlu0 %2376
        %2378 = vmax.xlane.f32.xlu0 %v1384
        %v2379 = vpop.xlane.xlu0 %2378
        %v2380 = vsub.f32 %v1310, %v2349
        %v2381 = vsub.f32 %v1314, %v2351
        %v2382 = vsub.f32 %v1320, %v2353
        %v2383 = vsub.f32 %v1324, %v2355
        %v2384 = vsub.f32 %v1330, %v2357
        %v2385 = vsub.f32 %v1334, %v2359
        %v2386 = vsub.f32 %v1340, %v2361
        %v2387 = vsub.f32 %v1344, %v2363
        %v2388 = vsub.f32 %v1350, %v2365
        %v2389 = vsub.f32 %v1354, %v2367
        %v2390 = vsub.f32 %v1360, %v2369
        %v2391 = vsub.f32 %v1364, %v2371
        %v2392 = vsub.f32 %v1370, %v2373
        %v2393 = vsub.f32 %v1374, %v2375
        %v2394 = vsub.f32 %v1380, %v2377
        %v2395 = vsub.f32 %v1384, %v2379
        %v2396 = vmul.f32 %v2380, 1.442695
        %v2397 = vpow.pop %v2396
        %v2398 = vmul.f32 %v2381, 1.442695
        %v2399 = vpow.pop %v2398
        %v2400 = vmul.f32 %v2382, 1.442695
        %v2401 = vpow.pop %v2400
        %v2402 = vmul.f32 %v2383, 1.442695
        %v2403 = vpow.pop %v2402
        %v2404 = vmul.f32 %v2384, 1.442695
        %v2405 = vpow.pop %v2404
        %v2406 = vmul.f32 %v2385, 1.442695
        %v2407 = vpow.pop %v2406
        %v2408 = vmul.f32 %v2386, 1.442695
        %v2409 = vpow.pop %v2408
        %v2410 = vmul.f32 %v2387, 1.442695
        %v2411 = vpow.pop %v2410
        %v2412 = vmul.f32 %v2388, 1.442695
        %v2413 = vpow.pop %v2412
        %v2414 = vmul.f32 %v2389, 1.442695
        %v2415 = vpow.pop %v2414
        %v2416 = vmul.f32 %v2390, 1.442695
        %v2417 = vpow.pop %v2416
        %v2418 = vmul.f32 %v2391, 1.442695
        %v2419 = vpow.pop %v2418
        %v2420 = vmul.f32 %v2392, 1.442695
        %v2421 = vpow.pop %v2420
        %v2422 = vmul.f32 %v2393, 1.442695
        %v2423 = vpow.pop %v2422
        %v2424 = vmul.f32 %v2394, 1.442695
        %v2425 = vpow.pop %v2424
        %v2426 = vmul.f32 %v2395, 1.442695
        %v2427 = vpow.pop %v2426
        %2428 = vadd.xlane.f32.xlu0 %v2397
        %v2429 = vpop.xlane.xlu0 %2428
        %2430 = vadd.xlane.f32.xlu0 %v2399
        %v2431 = vpop.xlane.xlu0 %2430
        %2432 = vadd.xlane.f32.xlu0 %v2401
        %v2433 = vpop.xlane.xlu0 %2432
        %2434 = vadd.xlane.f32.xlu0 %v2403
        %v2435 = vpop.xlane.xlu0 %2434
        %2436 = vadd.xlane.f32.xlu0 %v2405
        %v2437 = vpop.xlane.xlu0 %2436
        %2438 = vadd.xlane.f32.xlu0 %v2407
        %v2439 = vpop.xlane.xlu0 %2438
        %2440 = vadd.xlane.f32.xlu0 %v2409
        %v2441 = vpop.xlane.xlu0 %2440
        %2442 = vadd.xlane.f32.xlu0 %v2411
        %v2443 = vpop.xlane.xlu0 %2442
        %2444 = vadd.xlane.f32.xlu0 %v2413
        %v2445 = vpop.xlane.xlu0 %2444
        %2446 = vadd.xlane.f32.xlu0 %v2415
        %v2447 = vpop.xlane.xlu0 %2446
        %2448 = vadd.xlane.f32.xlu0 %v2417
        %v2449 = vpop.xlane.xlu0 %2448
        %2450 = vadd.xlane.f32.xlu0 %v2419
        %v2451 = vpop.xlane.xlu0 %2450
        %2452 = vadd.xlane.f32.xlu0 %v2421
        %v2453 = vpop.xlane.xlu0 %2452
        %2454 = vadd.xlane.f32.xlu0 %v2423
        %v2455 = vpop.xlane.xlu0 %2454
        %2456 = vadd.xlane.f32.xlu0 %v2425
        %v2457 = vpop.xlane.xlu0 %2456
        %2458 = vadd.xlane.f32.xlu0 %v2427
        %v2459 = vpop.xlane.xlu0 %2458
        %v2460 = vrcp.pop %v2429
        %v2461 = vrcp.pop %v2431
        %v2462 = vrcp.pop %v2433
        %v2463 = vrcp.pop %v2435
        %v2464 = vrcp.pop %v2437
        %v2465 = vrcp.pop %v2439
        %v2466 = vrcp.pop %v2441
        %v2467 = vrcp.pop %v2443
        %v2468 = vrcp.pop %v2445
        %v2469 = vrcp.pop %v2447
        %v2470 = vrcp.pop %v2449
        %v2471 = vrcp.pop %v2451
        %v2472 = vrcp.pop %v2453
        %v2473 = vrcp.pop %v2455
        %v2474 = vrcp.pop %v2457
        %v2475 = vrcp.pop %v2459
        %v2476 = vmul.f32 %v2397, %v2460
        %v2477 = vmul.f32 %v2399, %v2461
        %v2478 = vmul.f32 %v2401, %v2462
        %v2479 = vmul.f32 %v2403, %v2463
        %v2480 = vmul.f32 %v2405, %v2464
        %v2481 = vmul.f32 %v2407, %v2465
        %v2482 = vmul.f32 %v2409, %v2466
        %v2483 = vmul.f32 %v2411, %v2467
        %v2484 = vmul.f32 %v2413, %v2468
        %v2485 = vmul.f32 %v2415, %v2469
        %v2486 = vmul.f32 %v2417, %v2470
        %v2487 = vmul.f32 %v2419, %v2471
        %v2488 = vmul.f32 %v2421, %v2472
        %v2489 = vmul.f32 %v2423, %v2473
        %v2490 = vmul.f32 %v2425, %v2474
        %v2491 = vmul.f32 %v2427, %v2475
        %v2492 = vpack.c.bf16 %v2477, %v2476
        %v2493 = vpack.c.bf16 %v2479, %v2478
        %v2494 = vpack.c.bf16 %v2481, %v2480
        %v2495 = vpack.c.bf16 %v2483, %v2482
        %v2496 = vpack.c.bf16 %v2485, %v2484
        %v2497 = vpack.c.bf16 %v2487, %v2486
        %v2498 = vpack.c.bf16 %v2489, %v2488
        %v2499 = vpack.c.bf16 %v2491, %v2490
        %2500 = vst [vmem:[#allocation4 + $0x30] sm:$0xff] %v2492
        %2501 = vst [vmem:[#allocation4 + $0x70] sm:$0xff] %v2493
        %2502 = vst [vmem:[#allocation4 + $0xb0] sm:$0xff] %v2494
        %2503 = vst [vmem:[#allocation4 + $0xf0] sm:$0xff] %v2495
        %2504 = vst [vmem:[#allocation4 + $0x130] sm:$0xff] %v2496
        %2505 = vst [vmem:[#allocation4 + $0x170] sm:$0xff] %v2497
        %2506 = vst [vmem:[#allocation4 + $0x1b0] sm:$0xff] %v2498
        %2507 = vst [vmem:[#allocation4 + $0x1f0] sm:$0xff] %v2499
        %2508 = vmax.xlane.f32.xlu0 %v1312
        %v2509 = vpop.xlane.xlu0 %2508
        %2510 = vmax.xlane.f32.xlu0 %v1316
        %v2511 = vpop.xlane.xlu0 %2510
        %2512 = vmax.xlane.f32.xlu0 %v1322
        %v2513 = vpop.xlane.xlu0 %2512
        %2514 = vmax.xlane.f32.xlu0 %v1326
        %v2515 = vpop.xlane.xlu0 %2514
        %2516 = vmax.xlane.f32.xlu0 %v1332
        %v2517 = vpop.xlane.xlu0 %2516
        %2518 = vmax.xlane.f32.xlu0 %v1336
        %v2519 = vpop.xlane.xlu0 %2518
        %2520 = vmax.xlane.f32.xlu0 %v1342
        %v2521 = vpop.xlane.xlu0 %2520
        %2522 = vmax.xlane.f32.xlu0 %v1346
        %v2523 = vpop.xlane.xlu0 %2522
        %2524 = vmax.xlane.f32.xlu0 %v1352
        %v2525 = vpop.xlane.xlu0 %2524
        %2526 = vmax.xlane.f32.xlu0 %v1356
        %v2527 = vpop.xlane.xlu0 %2526
        %2528 = vmax.xlane.f32.xlu0 %v1362
        %v2529 = vpop.xlane.xlu0 %2528
        %2530 = vmax.xlane.f32.xlu0 %v1366
        %v2531 = vpop.xlane.xlu0 %2530
        %2532 = vmax.xlane.f32.xlu0 %v1372
        %v2533 = vpop.xlane.xlu0 %2532
        %2534 = vmax.xlane.f32.xlu0 %v1376
        %v2535 = vpop.xlane.xlu0 %2534
        %2536 = vmax.xlane.f32.xlu0 %v1382
        %v2537 = vpop.xlane.xlu0 %2536
        %2538 = vmax.xlane.f32.xlu0 %v1386
        %v2539 = vpop.xlane.xlu0 %2538
        %v2540 = vsub.f32 %v1312, %v2509
        %v2541 = vsub.f32 %v1316, %v2511
        %v2542 = vsub.f32 %v1322, %v2513
        %v2543 = vsub.f32 %v1326, %v2515
        %v2544 = vsub.f32 %v1332, %v2517
        %v2545 = vsub.f32 %v1336, %v2519
        %v2546 = vsub.f32 %v1342, %v2521
        %v2547 = vsub.f32 %v1346, %v2523
        %v2548 = vsub.f32 %v1352, %v2525
        %v2549 = vsub.f32 %v1356, %v2527
        %v2550 = vsub.f32 %v1362, %v2529
        %v2551 = vsub.f32 %v1366, %v2531
        %v2552 = vsub.f32 %v1372, %v2533
        %v2553 = vsub.f32 %v1376, %v2535
        %v2554 = vsub.f32 %v1382, %v2537
        %v2555 = vsub.f32 %v1386, %v2539
        %v2556 = vmul.f32 %v2540, 1.442695
        %v2557 = vpow.pop %v2556
        %v2558 = vmul.f32 %v2541, 1.442695
        %v2559 = vpow.pop %v2558
        %v2560 = vmul.f32 %v2542, 1.442695
        %v2561 = vpow.pop %v2560
        %v2562 = vmul.f32 %v2543, 1.442695
        %v2563 = vpow.pop %v2562
        %v2564 = vmul.f32 %v2544, 1.442695
        %v2565 = vpow.pop %v2564
        %v2566 = vmul.f32 %v2545, 1.442695
        %v2567 = vpow.pop %v2566
        %v2568 = vmul.f32 %v2546, 1.442695
        %v2569 = vpow.pop %v2568
        %v2570 = vmul.f32 %v2547, 1.442695
        %v2571 = vpow.pop %v2570
        %v2572 = vmul.f32 %v2548, 1.442695
        %v2573 = vpow.pop %v2572
        %v2574 = vmul.f32 %v2549, 1.442695
        %v2575 = vpow.pop %v2574
        %v2576 = vmul.f32 %v2550, 1.442695
        %v2577 = vpow.pop %v2576
        %v2578 = vmul.f32 %v2551, 1.442695
        %v2579 = vpow.pop %v2578
        %v2580 = vmul.f32 %v2552, 1.442695
        %v2581 = vpow.pop %v2580
        %v2582 = vmul.f32 %v2553, 1.442695
        %v2583 = vpow.pop %v2582
        %v2584 = vmul.f32 %v2554, 1.442695
        %v2585 = vpow.pop %v2584
        %v2586 = vmul.f32 %v2555, 1.442695
        %v2587 = vpow.pop %v2586
        %2588 = vadd.xlane.f32.xlu0 %v2557
        %v2589 = vpop.xlane.xlu0 %2588
        %2590 = vadd.xlane.f32.xlu0 %v2559
        %v2591 = vpop.xlane.xlu0 %2590
        %2592 = vadd.xlane.f32.xlu0 %v2561
        %v2593 = vpop.xlane.xlu0 %2592
        %2594 = vadd.xlane.f32.xlu0 %v2563
        %v2595 = vpop.xlane.xlu0 %2594
        %2596 = vadd.xlane.f32.xlu0 %v2565
        %v2597 = vpop.xlane.xlu0 %2596
        %2598 = vadd.xlane.f32.xlu0 %v2567
        %v2599 = vpop.xlane.xlu0 %2598
        %2600 = vadd.xlane.f32.xlu0 %v2569
        %v2601 = vpop.xlane.xlu0 %2600
        %2602 = vadd.xlane.f32.xlu0 %v2571
        %v2603 = vpop.xlane.xlu0 %2602
        %2604 = vadd.xlane.f32.xlu0 %v2573
        %v2605 = vpop.xlane.xlu0 %2604
        %2606 = vadd.xlane.f32.xlu0 %v2575
        %v2607 = vpop.xlane.xlu0 %2606
        %2608 = vadd.xlane.f32.xlu0 %v2577
        %v2609 = vpop.xlane.xlu0 %2608
        %2610 = vadd.xlane.f32.xlu0 %v2579
        %v2611 = vpop.xlane.xlu0 %2610
        %2612 = vadd.xlane.f32.xlu0 %v2581
        %v2613 = vpop.xlane.xlu0 %2612
        %2614 = vadd.xlane.f32.xlu0 %v2583
        %v2615 = vpop.xlane.xlu0 %2614
        %2616 = vadd.xlane.f32.xlu0 %v2585
        %v2617 = vpop.xlane.xlu0 %2616
        %2618 = vadd.xlane.f32.xlu0 %v2587
        %v2619 = vpop.xlane.xlu0 %2618
        %v2620 = vrcp.pop %v2589
        %v2621 = vrcp.pop %v2591
        %v2622 = vrcp.pop %v2593
        %v2623 = vrcp.pop %v2595
        %v2624 = vrcp.pop %v2597
        %v2625 = vrcp.pop %v2599
        %v2626 = vrcp.pop %v2601
        %v2627 = vrcp.pop %v2603
        %v2628 = vrcp.pop %v2605
        %v2629 = vrcp.pop %v2607
        %v2630 = vrcp.pop %v2609
        %v2631 = vrcp.pop %v2611
        %v2632 = vrcp.pop %v2613
        %v2633 = vrcp.pop %v2615
        %v2634 = vrcp.pop %v2617
        %v2635 = vrcp.pop %v2619
        %v2636 = vmul.f32 %v2557, %v2620
        %v2637 = vmul.f32 %v2559, %v2621
        %v2638 = vmul.f32 %v2561, %v2622
        %v2639 = vmul.f32 %v2563, %v2623
        %v2640 = vmul.f32 %v2565, %v2624
        %v2641 = vmul.f32 %v2567, %v2625
        %v2642 = vmul.f32 %v2569, %v2626
        %v2643 = vmul.f32 %v2571, %v2627
        %v2644 = vmul.f32 %v2573, %v2628
        %v2645 = vmul.f32 %v2575, %v2629
        %v2646 = vmul.f32 %v2577, %v2630
        %v2647 = vmul.f32 %v2579, %v2631
        %v2648 = vmul.f32 %v2581, %v2632
        %v2649 = vmul.f32 %v2583, %v2633
        %v2650 = vmul.f32 %v2585, %v2634
        %v2651 = vmul.f32 %v2587, %v2635
        %v2652 = vpack.c.bf16 %v2637, %v2636
        %v2653 = vpack.c.bf16 %v2639, %v2638
        %v2654 = vpack.c.bf16 %v2641, %v2640
        %v2655 = vpack.c.bf16 %v2643, %v2642
        %v2656 = vpack.c.bf16 %v2645, %v2644
        %v2657 = vpack.c.bf16 %v2647, %v2646
        %v2658 = vpack.c.bf16 %v2649, %v2648
        %v2659 = vpack.c.bf16 %v2651, %v2650
        %2660 = vst [vmem:[#allocation4 + $0x38] sm:$0xff] %v2652
        %2661 = vst [vmem:[#allocation4 + $0x78] sm:$0xff] %v2653
        %2662 = vst [vmem:[#allocation4 + $0xb8] sm:$0xff] %v2654
        %2663 = vst [vmem:[#allocation4 + $0xf8] sm:$0xff] %v2655
        %2664 = vst [vmem:[#allocation4 + $0x138] sm:$0xff] %v2656
        %2665 = vst [vmem:[#allocation4 + $0x178] sm:$0xff] %v2657
        %2666 = vst [vmem:[#allocation4 + $0x1b8] sm:$0xff] %v2658
        %2667 = vst [vmem:[#allocation4 + $0x1f8] sm:$0xff] %v2659
        %v2668 = vld [vmem:[#allocation4] sm:$0xff]
        %v2669 = vld [vmem:[#allocation4 + $0x8] sm:$0xff]
        %v2670 = vld [vmem:[#allocation4 + $0x10] sm:$0xff]
        %v2671 = vld [vmem:[#allocation4 + $0x18] sm:$0xff]
        %v2672 = vld [vmem:[#allocation4 + $0x20] sm:$0xff]
        %v2673 = vld [vmem:[#allocation4 + $0x28] sm:$0xff]
        %v2674 = vld [vmem:[#allocation4 + $0x30] sm:$0xff]
        %v2675 = vld [vmem:[#allocation4 + $0x38] sm:$0xff]
        %v2676 = vld [vmem:[#allocation4 + $0x40] sm:$0xff]
        %v2677 = vld [vmem:[#allocation4 + $0x48] sm:$0xff]
        %v2678 = vld [vmem:[#allocation4 + $0x50] sm:$0xff]
        %v2679 = vld [vmem:[#allocation4 + $0x58] sm:$0xff]
        %v2680 = vld [vmem:[#allocation4 + $0x60] sm:$0xff]
        %v2681 = vld [vmem:[#allocation4 + $0x68] sm:$0xff]
        %v2682 = vld [vmem:[#allocation4 + $0x70] sm:$0xff]
        %v2683 = vld [vmem:[#allocation4 + $0x78] sm:$0xff]
        %v2684 = vld [vmem:[#allocation4 + $0x80] sm:$0xff]
        %v2685 = vld [vmem:[#allocation4 + $0x88] sm:$0xff]
        %v2686 = vld [vmem:[#allocation4 + $0x90] sm:$0xff]
        %v2687 = vld [vmem:[#allocation4 + $0x98] sm:$0xff]
        %v2688 = vld [vmem:[#allocation4 + $0xa0] sm:$0xff]
        %v2689 = vld [vmem:[#allocation4 + $0xa8] sm:$0xff]
        %v2690 = vld [vmem:[#allocation4 + $0xb0] sm:$0xff]
        %v2691 = vld [vmem:[#allocation4 + $0xb8] sm:$0xff]
        %v2692 = vld [vmem:[#allocation4 + $0xc0] sm:$0xff]
        %v2693 = vld [vmem:[#allocation4 + $0xc8] sm:$0xff]
        %v2694 = vld [vmem:[#allocation4 + $0xd0] sm:$0xff]
        %v2695 = vld [vmem:[#allocation4 + $0xd8] sm:$0xff]
        %v2696 = vld [vmem:[#allocation4 + $0xe0] sm:$0xff]
        %v2697 = vld [vmem:[#allocation4 + $0xe8] sm:$0xff]
        %v2698 = vld [vmem:[#allocation4 + $0xf0] sm:$0xff]
        %v2699 = vld [vmem:[#allocation4 + $0xf8] sm:$0xff]
        %v2700 = vld [vmem:[#allocation4 + $0x100] sm:$0xff]
        %v2701 = vld [vmem:[#allocation4 + $0x108] sm:$0xff]
        %v2702 = vld [vmem:[#allocation4 + $0x110] sm:$0xff]
        %v2703 = vld [vmem:[#allocation4 + $0x118] sm:$0xff]
        %v2704 = vld [vmem:[#allocation4 + $0x120] sm:$0xff]
        %v2705 = vld [vmem:[#allocation4 + $0x128] sm:$0xff]
        %v2706 = vld [vmem:[#allocation4 + $0x130] sm:$0xff]
        %v2707 = vld [vmem:[#allocation4 + $0x138] sm:$0xff]
        %v2708 = vld [vmem:[#allocation4 + $0x140] sm:$0xff]
        %v2709 = vld [vmem:[#allocation4 + $0x148] sm:$0xff]
        %v2710 = vld [vmem:[#allocation4 + $0x150] sm:$0xff]
        %v2711 = vld [vmem:[#allocation4 + $0x158] sm:$0xff]
        %v2712 = vld [vmem:[#allocation4 + $0x160] sm:$0xff]
        %v2713 = vld [vmem:[#allocation4 + $0x168] sm:$0xff]
        %v2714 = vld [vmem:[#allocation4 + $0x170] sm:$0xff]
        %v2715 = vld [vmem:[#allocation4 + $0x178] sm:$0xff]
        %v2716 = vld [vmem:[#allocation4 + $0x180] sm:$0xff]
        %v2717 = vld [vmem:[#allocation4 + $0x188] sm:$0xff]
        %v2718 = vld [vmem:[#allocation4 + $0x190] sm:$0xff]
        %v2719 = vld [vmem:[#allocation4 + $0x198] sm:$0xff]
        %v2720 = vld [vmem:[#allocation4 + $0x1a0] sm:$0xff]
        %v2721 = vld [vmem:[#allocation4 + $0x1a8] sm:$0xff]
        %v2722 = vld [vmem:[#allocation4 + $0x1b0] sm:$0xff]
        %v2723 = vld [vmem:[#allocation4 + $0x1b8] sm:$0xff]
        %v2724 = vld [vmem:[#allocation4 + $0x1c0] sm:$0xff]
        %v2725 = vld [vmem:[#allocation4 + $0x1c8] sm:$0xff]
        %v2726 = vld [vmem:[#allocation4 + $0x1d0] sm:$0xff]
        %v2727 = vld [vmem:[#allocation4 + $0x1d8] sm:$0xff]
        %v2728 = vld [vmem:[#allocation4 + $0x1e0] sm:$0xff]
        %v2729 = vld [vmem:[#allocation4 + $0x1e8] sm:$0xff]
        %v2730 = vld [vmem:[#allocation4 + $0x1f0] sm:$0xff]
        %v2731 = vld [vmem:[#allocation4 + $0x1f8] sm:$0xff]
        %v2732 = vld [vmem:[#allocation3] sm:$0xff]
        %v2733 = vld [vmem:[#allocation3 + $0x8] sm:$0xff]
        %v2734 = vld [vmem:[#allocation3 + $0x10] sm:$0xff]
        %v2735 = vld [vmem:[#allocation3 + $0x18] sm:$0xff]
        %v2736 = vld [vmem:[#allocation3 + $0x20] sm:$0xff]
        %v2737 = vld [vmem:[#allocation3 + $0x28] sm:$0xff]
        %v2738 = vld [vmem:[#allocation3 + $0x30] sm:$0xff]
        %v2739 = vld [vmem:[#allocation3 + $0x38] sm:$0xff]
        %v2740 = vld [vmem:[#allocation3 + $0x40] sm:$0xff]
        %v2741 = vld [vmem:[#allocation3 + $0x48] sm:$0xff]
        %v2742 = vld [vmem:[#allocation3 + $0x50] sm:$0xff]
        %v2743 = vld [vmem:[#allocation3 + $0x58] sm:$0xff]
        %v2744 = vld [vmem:[#allocation3 + $0x60] sm:$0xff]
        %v2745 = vld [vmem:[#allocation3 + $0x68] sm:$0xff]
        %v2746 = vld [vmem:[#allocation3 + $0x70] sm:$0xff]
        %v2747 = vld [vmem:[#allocation3 + $0x78] sm:$0xff]
        %v2748 = vld [vmem:[#allocation3 + $0x80] sm:$0xff]
        %v2749 = vld [vmem:[#allocation3 + $0x88] sm:$0xff]
        %v2750 = vld [vmem:[#allocation3 + $0x90] sm:$0xff]
        %v2751 = vld [vmem:[#allocation3 + $0x98] sm:$0xff]
        %v2752 = vld [vmem:[#allocation3 + $0xa0] sm:$0xff]
        %v2753 = vld [vmem:[#allocation3 + $0xa8] sm:$0xff]
        %v2754 = vld [vmem:[#allocation3 + $0xb0] sm:$0xff]
        %v2755 = vld [vmem:[#allocation3 + $0xb8] sm:$0xff]
        %v2756 = vld [vmem:[#allocation3 + $0xc0] sm:$0xff]
        %v2757 = vld [vmem:[#allocation3 + $0xc8] sm:$0xff]
        %v2758 = vld [vmem:[#allocation3 + $0xd0] sm:$0xff]
        %v2759 = vld [vmem:[#allocation3 + $0xd8] sm:$0xff]
        %v2760 = vld [vmem:[#allocation3 + $0xe0] sm:$0xff]
        %v2761 = vld [vmem:[#allocation3 + $0xe8] sm:$0xff]
        %v2762 = vld [vmem:[#allocation3 + $0xf0] sm:$0xff]
        %v2763 = vld [vmem:[#allocation3 + $0xf8] sm:$0xff]
        %v2764 = vld [vmem:[#allocation3 + $0x100] sm:$0xff]
        %v2765 = vld [vmem:[#allocation3 + $0x108] sm:$0xff]
        %v2766 = vld [vmem:[#allocation3 + $0x110] sm:$0xff]
        %v2767 = vld [vmem:[#allocation3 + $0x118] sm:$0xff]
        %v2768 = vld [vmem:[#allocation3 + $0x120] sm:$0xff]
        %v2769 = vld [vmem:[#allocation3 + $0x128] sm:$0xff]
        %v2770 = vld [vmem:[#allocation3 + $0x130] sm:$0xff]
        %v2771 = vld [vmem:[#allocation3 + $0x138] sm:$0xff]
        %v2772 = vld [vmem:[#allocation3 + $0x140] sm:$0xff]
        %v2773 = vld [vmem:[#allocation3 + $0x148] sm:$0xff]
        %v2774 = vld [vmem:[#allocation3 + $0x150] sm:$0xff]
        %v2775 = vld [vmem:[#allocation3 + $0x158] sm:$0xff]
        %v2776 = vld [vmem:[#allocation3 + $0x160] sm:$0xff]
        %v2777 = vld [vmem:[#allocation3 + $0x168] sm:$0xff]
        %v2778 = vld [vmem:[#allocation3 + $0x170] sm:$0xff]
        %v2779 = vld [vmem:[#allocation3 + $0x178] sm:$0xff]
        %v2780 = vld [vmem:[#allocation3 + $0x180] sm:$0xff]
        %v2781 = vld [vmem:[#allocation3 + $0x188] sm:$0xff]
        %v2782 = vld [vmem:[#allocation3 + $0x190] sm:$0xff]
        %v2783 = vld [vmem:[#allocation3 + $0x198] sm:$0xff]
        %v2784 = vld [vmem:[#allocation3 + $0x1a0] sm:$0xff]
        %v2785 = vld [vmem:[#allocation3 + $0x1a8] sm:$0xff]
        %v2786 = vld [vmem:[#allocation3 + $0x1b0] sm:$0xff]
        %v2787 = vld [vmem:[#allocation3 + $0x1b8] sm:$0xff]
        %v2788 = vld [vmem:[#allocation3 + $0x1c0] sm:$0xff]
        %v2789 = vld [vmem:[#allocation3 + $0x1c8] sm:$0xff]
        %v2790 = vld [vmem:[#allocation3 + $0x1d0] sm:$0xff]
        %v2791 = vld [vmem:[#allocation3 + $0x1d8] sm:$0xff]
        %v2792 = vld [vmem:[#allocation3 + $0x1e0] sm:$0xff]
        %v2793 = vld [vmem:[#allocation3 + $0x1e8] sm:$0xff]
        %v2794 = vld [vmem:[#allocation3 + $0x1f0] sm:$0xff]
        %v2795 = vld [vmem:[#allocation3 + $0x1f8] sm:$0xff]
        %2796 = vmatprep.subr.bf16.mxu0 0
        %2797 = vmatpush1.bf16.msra.mxu0 %v2732
        %2798 = vmatprep.subr.bf16.mxu0 0
        %2799 = vmatpush1.bf16.msra.mxu0 %v2733
        %2800 = vmatprep.subr.bf16.mxu0 0
        %2801 = vmatpush1.bf16.msra.mxu0 %v2734
        %2802 = vmatprep.subr.bf16.mxu0 0
        %2803 = vmatpush1.bf16.msra.mxu0 %v2735
        %2804 = vmatprep.subr.bf16.mxu0 0
        %2805 = vmatpush1.bf16.msra.mxu0 %v2736
        %2806 = vmatprep.subr.bf16.mxu0 0
        %2807 = vmatpush1.bf16.msra.mxu0 %v2737
        %2808 = vmatprep.subr.bf16.mxu0 0
        %2809 = vmatpush1.bf16.msra.mxu0 %v2738
        %2810 = vmatprep.subr.bf16.mxu0 0
        %2811 = vmatpush1.bf16.msra.mxu0 %v2739
        %2812 = vmatprep.subr.bf16.mxu0 0
        %2813 = vmatpush1.bf16.msra.mxu0 %v2740
        %2814 = vmatprep.subr.bf16.mxu0 0
        %2815 = vmatpush1.bf16.msra.mxu0 %v2741
        %2816 = vmatprep.subr.bf16.mxu0 0
        %2817 = vmatpush1.bf16.msra.mxu0 %v2742
        %2818 = vmatprep.subr.bf16.mxu0 0
        %2819 = vmatpush1.bf16.msra.mxu0 %v2743
        %2820 = vmatprep.subr.bf16.mxu0 0
        %2821 = vmatpush1.bf16.msra.mxu0 %v2744
        %2822 = vmatprep.subr.bf16.mxu0 0
        %2823 = vmatpush1.bf16.msra.mxu0 %v2745
        %2824 = vmatprep.subr.bf16.mxu0 0
        %2825 = vmatpush1.bf16.msra.mxu0 %v2746
        %2826 = vmatprep.subr.bf16.mxu0 0
        %2827 = vmatpush1.bf16.msra.mxu0 %v2747
        %2828 = vmatprep.mubr.bf16.mxu0 %v2669
        %2829 = vmatmul.mubr.bf16.gmra.mrb[0].mxu0 %v2668
        %v2830 = vpop.f32.mrb[0].mxu0
        %v2831 = vadd.f32 0.0, %v2830
        %v2832 = vpop.f32.mrb[0].mxu0
        %v2833 = vpop.f32.mrb[0].mxu0
        %v2834 = vadd.f32 0.0, %v2833
        %v2835 = vpop.f32.mrb[0].mxu0
        %2836 = vmatprep.mubr.bf16.mxu0 %v2677
        %2837 = vmatmul.mubr.bf16.gmra.mrb[0].mxu0 %v2676
        %v2838 = vpop.f32.mrb[0].mxu0
        %v2839 = vadd.f32 0.0, %v2838
        %v2840 = vpop.f32.mrb[0].mxu0
        %v2841 = vpop.f32.mrb[0].mxu0
        %v2842 = vadd.f32 0.0, %v2841
        %v2843 = vpop.f32.mrb[0].mxu0
        %2844 = vmatprep.mubr.bf16.mxu0 %v2685
        %2845 = vmatmul.mubr.bf16.gmra.mrb[0].mxu0 %v2684
        %v2846 = vpop.f32.mrb[0].mxu0
        %v2847 = vadd.f32 0.0, %v2846
        %v2848 = vpop.f32.mrb[0].mxu0
        %v2849 = vpop.f32.mrb[0].mxu0
        %v2850 = vadd.f32 0.0, %v2849
        %v2851 = vpop.f32.mrb[0].mxu0
        %2852 = vmatprep.mubr.bf16.mxu0 %v2693
        %2853 = vmatmul.mubr.bf16.gmra.mrb[0].mxu0 %v2692
        %v2854 = vpop.f32.mrb[0].mxu0
        %v2855 = vadd.f32 0.0, %v2854
        %v2856 = vpop.f32.mrb[0].mxu0
        %v2857 = vpop.f32.mrb[0].mxu0
        %v2858 = vadd.f32 0.0, %v2857
        %v2859 = vpop.f32.mrb[0].mxu0
        %2860 = vmatprep.mubr.bf16.mxu0 %v2701
        %2861 = vmatmul.mubr.bf16.gmra.mrb[0].mxu0 %v2700
        %v2862 = vpop.f32.mrb[0].mxu0
        %v2863 = vadd.f32 0.0, %v2862
        %v2864 = vpop.f32.mrb[0].mxu0
        %v2865 = vpop.f32.mrb[0].mxu0
        %v2866 = vadd.f32 0.0, %v2865
        %v2867 = vpop.f32.mrb[0].mxu0
        %2868 = vmatprep.mubr.bf16.mxu0 %v2709
        %2869 = vmatmul.mubr.bf16.gmra.mrb[0].mxu0 %v2708
        %v2870 = vpop.f32.mrb[0].mxu0
        %v2871 = vadd.f32 0.0, %v2870
        %v2872 = vpop.f32.mrb[0].mxu0
        %v2873 = vpop.f32.mrb[0].mxu0
        %v2874 = vadd.f32 0.0, %v2873
        %v2875 = vpop.f32.mrb[0].mxu0
        %2876 = vmatprep.mubr.bf16.mxu0 %v2717
        %2877 = vmatmul.mubr.bf16.gmra.mrb[0].mxu0 %v2716
        %v2878 = vpop.f32.mrb[0].mxu0
        %v2879 = vadd.f32 0.0, %v2878
        %v2880 = vpop.f32.mrb[0].mxu0
        %v2881 = vpop.f32.mrb[0].mxu0
        %v2882 = vadd.f32 0.0, %v2881
        %v2883 = vpop.f32.mrb[0].mxu0
        %2884 = vmatprep.mubr.bf16.mxu0 %v2725
        %2885 = vmatmul.mubr.bf16.gmra.mrb[0].mxu0 %v2724
        %v2886 = vpop.f32.mrb[0].mxu0
        %v2887 = vadd.f32 0.0, %v2886
        %v2888 = vpop.f32.mrb[0].mxu0
        %v2889 = vpop.f32.mrb[0].mxu0
        %v2890 = vadd.f32 0.0, %v2889
        %v2891 = vpop.f32.mrb[0].mxu0
        %2892 = vdwg.mxu0
        %2893 = vmatprep.subr.bf16.mxu0 0
        %2894 = vmatpush1.bf16.msra.mxu0 %v2748
        %2895 = vmatprep.subr.bf16.mxu0 0
        %2896 = vmatpush1.bf16.msra.mxu0 %v2749
        %2897 = vmatprep.subr.bf16.mxu0 0
        %2898 = vmatpush1.bf16.msra.mxu0 %v2750
        %2899 = vmatprep.subr.bf16.mxu0 0
        %2900 = vmatpush1.bf16.msra.mxu0 %v2751
        %2901 = vmatprep.subr.bf16.mxu0 0
        %2902 = vmatpush1.bf16.msra.mxu0 %v2752
        %2903 = vmatprep.subr.bf16.mxu0 0
        %2904 = vmatpush1.bf16.msra.mxu0 %v2753
        %2905 = vmatprep.subr.bf16.mxu0 0
        %2906 = vmatpush1.bf16.msra.mxu0 %v2754
        %2907 = vmatprep.subr.bf16.mxu0 0
        %2908 = vmatpush1.bf16.msra.mxu0 %v2755
        %2909 = vmatprep.subr.bf16.mxu0 0
        %2910 = vmatpush1.bf16.msra.mxu0 %v2756
        %2911 = vmatprep.subr.bf16.mxu0 0
        %2912 = vmatpush1.bf16.msra.mxu0 %v2757
        %2913 = vmatprep.subr.bf16.mxu0 0
        %2914 = vmatpush1.bf16.msra.mxu0 %v2758
        %2915 = vmatprep.subr.bf16.mxu0 0
        %2916 = vmatpush1.bf16.msra.mxu0 %v2759
        %2917 = vmatprep.subr.bf16.mxu0 0
        %2918 = vmatpush1.bf16.msra.mxu0 %v2760
        %2919 = vmatprep.subr.bf16.mxu0 0
        %2920 = vmatpush1.bf16.msra.mxu0 %v2761
        %2921 = vmatprep.subr.bf16.mxu0 0
        %2922 = vmatpush1.bf16.msra.mxu0 %v2762
        %2923 = vmatprep.subr.bf16.mxu0 0
        %2924 = vmatpush1.bf16.msra.mxu0 %v2763
        %2925 = vmatprep.mubr.bf16.mxu0 %v2671
        %2926 = vmatmul.mubr.bf16.gmra.mrb[0].mxu0 %v2670
        %v2927 = vpop.f32.mrb[0].mxu0
        %v2928 = vadd.f32 %v2831, %v2927
        %v2929 = vpop.f32.mrb[0].mxu0
        %v2930 = vpop.f32.mrb[0].mxu0
        %v2931 = vadd.f32 %v2834, %v2930
        %v2932 = vpop.f32.mrb[0].mxu0
        %2933 = vmatprep.mubr.bf16.mxu0 %v2679
        %2934 = vmatmul.mubr.bf16.gmra.mrb[0].mxu0 %v2678
        %v2935 = vpop.f32.mrb[0].mxu0
        %v2936 = vadd.f32 %v2839, %v2935
        %v2937 = vpop.f32.mrb[0].mxu0
        %v2938 = vpop.f32.mrb[0].mxu0
        %v2939 = vadd.f32 %v2842, %v2938
        %v2940 = vpop.f32.mrb[0].mxu0
        %2941 = vmatprep.mubr.bf16.mxu0 %v2687
        %2942 = vmatmul.mubr.bf16.gmra.mrb[0].mxu0 %v2686
        %v2943 = vpop.f32.mrb[0].mxu0
        %v2944 = vadd.f32 %v2847, %v2943
        %v2945 = vpop.f32.mrb[0].mxu0
        %v2946 = vpop.f32.mrb[0].mxu0
        %v2947 = vadd.f32 %v2850, %v2946
        %v2948 = vpop.f32.mrb[0].mxu0
        %2949 = vmatprep.mubr.bf16.mxu0 %v2695
        %2950 = vmatmul.mubr.bf16.gmra.mrb[0].mxu0 %v2694
        %v2951 = vpop.f32.mrb[0].mxu0
        %v2952 = vadd.f32 %v2855, %v2951
        %v2953 = vpop.f32.mrb[0].mxu0
        %v2954 = vpop.f32.mrb[0].mxu0
        %v2955 = vadd.f32 %v2858, %v2954
        %v2956 = vpop.f32.mrb[0].mxu0
        %2957 = vmatprep.mubr.bf16.mxu0 %v2703
        %2958 = vmatmul.mubr.bf16.gmra.mrb[0].mxu0 %v2702
        %v2959 = vpop.f32.mrb[0].mxu0
        %v2960 = vadd.f32 %v2863, %v2959
        %v2961 = vpop.f32.mrb[0].mxu0
        %v2962 = vpop.f32.mrb[0].mxu0
        %v2963 = vadd.f32 %v2866, %v2962
        %v2964 = vpop.f32.mrb[0].mxu0
        %2965 = vmatprep.mubr.bf16.mxu0 %v2711
        %2966 = vmatmul.mubr.bf16.gmra.mrb[0].mxu0 %v2710
        %v2967 = vpop.f32.mrb[0].mxu0
        %v2968 = vadd.f32 %v2871, %v2967
        %v2969 = vpop.f32.mrb[0].mxu0
        %v2970 = vpop.f32.mrb[0].mxu0
        %v2971 = vadd.f32 %v2874, %v2970
        %v2972 = vpop.f32.mrb[0].mxu0
        %2973 = vmatprep.mubr.bf16.mxu0 %v2719
        %2974 = vmatmul.mubr.bf16.gmra.mrb[0].mxu0 %v2718
        %v2975 = vpop.f32.mrb[0].mxu0
        %v2976 = vadd.f32 %v2879, %v2975
        %v2977 = vpop.f32.mrb[0].mxu0
        %v2978 = vpop.f32.mrb[0].mxu0
        %v2979 = vadd.f32 %v2882, %v2978
        %v2980 = vpop.f32.mrb[0].mxu0
        %2981 = vmatprep.mubr.bf16.mxu0 %v2727
        %2982 = vmatmul.mubr.bf16.gmra.mrb[0].mxu0 %v2726
        %v2983 = vpop.f32.mrb[0].mxu0
        %v2984 = vadd.f32 %v2887, %v2983
        %v2985 = vpop.f32.mrb[0].mxu0
        %v2986 = vpop.f32.mrb[0].mxu0
        %v2987 = vadd.f32 %v2890, %v2986
        %v2988 = vpop.f32.mrb[0].mxu0
        %2989 = vdwg.mxu0
        %2990 = vmatprep.subr.bf16.mxu0 0
        %2991 = vmatpush1.bf16.msra.mxu0 %v2764
        %2992 = vmatprep.subr.bf16.mxu0 0
        %2993 = vmatpush1.bf16.msra.mxu0 %v2765
        %2994 = vmatprep.subr.bf16.mxu0 0
        %2995 = vmatpush1.bf16.msra.mxu0 %v2766
        %2996 = vmatprep.subr.bf16.mxu0 0
        %2997 = vmatpush1.bf16.msra.mxu0 %v2767
        %2998 = vmatprep.subr.bf16.mxu0 0
        %2999 = vmatpush1.bf16.msra.mxu0 %v2768
        %3000 = vmatprep.subr.bf16.mxu0 0
        %3001 = vmatpush1.bf16.msra.mxu0 %v2769
        %3002 = vmatprep.subr.bf16.mxu0 0
        %3003 = vmatpush1.bf16.msra.mxu0 %v2770
        %3004 = vmatprep.subr.bf16.mxu0 0
        %3005 = vmatpush1.bf16.msra.mxu0 %v2771
        %3006 = vmatprep.subr.bf16.mxu0 0
        %3007 = vmatpush1.bf16.msra.mxu0 %v2772
        %3008 = vmatprep.subr.bf16.mxu0 0
        %3009 = vmatpush1.bf16.msra.mxu0 %v2773
        %3010 = vmatprep.subr.bf16.mxu0 0
        %3011 = vmatpush1.bf16.msra.mxu0 %v2774
        %3012 = vmatprep.subr.bf16.mxu0 0
        %3013 = vmatpush1.bf16.msra.mxu0 %v2775
        %3014 = vmatprep.subr.bf16.mxu0 0
        %3015 = vmatpush1.bf16.msra.mxu0 %v2776
        %3016 = vmatprep.subr.bf16.mxu0 0
        %3017 = vmatpush1.bf16.msra.mxu0 %v2777
        %3018 = vmatprep.subr.bf16.mxu0 0
        %3019 = vmatpush1.bf16.msra.mxu0 %v2778
        %3020 = vmatprep.subr.bf16.mxu0 0
        %3021 = vmatpush1.bf16.msra.mxu0 %v2779
        %3022 = vmatprep.mubr.bf16.mxu0 %v2673
        %3023 = vmatmul.mubr.bf16.gmra.mrb[0].mxu0 %v2672
        %v3024 = vpop.f32.mrb[0].mxu0
        %v3025 = vadd.f32 %v2928, %v3024
        %v3026 = vpop.f32.mrb[0].mxu0
        %v3027 = vpop.f32.mrb[0].mxu0
        %v3028 = vadd.f32 %v2931, %v3027
        %v3029 = vpop.f32.mrb[0].mxu0
        %3030 = vmatprep.mubr.bf16.mxu0 %v2681
        %3031 = vmatmul.mubr.bf16.gmra.mrb[0].mxu0 %v2680
        %v3032 = vpop.f32.mrb[0].mxu0
        %v3033 = vadd.f32 %v2936, %v3032
        %v3034 = vpop.f32.mrb[0].mxu0
        %v3035 = vpop.f32.mrb[0].mxu0
        %v3036 = vadd.f32 %v2939, %v3035
        %v3037 = vpop.f32.mrb[0].mxu0
        %3038 = vmatprep.mubr.bf16.mxu0 %v2689
        %3039 = vmatmul.mubr.bf16.gmra.mrb[0].mxu0 %v2688
        %v3040 = vpop.f32.mrb[0].mxu0
        %v3041 = vadd.f32 %v2944, %v3040
        %v3042 = vpop.f32.mrb[0].mxu0
        %v3043 = vpop.f32.mrb[0].mxu0
        %v3044 = vadd.f32 %v2947, %v3043
        %v3045 = vpop.f32.mrb[0].mxu0
        %3046 = vmatprep.mubr.bf16.mxu0 %v2697
        %3047 = vmatmul.mubr.bf16.gmra.mrb[0].mxu0 %v2696
        %v3048 = vpop.f32.mrb[0].mxu0
        %v3049 = vadd.f32 %v2952, %v3048
        %v3050 = vpop.f32.mrb[0].mxu0
        %v3051 = vpop.f32.mrb[0].mxu0
        %v3052 = vadd.f32 %v2955, %v3051
        %v3053 = vpop.f32.mrb[0].mxu0
        %3054 = vmatprep.mubr.bf16.mxu0 %v2705
        %3055 = vmatmul.mubr.bf16.gmra.mrb[0].mxu0 %v2704
        %v3056 = vpop.f32.mrb[0].mxu0
        %v3057 = vadd.f32 %v2960, %v3056
        %v3058 = vpop.f32.mrb[0].mxu0
        %v3059 = vpop.f32.mrb[0].mxu0
        %v3060 = vadd.f32 %v2963, %v3059
        %v3061 = vpop.f32.mrb[0].mxu0
        %3062 = vmatprep.mubr.bf16.mxu0 %v2713
        %3063 = vmatmul.mubr.bf16.gmra.mrb[0].mxu0 %v2712
        %v3064 = vpop.f32.mrb[0].mxu0
        %v3065 = vadd.f32 %v2968, %v3064
        %v3066 = vpop.f32.mrb[0].mxu0
        %v3067 = vpop.f32.mrb[0].mxu0
        %v3068 = vadd.f32 %v2971, %v3067
        %v3069 = vpop.f32.mrb[0].mxu0
        %3070 = vmatprep.mubr.bf16.mxu0 %v2721
        %3071 = vmatmul.mubr.bf16.gmra.mrb[0].mxu0 %v2720
        %v3072 = vpop.f32.mrb[0].mxu0
        %v3073 = vadd.f32 %v2976, %v3072
        %v3074 = vpop.f32.mrb[0].mxu0
        %v3075 = vpop.f32.mrb[0].mxu0
        %v3076 = vadd.f32 %v2979, %v3075
        %v3077 = vpop.f32.mrb[0].mxu0
        %3078 = vmatprep.mubr.bf16.mxu0 %v2729
        %3079 = vmatmul.mubr.bf16.gmra.mrb[0].mxu0 %v2728
        %v3080 = vpop.f32.mrb[0].mxu0
        %v3081 = vadd.f32 %v2984, %v3080
        %v3082 = vpop.f32.mrb[0].mxu0
        %v3083 = vpop.f32.mrb[0].mxu0
        %v3084 = vadd.f32 %v2987, %v3083
        %v3085 = vpop.f32.mrb[0].mxu0
        %3086 = vdwg.mxu0
        %3087 = vmatprep.subr.bf16.mxu0 0
        %3088 = vmatpush1.bf16.msra.mxu0 %v2780
        %3089 = vmatprep.subr.bf16.mxu0 0
        %3090 = vmatpush1.bf16.msra.mxu0 %v2781
        %3091 = vmatprep.subr.bf16.mxu0 0
        %3092 = vmatpush1.bf16.msra.mxu0 %v2782
        %3093 = vmatprep.subr.bf16.mxu0 0
        %3094 = vmatpush1.bf16.msra.mxu0 %v2783
        %3095 = vmatprep.subr.bf16.mxu0 0
        %3096 = vmatpush1.bf16.msra.mxu0 %v2784
        %3097 = vmatprep.subr.bf16.mxu0 0
        %3098 = vmatpush1.bf16.msra.mxu0 %v2785
        %3099 = vmatprep.subr.bf16.mxu0 0
        %3100 = vmatpush1.bf16.msra.mxu0 %v2786
        %3101 = vmatprep.subr.bf16.mxu0 0
        %3102 = vmatpush1.bf16.msra.mxu0 %v2787
        %3103 = vmatprep.subr.bf16.mxu0 0
        %3104 = vmatpush1.bf16.msra.mxu0 %v2788
        %3105 = vmatprep.subr.bf16.mxu0 0
        %3106 = vmatpush1.bf16.msra.mxu0 %v2789
        %3107 = vmatprep.subr.bf16.mxu0 0
        %3108 = vmatpush1.bf16.msra.mxu0 %v2790
        %3109 = vmatprep.subr.bf16.mxu0 0
        %3110 = vmatpush1.bf16.msra.mxu0 %v2791
        %3111 = vmatprep.subr.bf16.mxu0 0
        %3112 = vmatpush1.bf16.msra.mxu0 %v2792
        %3113 = vmatprep.subr.bf16.mxu0 0
        %3114 = vmatpush1.bf16.msra.mxu0 %v2793
        %3115 = vmatprep.subr.bf16.mxu0 0
        %3116 = vmatpush1.bf16.msra.mxu0 %v2794
        %3117 = vmatprep.subr.bf16.mxu0 0
        %3118 = vmatpush1.bf16.msra.mxu0 %v2795
        %3119 = vmatprep.mubr.bf16.mxu0 %v2675
        %3120 = vmatmul.mubr.bf16.gmra.mrb[0].mxu0 %v2674
        %v3121 = vpop.f32.mrb[0].mxu0
        %v3122 = vadd.f32 %v3025, %v3121
        %v3123 = vpop.f32.mrb[0].mxu0
        %v3124 = vpop.f32.mrb[0].mxu0
        %v3125 = vadd.f32 %v3028, %v3124
        %v3126 = vpop.f32.mrb[0].mxu0
        %3127 = vmatprep.mubr.bf16.mxu0 %v2683
        %3128 = vmatmul.mubr.bf16.gmra.mrb[0].mxu0 %v2682
        %v3129 = vpop.f32.mrb[0].mxu0
        %v3130 = vadd.f32 %v3033, %v3129
        %v3131 = vpop.f32.mrb[0].mxu0
        %v3132 = vpop.f32.mrb[0].mxu0
        %v3133 = vadd.f32 %v3036, %v3132
        %v3134 = vpop.f32.mrb[0].mxu0
        %3135 = vmatprep.mubr.bf16.mxu0 %v2691
        %3136 = vmatmul.mubr.bf16.gmra.mrb[0].mxu0 %v2690
        %v3137 = vpop.f32.mrb[0].mxu0
        %v3138 = vadd.f32 %v3041, %v3137
        %v3139 = vpop.f32.mrb[0].mxu0
        %v3140 = vpop.f32.mrb[0].mxu0
        %v3141 = vadd.f32 %v3044, %v3140
        %v3142 = vpop.f32.mrb[0].mxu0
        %3143 = vmatprep.mubr.bf16.mxu0 %v2699
        %3144 = vmatmul.mubr.bf16.gmra.mrb[0].mxu0 %v2698
        %v3145 = vpop.f32.mrb[0].mxu0
        %v3146 = vadd.f32 %v3049, %v3145
        %v3147 = vpop.f32.mrb[0].mxu0
        %v3148 = vpop.f32.mrb[0].mxu0
        %v3149 = vadd.f32 %v3052, %v3148
        %v3150 = vpop.f32.mrb[0].mxu0
        %3151 = vmatprep.mubr.bf16.mxu0 %v2707
        %3152 = vmatmul.mubr.bf16.gmra.mrb[0].mxu0 %v2706
        %v3153 = vpop.f32.mrb[0].mxu0
        %v3154 = vadd.f32 %v3057, %v3153
        %v3155 = vpop.f32.mrb[0].mxu0
        %v3156 = vpop.f32.mrb[0].mxu0
        %v3157 = vadd.f32 %v3060, %v3156
        %v3158 = vpop.f32.mrb[0].mxu0
        %3159 = vmatprep.mubr.bf16.mxu0 %v2715
        %3160 = vmatmul.mubr.bf16.gmra.mrb[0].mxu0 %v2714
        %v3161 = vpop.f32.mrb[0].mxu0
        %v3162 = vadd.f32 %v3065, %v3161
        %v3163 = vpop.f32.mrb[0].mxu0
        %v3164 = vpop.f32.mrb[0].mxu0
        %v3165 = vadd.f32 %v3068, %v3164
        %v3166 = vpop.f32.mrb[0].mxu0
        %3167 = vmatprep.mubr.bf16.mxu0 %v2723
        %3168 = vmatmul.mubr.bf16.gmra.mrb[0].mxu0 %v2722
        %v3169 = vpop.f32.mrb[0].mxu0
        %v3170 = vadd.f32 %v3073, %v3169
        %v3171 = vpop.f32.mrb[0].mxu0
        %v3172 = vpop.f32.mrb[0].mxu0
        %v3173 = vadd.f32 %v3076, %v3172
        %v3174 = vpop.f32.mrb[0].mxu0
        %3175 = vmatprep.mubr.bf16.mxu0 %v2731
        %3176 = vmatmul.mubr.bf16.gmra.mrb[0].mxu0 %v2730
        %v3177 = vpop.f32.mrb[0].mxu0
        %v3178 = vadd.f32 %v3081, %v3177
        %v3179 = vpop.f32.mrb[0].mxu0
        %v3180 = vpop.f32.mrb[0].mxu0
        %v3181 = vadd.f32 %v3084, %v3180
        %v3182 = vpop.f32.mrb[0].mxu0
        %3183 = vdwg.mxu0
        %v3184 = vpack.c.bf16 %v3125, %v3122
        %v3185 = vpack.c.bf16 %v3133, %v3130
        %v3186 = vpack.c.bf16 %v3141, %v3138
        %v3187 = vpack.c.bf16 %v3149, %v3146
        %v3188 = vpack.c.bf16 %v3157, %v3154
        %v3189 = vpack.c.bf16 %v3165, %v3162
        %v3190 = vpack.c.bf16 %v3173, %v3170
        %v3191 = vpack.c.bf16 %v3181, %v3178
        %v3192 = vld [vmem:[%s3] sm:$0xf]
        %v3193 = vld [vmem:[%s3 + $0x4] sm:$0xf]
        %v3194 = vld [vmem:[%s3 + $0x8] sm:$0xf]
        %v3195 = vld [vmem:[%s3 + $0xc] sm:$0xf]
        %v3196 = vld [vmem:[%s3 + $0x10] sm:$0xf]
        %v3197 = vld [vmem:[%s3 + $0x14] sm:$0xf]
        %v3198 = vld [vmem:[%s3 + $0x18] sm:$0xf]
        %v3199 = vld [vmem:[%s3 + $0x1c] sm:$0xf]
        %v3200 = vld [vmem:[%s3 + $0x20] sm:$0xf]
        %v3201 = vld [vmem:[%s3 + $0x24] sm:$0xf]
        %v3202 = vld [vmem:[%s3 + $0x28] sm:$0xf]
        %v3203 = vld [vmem:[%s3 + $0x2c] sm:$0xf]
        %v3204 = vld [vmem:[%s3 + $0x30] sm:$0xf]
        %v3205 = vld [vmem:[%s3 + $0x34] sm:$0xf]
        %v3206 = vld [vmem:[%s3 + $0x38] sm:$0xf]
        %v3207 = vld [vmem:[%s3 + $0x3c] sm:$0xf]
        %v3208 = vld [vmem:[%s4] sm:$0x1]
        %v3210 = vlaneseq
        %v3211 = vshrl.u32 %v3210, 7
        %v3212 = vsub.s32 0, %v3211
        %v3213 = vrot.slane %v3208, %v3212
        %v3231 = vunpack.c.l.b16 %v3192
        %v3232 = vunpack.c.l.b16 %v3193
        %v3233 = vunpack.c.l.b16 %v3194
        %v3234 = vunpack.c.l.b16 %v3195
        %v3235 = vunpack.c.l.b16 %v3196
        %v3236 = vunpack.c.l.b16 %v3197
        %v3237 = vunpack.c.l.b16 %v3198
        %v3238 = vunpack.c.l.b16 %v3199
        %v3239 = vunpack.c.l.b16 %v3200
        %v3240 = vunpack.c.l.b16 %v3201
        %v3241 = vunpack.c.l.b16 %v3202
        %v3242 = vunpack.c.l.b16 %v3203
        %v3243 = vunpack.c.l.b16 %v3204
        %v3244 = vunpack.c.l.b16 %v3205
        %v3245 = vunpack.c.l.b16 %v3206
        %v3246 = vunpack.c.l.b16 %v3207
        %v3247 = vpack.c.b16 %v3232, %v3231
        %v3248 = vpack.c.b16 %v3234, %v3233
        %v3249 = vpack.c.b16 %v3236, %v3235
        %v3250 = vpack.c.b16 %v3238, %v3237
        %v3251 = vpack.c.b16 %v3240, %v3239
        %v3252 = vpack.c.b16 %v3242, %v3241
        %v3253 = vpack.c.b16 %v3244, %v3243
        %v3254 = vpack.c.b16 %v3246, %v3245
        %3263 = vmatprep.subr.bf16.mxu0 0
        %3264 = vmatpush1.bf16.msra.mxu0 %v3247
        %3265 = vmatprep.subr.bf16.mxu0 0
        %3266 = vmatpush1.bf16.msra.mxu0 %v3248
        %3267 = vmatprep.subr.bf16.mxu0 0
        %3268 = vmatpush1.bf16.msra.mxu0 %v3249
        %3269 = vmatprep.subr.bf16.mxu0 0
        %3270 = vmatpush1.bf16.msra.mxu0 %v3250
        %3271 = vmatprep.subr.bf16.mxu0 0
        %3272 = vmatpush1.bf16.msra.mxu0 %v3251
        %3273 = vmatprep.subr.bf16.mxu0 0
        %3274 = vmatpush1.bf16.msra.mxu0 %v3252
        %3275 = vmatprep.subr.bf16.mxu0 0
        %3276 = vmatpush1.bf16.msra.mxu0 %v3253
        %3277 = vmatprep.subr.bf16.mxu0 0
        %3278 = vmatpush1.bf16.msra.mxu0 %v3254
        %3279 = vmatprep.subr.bf16.mxu0 0
        %3280 = vmatpush1.bf16.msra.mxu0 0
        %3281 = vmatprep.subr.bf16.mxu0 0
        %3282 = vmatpush1.bf16.msra.mxu0 0
        %3283 = vmatprep.subr.bf16.mxu0 0
        %3284 = vmatpush1.bf16.msra.mxu0 0
        %3285 = vmatprep.subr.bf16.mxu0 0
        %3286 = vmatpush1.bf16.msra.mxu0 0
        %3287 = vmatprep.subr.bf16.mxu0 0
        %3288 = vmatpush1.bf16.msra.mxu0 0
        %3289 = vmatprep.subr.bf16.mxu0 0
        %3290 = vmatpush1.bf16.msra.mxu0 0
        %3291 = vmatprep.subr.bf16.mxu0 0
        %3292 = vmatpush1.bf16.msra.mxu0 0
        %3293 = vmatprep.subr.bf16.mxu0 0
        %3294 = vmatpush1.bf16.msra.mxu0 0
        %3295 = vmatprep.mubr.bf16.mxu0 0
        %3296 = vmatmul.mubr.bf16.gmra.mrb[0].mxu0 %v3184
        %v3297 = vpop.f32.mrb[0].mxu0
        %v3298 = vadd.f32 %v3213, %v3297
        %v3299 = vpop.f32.mrb[0].mxu0
        %v3300 = vpop.f32.mrb[0].mxu0
        %v3301 = vadd.f32 %v3213, %v3300
        %v3302 = vpop.f32.mrb[0].mxu0
        %3303 = vmatprep.mubr.bf16.mxu0 0
        %3304 = vmatmul.mubr.bf16.gmra.mrb[0].mxu0 %v3185
        %v3305 = vpop.f32.mrb[0].mxu0
        %v3306 = vadd.f32 %v3213, %v3305
        %v3307 = vpop.f32.mrb[0].mxu0
        %v3308 = vpop.f32.mrb[0].mxu0
        %v3309 = vadd.f32 %v3213, %v3308
        %v3310 = vpop.f32.mrb[0].mxu0
        %3311 = vmatprep.mubr.bf16.mxu0 0
        %3312 = vmatmul.mubr.bf16.gmra.mrb[0].mxu0 %v3186
        %v3313 = vpop.f32.mrb[0].mxu0
        %v3314 = vadd.f32 %v3213, %v3313
        %v3315 = vpop.f32.mrb[0].mxu0
        %v3316 = vpop.f32.mrb[0].mxu0
        %v3317 = vadd.f32 %v3213, %v3316
        %v3318 = vpop.f32.mrb[0].mxu0
        %3319 = vmatprep.mubr.bf16.mxu0 0
        %3320 = vmatmul.mubr.bf16.gmra.mrb[0].mxu0 %v3187
        %v3321 = vpop.f32.mrb[0].mxu0
        %v3322 = vadd.f32 %v3213, %v3321
        %v3323 = vpop.f32.mrb[0].mxu0
        %v3324 = vpop.f32.mrb[0].mxu0
        %v3325 = vadd.f32 %v3213, %v3324
        %v3326 = vpop.f32.mrb[0].mxu0
        %3327 = vmatprep.mubr.bf16.mxu0 0
        %3328 = vmatmul.mubr.bf16.gmra.mrb[0].mxu0 %v3188
        %v3329 = vpop.f32.mrb[0].mxu0
        %v3330 = vadd.f32 %v3213, %v3329
        %v3331 = vpop.f32.mrb[0].mxu0
        %v3332 = vpop.f32.mrb[0].mxu0
        %v3333 = vadd.f32 %v3213, %v3332
        %v3334 = vpop.f32.mrb[0].mxu0
        %3335 = vmatprep.mubr.bf16.mxu0 0
        %3336 = vmatmul.mubr.bf16.gmra.mrb[0].mxu0 %v3189
        %v3337 = vpop.f32.mrb[0].mxu0
        %v3338 = vadd.f32 %v3213, %v3337
        %v3339 = vpop.f32.mrb[0].mxu0
        %v3340 = vpop.f32.mrb[0].mxu0
        %v3341 = vadd.f32 %v3213, %v3340
        %v3342 = vpop.f32.mrb[0].mxu0
        %3343 = vmatprep.mubr.bf16.mxu0 0
        %3344 = vmatmul.mubr.bf16.gmra.mrb[0].mxu0 %v3190
        %v3345 = vpop.f32.mrb[0].mxu0
        %v3346 = vadd.f32 %v3213, %v3345
        %v3347 = vpop.f32.mrb[0].mxu0
        %v3348 = vpop.f32.mrb[0].mxu0
        %v3349 = vadd.f32 %v3213, %v3348
        %v3350 = vpop.f32.mrb[0].mxu0
        %3351 = vmatprep.mubr.bf16.mxu0 0
        %3352 = vmatmul.mubr.bf16.gmra.mrb[0].mxu0 %v3191
        %v3353 = vpop.f32.mrb[0].mxu0
        %v3354 = vadd.f32 %v3213, %v3353
        %v3355 = vpop.f32.mrb[0].mxu0
        %v3356 = vpop.f32.mrb[0].mxu0
        %v3357 = vadd.f32 %v3213, %v3356
        %v3358 = vpop.f32.mrb[0].mxu0
        %3359 = vdwg.mxu0
        %3360 = vst [vmem:[%s257] sm:$0xff] %v3298
        %3361 = vst [vmem:[%s257 + $0x8] sm:$0xff] %v3301
        %3362 = vst [vmem:[%s257 + $0x10] sm:$0xff] %v3306
        %3363 = vst [vmem:[%s257 + $0x18] sm:$0xff] %v3309
        %3364 = vst [vmem:[%s257 + $0x20] sm:$0xff] %v3314
        %3365 = vst [vmem:[%s257 + $0x28] sm:$0xff] %v3317
        %3366 = vst [vmem:[%s257 + $0x30] sm:$0xff] %v3322
        %3367 = vst [vmem:[%s257 + $0x38] sm:$0xff] %v3325
        %3368 = vst [vmem:[%s257 + $0x40] sm:$0xff] %v3330
        %3369 = vst [vmem:[%s257 + $0x48] sm:$0xff] %v3333
        %3370 = vst [vmem:[%s257 + $0x50] sm:$0xff] %v3338
        %3371 = vst [vmem:[%s257 + $0x58] sm:$0xff] %v3341
        %3372 = vst [vmem:[%s257 + $0x60] sm:$0xff] %v3346
        %3373 = vst [vmem:[%s257 + $0x68] sm:$0xff] %v3349
        %3374 = vst [vmem:[%s257 + $0x70] sm:$0xff] %v3354
        %3375 = vst [vmem:[%s257 + $0x78] sm:$0xff] %v3357
        %s3376 = sand.u32 %s158, 1
        %s3377 = scalar_lea.sflag [#allocation6], %s3376
        %s3378 = sand.u32 %s158, 1
        %s3379 = smul.addr %s3378, 128
        %s3380 = scalar_lea.vmem [#allocation5], %s3379
        // Predicated region
        $region45: #{attention_forward.1} parent=39 // pred_check
          %p3381 = pneg %p168
        $region46: #{attention_forward.1} parent=39 // pred_check_branch
          %3383 = sbr.rel (%p3381) target = $region48
        $region47: #{attention_forward.1} parent=39 // pred_region
          %s3384 = smul.u32 16, %s24
          %s3386 = ssub.s32 2048, 2048
          %3387 = vsyncadd %s3377, %s3386
          %s3388 = smul.addr %s23, 32
          %s3389 = sadd.s32 %s3384, %s3388
          %s3390 = smul.addr %s3389, 128
          %s3391 = scalar_lea.hbm %s5, %s3390
          %s3392 = sshll.u32 %s3380, 4
          %s3393 = int_to_ptr.vmem [resolvable:$true] %s3392
          %3398 = dma.vmem_to_hbm [thread:$0]  %s3393, 2048, %s3391, %s3377, 128, 128, 8
        $region48: #{attention_forward.1} parent=39 // pred_fallthru
          _
      $region40: #{attention_forward.1} parent=5 // pred_fallthru
        _
      %p3399 = scmp.le.s32.totalorder 2, %s14
      // Predicated region
      $region49: #{attention_forward.1} parent=5 // pred_check
        %p3400 = pneg %p3399
      $region50: #{attention_forward.1} parent=5 // pred_check_branch
        %3402 = sbr.rel (%p3400) target = $region52
      $region51: #{attention_forward.1} parent=5 // pred_region
        %s3403 = ssub.s32 %s14, 2
        // Predicated region
        $region53: #{attention_forward.1} parent=51 // pred_check
          %p3404 = pneg %p174
        $region54: #{attention_forward.1} parent=51 // pred_check_branch
          %3406 = sbr.rel (%p3404) target = $region56
        $region55: #{attention_forward.1} parent=51 // pred_region
          %s3407 = sand.u32 %s159, 1
          %s3408 = scalar_lea.sflag [#allocation6], %s3407
          %s3409 = sand.u32 %s159, 1
          %s3410 = smul.addr %s3409, 128
          %s3411 = scalar_lea.vmem [#allocation5], %s3410
          %3412 = dma.done %s3408, 2048
        $region56: #{attention_forward.1} parent=51 // pred_fallthru
          _
      $region52: #{attention_forward.1} parent=5 // pred_fallthru
        _
    $region6: #{attention_forward.1} parent=1 // loop_footer
      %s18 = sadd.s32 1, %s14
    $region7: #{attention_forward.1} parent=1 // loop_footer_branch
      %13 = sbr.rel target = $region3
    $region8: #{attention_forward.1} parent=1 // loop_exit
      _
    %3413 = vsyncpa [#allocation6], 1
    %s3414 = scalar_lea.sflag [#allocation6], 1
    %3415 = vsyncpa %s3414, 1

</llo_original>
